<compile_context>
chip_gen: v6e
topology: v6e:2x2x1
jax: 0.10.0
libtpu: 0.0.40
codegen_flags: <defaults>
</compile_context>

<pallas_src>
import functools
import math

import jax
import jax.numpy as jnp
from jax.experimental import pallas as pl
from jax.experimental.pallas import tpu as pltpu


def _stacked_decoder_kernel(h_ref, pad_ref, keep_ref, vec_ref,
                            wq_ref, wk_ref, wv_ref, wo_ref, wg_ref, wd_ref,
                            out_ref, slab_sc,
                            *, num_heads, num_kv_heads, rms_eps, ln_eps):
    l = pl.program_id(0)                       # layer index (only grid axis)
    B = pad_ref.shape[0]
    T = pad_ref.shape[2]
    H = out_ref.shape[1]
    BT = out_ref.shape[0]
    Qp = wq_ref.shape[-1]
    KVp = wk_ref.shape[-1]
    I = wg_ref.shape[-1]
    Dp = Qp // num_heads                       # 128-lane-aligned per-head width
    G = num_heads // num_kv_heads
    bf16 = jnp.bfloat16
    f32 = jnp.float32

    # NOTE: the residual carry requires the layer axis to stay "arbitrary" and
    # the output block index to be constant across it.
    @pl.when(l == 0)
    def _():
        out_ref[...] = h_ref[...]

    h = out_ref[...]                           # (B*T, H) f32 residual stream

    # --- packed per-layer vectors (one DMA): norm scales/biases + biases ---
    rms_w = vec_ref[0, 0:1, :H]
    bq = vec_ref[0, 1:2, :Qp]
    bk = vec_ref[0, 2:3, :KVp]
    bv = vec_ref[0, 3:4, :KVp]
    bo = vec_ref[0, 4:5, :H]
    ln_w = vec_ref[0, 5:6, :H]
    ln_b = vec_ref[0, 6:7, :H]
    bg = vec_ref[0, 7:8, :I]
    bd = vec_ref[0, 8:9, :H]

    # --- RMSNorm (input_layernorm, add_unit_offset=False), f32 math ---
    ms = jnp.mean(h * h, axis=-1, keepdims=True)
    xn = h * jax.lax.rsqrt(ms + rms_eps) * rms_w
    xnb = xn.astype(bf16)

    # --- compact GQA projections (bf16 MXU, f32 accumulate); q-scale folded ---
    q = jnp.dot(xnb, wq_ref[0], preferred_element_type=f32) + bq     # (BT, Qp)
    k = jnp.dot(xnb, wk_ref[0], preferred_element_type=f32) + bk     # (BT, KVp)
    v = jnp.dot(xnb, wv_ref[0], preferred_element_type=f32) + bv     # (BT, KVp)
    qb, kb, vb = q.astype(bf16), k.astype(bf16), v.astype(bf16)

    # --- on-the-fly mask components (no (T,T) VMEM scratch) ---
    neg = jnp.float32(-0.7 * float(jnp.finfo(jnp.float32).max))
    row = jax.lax.broadcasted_iota(jnp.int32, (T, T), 0)
    col = jax.lax.broadcasted_iota(jnp.int32, (T, T), 1)
    causal = jnp.where(row < col, neg, 0.0)                          # (T, T) f32

    # --- attention: per batch element, per query head (kv slice shared by a
    #     group); all slices / stores are 128-lane aligned (Dp = 128k). ---
    for b in range(B):
        r0 = b * T
        key_m = pad_ref[b] * neg                                     # (1, T)
        qry_m = (1.0 - keep_ref[r0:r0 + T, :]) * neg                 # (T, 1)
        mask_b = jnp.minimum(jnp.minimum(qry_m, key_m), causal)      # (T, T)
        for hh in range(num_heads):
            co = hh * Dp
            kvo = (hh // G) * Dp
            qh = qb[r0:r0 + T, co:co + Dp]                           # (T, Dp)
            kh = kb[r0:r0 + T, kvo:kvo + Dp]
            vh = vb[r0:r0 + T, kvo:kvo + Dp]
            # scores = qh @ kh^T without materializing a transpose
            s = jax.lax.dot_general(qh, kh, (((1,), (1,)), ((), ())),
                                    preferred_element_type=f32) + mask_b
            m = jnp.max(s, axis=-1, keepdims=True)
            p = jnp.exp(s - m)
            denom = jnp.sum(p, axis=-1, keepdims=True)
            p = p * pl.reciprocal(denom, approx=True)                # EUP divide
            o = jnp.dot(p.astype(bf16), vh, preferred_element_type=f32)
            slab_sc[r0:r0 + T, co:co + Dp] = o.astype(bf16)          # aligned store

    attn = jnp.dot(slab_sc[...], wo_ref[0], preferred_element_type=f32) + bo
    h1 = attn + h                                                    # residual add

    # --- MLP: LayerNorm -> ReLU gate -> down proj -> padding mask -> residual ---
    mu = jnp.mean(h1, axis=-1, keepdims=True)
    var = jnp.mean((h1 - mu) * (h1 - mu), axis=-1, keepdims=True)
    ln = (h1 - mu) * jax.lax.rsqrt(var + ln_eps) * ln_w + ln_b
    gate = jnp.maximum(
        jnp.dot(ln.astype(bf16), wg_ref[0], preferred_element_type=f32) + bg, 0.0)
    down = jnp.dot(gate.astype(bf16), wd_ref[0], preferred_element_type=f32) + bd
    out_ref[...] = down * keep_ref[...] + h1                         # next carry


def stacked_decoder(hidden_states, paddings, packed, *, num_heads, num_kv_heads,
                    head_dim, rms_eps=1e-6, ln_eps=1e-6):
    B, T, H = hidden_states.shape
    L = packed["wq"].shape[0]
    Qp = packed["wq"].shape[-1]
    KVp = packed["wk"].shape[-1]
    I = packed["wg"].shape[-1]
    Dp = Qp // num_heads
    BT = B * T
    assert num_heads % num_kv_heads == 0 and KVp == num_kv_heads * Dp

    padf = paddings.astype(jnp.float32)
    h2d = hidden_states.reshape(BT, H).astype(jnp.float32)
    pad_row = padf.reshape(B, 1, T)
    keep2d = (1.0 - padf).reshape(BT, 1)

    kernel = functools.partial(_stacked_decoder_kernel,
                               num_heads=num_heads, num_kv_heads=num_kv_heads,
                               rms_eps=rms_eps, ln_eps=ln_eps)

    def fixed(shape):
        n = len(shape)
        return pl.BlockSpec(shape, lambda l, _n=n: (0,) * _n)

    def per_layer(shape):
        n = len(shape)
        return pl.BlockSpec(shape, lambda l, _n=n: (l,) + (0,) * (_n - 1))

    in_specs = [
        fixed((BT, H)),                               # hidden states (layer-0 init)
        fixed((B, 1, T)),                             # padding row (key mask)
        fixed((BT, 1)),                               # keep column (query/MLP mask)
        per_layer((1,) + packed["vecs"].shape[1:]),   # packed small vectors
        per_layer((1, H, Qp)),                        # wq (scale-folded, head-padded)
        per_layer((1, H, KVp)),                       # wk (compact GQA)
        per_layer((1, H, KVp)),                       # wv (compact GQA)
        per_layer((1, Qp, H)),                        # wo (head-padded rows)
        per_layer((1, H, I)),                         # gate proj
        per_layer((1, I, H)),                         # down proj
    ]

    weight_keys = ["vecs", "wq", "wk", "wv", "wo", "wg", "wd"]

    # advisory cost estimate for the XLA scheduler
    flops = L * (2 * BT * H * (Qp + 2 * KVp)            # q/k/v projections
                 + 4 * B * num_heads * T * T * Dp       # scores + p@v
                 + 2 * BT * Qp * H                      # o_proj
                 + 4 * BT * H * I)                      # MLP
    transcendentals = L * B * num_heads * T * T
    bytes_accessed = int(2 * h2d.nbytes + pad_row.nbytes + keep2d.nbytes
                         + sum(int(packed[k].nbytes) for k in weight_keys))

    # VMEM budget: double-buffered per-layer weight blocks + single-buffered
    # activations/scratch, clamped to this chip's capacity (v7x: 64 MiB/TC).
    wblock = sum(int(packed[k].nbytes) // L for k in weight_keys)
    act = (4 * BT * (Qp + 2 * KVp)          # q,k,v f32
           + 2 * BT * (Qp + 2 * KVp)        # bf16 copies
           + 4 * 2 * T * T                  # scores / probs for one head
           + 4 * BT * I                     # gate
           + 6 * 4 * BT * H)                # xn, h1, ln, down, misc
    need = 2 * wblock + 4 * (4 * BT * H) + act + 2 * BT * Qp + (2 << 20)
    try:
        cap = int(pltpu.get_tpu_info().vmem_capacity_bytes)
    except Exception:                       # pragma: no cover - older jax
        cap = 64 * 2**20
    vmem_limit = int(max(16 << 20, min(cap - (8 << 20), need)))

    out2d = pl.pallas_call(
        kernel,
        out_shape=jax.ShapeDtypeStruct((BT, H), jnp.float32),
        grid=(L,),                                       # layer axis (carry)
        in_specs=in_specs,
        out_specs=pl.BlockSpec((BT, H), lambda l: (0, 0)),
        scratch_shapes=[pltpu.VMEM((BT, Qp), jnp.bfloat16)],  # attention slab
        compiler_params=pltpu.CompilerParams(
            dimension_semantics=("arbitrary",),
            vmem_limit_bytes=vmem_limit),
        cost_estimate=pl.CostEstimate(flops=flops,
                                      transcendentals=transcendentals,
                                      bytes_accessed=bytes_accessed),
    )(h2d, pad_row, keep2d, packed["vecs"], packed["wq"], packed["wk"],
      packed["wv"], packed["wo"], packed["wg"], packed["wd"])
    return out2d.reshape(B, T, H)


def init_layer_params(key, hidden, intermediate, num_heads, num_kv_heads, head_dim):
    """Raw (PyTorch-layout, f32) parameters for one TimesFMDecoderLayer."""
    keys = jax.random.split(key, 12)
    q_size = num_heads * head_dim
    kv_size = num_kv_heads * head_dim

    def nrm(k, shape, s=0.05):
        return (s * jax.random.normal(k, shape)).astype(jnp.float32)

    return dict(
        qkv_w=nrm(keys[0], (q_size + 2 * kv_size, hidden)),   # torch (out, in)
        qkv_b=nrm(keys[1], (q_size + 2 * kv_size,)),
        scaling=nrm(keys[2], (head_dim,), 1.0),
        o_w=nrm(keys[3], (hidden, q_size)),
        o_b=nrm(keys[4], (hidden,)),
        rms_w=1.0 + nrm(keys[5], (hidden,), 0.1),
        ln_w=1.0 + nrm(keys[6], (hidden,), 0.1),
        ln_b=nrm(keys[7], (hidden,), 0.1),
        gate_w=nrm(keys[8], (intermediate, hidden)),
        gate_b=nrm(keys[9], (intermediate,)),
        down_w=nrm(keys[10], (hidden, intermediate)),
        down_b=nrm(keys[11], (hidden,)),
    )


def pack_params(raw, num_heads, num_kv_heads, head_dim):
    """Re-layout stacked raw params (leading L axis) into kernel arrays.

    * per-dim q scaling folded into wq/bq
    * per-head columns zero-padded to Dp = 128-aligned (lane-dense slices)
    * big matrices cast to bf16 (MXU), small vectors packed into one f32 array
    """
    L = raw["qkv_w"].shape[0]
    H = raw["qkv_w"].shape[2]
    I = raw["gate_w"].shape[1]
    NH, NKV, D = num_heads, num_kv_heads, head_dim
    q_size, kv_size = NH * D, NKV * D
    Dp = ((D + 127) // 128) * 128
    Qp, KVp = NH * Dp, NKV * Dp
    bf16 = jnp.bfloat16

    r_softplus_0 = 1.442695041
    scale = (r_softplus_0 / math.sqrt(D)) * jax.nn.softplus(raw["scaling"])  # (L, D)

    qkv_w, qkv_b = raw["qkv_w"], raw["qkv_b"]
    wq = (qkv_w[:, :q_size, :].reshape(L, NH, D, H)
          * scale[:, None, :, None]).reshape(L, q_size, H)
    wk = qkv_w[:, q_size:q_size + kv_size, :]
    wv = qkv_w[:, q_size + kv_size:, :]
    bq = (qkv_b[:, :q_size].reshape(L, NH, D) * scale[:, None, :]).reshape(L, q_size)
    bk = qkv_b[:, q_size:q_size + kv_size]
    bv = qkv_b[:, q_size + kv_size:]

    def pad_w(w, nh):                          # (L, nh*D, H) -> (L, H, nh*Dp)
        w = w.reshape(L, nh, D, H)
        w = jnp.pad(w, ((0, 0), (0, 0), (0, Dp - D), (0, 0))).reshape(L, nh * Dp, H)
        return jnp.swapaxes(w, 1, 2)

    def pad_b(b, nh):                          # (L, nh*D) -> (L, nh*Dp)
        b = b.reshape(L, nh, D)
        return jnp.pad(b, ((0, 0), (0, 0), (0, Dp - D))).reshape(L, nh * Dp)

    wo = raw["o_w"].reshape(L, H, NH, D)
    wo = jnp.pad(wo, ((0, 0), (0, 0), (0, 0), (0, Dp - D))).reshape(L, H, Qp)

    Wmax = ((max(H, I, Qp, KVp) + 127) // 128) * 128
    vecs = jnp.zeros((L, 9, Wmax), jnp.float32)
    rows = [raw["rms_w"], pad_b(bq, NH), pad_b(bk, NKV), pad_b(bv, NKV),
            raw["o_b"], raw["ln_w"], raw["ln_b"], raw["gate_b"], raw["down_b"]]
    for i, r in enumerate(rows):
        vecs = vecs.at[:, i, :r.shape[-1]].set(r)

    return dict(
        vecs=vecs,
        wq=pad_w(wq, NH).astype(bf16),                     # (L, H, Qp)
        wk=pad_w(wk, NKV).astype(bf16),                    # (L, H, KVp)
        wv=pad_w(wv, NKV).astype(bf16),                    # (L, H, KVp)
        wo=jnp.swapaxes(wo, 1, 2).astype(bf16),            # (L, Qp, H)
        wg=jnp.swapaxes(raw["gate_w"], 1, 2).astype(bf16),  # (L, H, I)
        wd=jnp.swapaxes(raw["down_w"], 1, 2).astype(bf16),  # (L, I, H)
    )


def ref_forward(h, paddings, raw, num_heads, num_kv_heads, head_dim,
                rms_eps=1e-6, ln_eps=1e-6):
    """Pure-JAX reference mirroring the PyTorch module (bf16 MXU operands)."""
    B, T, H = h.shape
    bf16 = jnp.bfloat16
    NH, NKV, D = num_heads, num_kv_heads, head_dim
    G = NH // NKV
    q_size, kv_size = NH * D, NKV * D
    L = raw["qkv_w"].shape[0]
    r_softplus_0 = 1.442695041

    neg = jnp.float32(-0.7 * float(jnp.finfo(jnp.float32).max))
    pad = paddings.astype(jnp.float32)
    pad_mask = jnp.minimum(pad[:, :, None] * neg, pad[:, None, :] * neg)
    idx = jnp.arange(T)
    causal = jnp.where(idx[:, None] < idx[None, :], neg, 0.0)
    mask = jnp.minimum(pad_mask, causal[None])                      # (B, T, T)
    keep = (1.0 - pad)[:, :, None]

    def lin(x, w, b):
        y = jnp.einsum("bti,oi->bto", x.astype(bf16), w.astype(bf16),
                       preferred_element_type=jnp.float32)
        return y + b

    for l in range(L):
        qkv_w, qkv_b = raw["qkv_w"][l], raw["qkv_b"][l]
        rms = h * jax.lax.rsqrt(jnp.mean(h * h, -1, keepdims=True) + rms_eps) \
            * raw["rms_w"][l]
        q = lin(rms, qkv_w[:q_size], qkv_b[:q_size]).reshape(B, T, NH, D)
        scale = (r_softplus_0 / math.sqrt(D)) * jax.nn.softplus(raw["scaling"][l])
        q = q * scale
        k = lin(rms, qkv_w[q_size:q_size + kv_size],
                qkv_b[q_size:q_size + kv_size]).reshape(B, T, NKV, D)
        v = lin(rms, qkv_w[q_size + kv_size:],
                qkv_b[q_size + kv_size:]).reshape(B, T, NKV, D)
        k = jnp.repeat(k, G, axis=2)
        v = jnp.repeat(v, G, axis=2)
        s = jnp.einsum("bqhd,bkhd->bhqk", q.astype(bf16), k.astype(bf16),
                       preferred_element_type=jnp.float32) + mask[:, None]
        p = jax.nn.softmax(s, axis=-1)
        o = jnp.einsum("bhqk,bkhd->bqhd", p.astype(bf16), v.astype(bf16),
                       preferred_element_type=jnp.float32).reshape(B, T, q_size)
        o = lin(o, raw["o_w"][l], raw["o_b"][l])
        h1 = o + h
        mu = jnp.mean(h1, -1, keepdims=True)
        var = jnp.mean((h1 - mu) ** 2, -1, keepdims=True)
        ln = (h1 - mu) * jax.lax.rsqrt(var + ln_eps) * raw["ln_w"][l] + raw["ln_b"][l]
        gate = jnp.maximum(lin(ln, raw["gate_w"][l], raw["gate_b"][l]), 0.0)
        down = lin(gate, raw["down_w"][l], raw["down_b"][l])
        h = down * keep + h1
    return h


if __name__ == "__main__":
    B, T, H, I = 2, 16, 32, 64          # batch, seq, hidden, intermediate
    NH, NKV, D, L = 4, 2, 8, 2          # heads, kv heads, head_dim, layers

    key = jax.random.PRNGKey(0)
    k_h, k_layers = jax.random.split(key)
    hidden_states = jax.random.normal(k_h, (B, T, H), jnp.float32)
    paddings = jnp.zeros((B, T), jnp.float32).at[1, -3:].set(1.0)

    layer_keys = jax.random.split(k_layers, L)
    per_layer = [init_layer_params(k, H, I, NH, NKV, D) for k in layer_keys]
    raw = {k: jnp.stack([p[k] for p in per_layer], axis=0) for k in per_layer[0]}
    packed = pack_params(raw, NH, NKV, D)

    out = stacked_decoder(hidden_states, paddings, packed,
                          num_heads=NH, num_kv_heads=NKV, head_dim=D)
    out = jax.block_until_ready(out)

    ref = ref_forward(hidden_states, paddings, raw, NH, NKV, D)
    err = float(jnp.max(jnp.abs(out - ref)))
    assert out.shape == (B, T, H) and bool(jnp.all(jnp.isfinite(out))), "bad output"
    assert err < 2e-2, f"kernel/ref mismatch, max abs err = {err}"
    print("KERNEL_OK")
</pallas_src>

<mosaic_0001>
module attributes {stable_mosaic.version = 11 : i64} {
  func.func @_stacked_decoder_kernel(%arg0: i32, %arg1: memref<32x32xf32, #tpu.memory_space<vmem>>, %arg2: memref<2x1x16xf32, #tpu.memory_space<vmem>>, %arg3: memref<32x1xf32, #tpu.memory_space<vmem>>, %arg4: memref<1x9x512xf32, #tpu.memory_space<vmem>>, %arg5: memref<1x32x512xbf16, #tpu.memory_space<vmem>>, %arg6: memref<1x32x256xbf16, #tpu.memory_space<vmem>>, %arg7: memref<1x32x256xbf16, #tpu.memory_space<vmem>>, %arg8: memref<1x512x32xbf16, #tpu.memory_space<vmem>>, %arg9: memref<1x32x64xbf16, #tpu.memory_space<vmem>>, %arg10: memref<1x64x32xbf16, #tpu.memory_space<vmem>>, %arg11: memref<32x32xf32, #tpu.memory_space<vmem>>, %arg12: memref<32x512xbf16, #tpu.memory_space<vmem>>) attributes {dimension_semantics = [#tpu.dimension_semantics<arbitrary>], iteration_bounds = array<i64: 2>, scalar_prefetch = 0 : i64, scratch_operands = 1 : i64, tpu.core_type = #tpu.core_type<tc>, window_params = [{pipeline_mode = #tpu.pipeline_mode<synchronous>, transform_indices = @transform_0, window_bounds = array<i64: 32, 32>}, {pipeline_mode = #tpu.pipeline_mode<synchronous>, transform_indices = @transform_1, window_bounds = array<i64: 2, 1, 16>}, {pipeline_mode = #tpu.pipeline_mode<synchronous>, transform_indices = @transform_2, window_bounds = array<i64: 32, 1>}, {transform_indices = @transform_3, window_bounds = array<i64: 1, 9, 512>}, {transform_indices = @transform_4, window_bounds = array<i64: 1, 32, 512>}, {transform_indices = @transform_5, window_bounds = array<i64: 1, 32, 256>}, {transform_indices = @transform_6, window_bounds = array<i64: 1, 32, 256>}, {transform_indices = @transform_7, window_bounds = array<i64: 1, 512, 32>}, {transform_indices = @transform_8, window_bounds = array<i64: 1, 32, 64>}, {transform_indices = @transform_9, window_bounds = array<i64: 1, 64, 32>}, {pipeline_mode = #tpu.pipeline_mode<synchronous>, transform_indices = @transform_10, window_bounds = array<i64: 32, 32>}]} {
    %c0_i32 = arith.constant 0 : i32
    %0 = arith.cmpi eq, %arg0, %c0_i32 : i32
    %1 = arith.extui %0 : i1 to i32
    %c0_i32_0 = arith.constant 0 : i32
    %2 = arith.cmpi ne, %1, %c0_i32_0 : i32
    scf.if %2 {
      %c0_121 = arith.constant 0 : index
      %c0_122 = arith.constant 0 : index
      %287 = vector.load %arg1[%c0_121, %c0_122] : memref<32x32xf32, #tpu.memory_space<vmem>>, vector<32x32xf32>
      %c0_123 = arith.constant 0 : index
      %c0_124 = arith.constant 0 : index
      %288 = vector.load %arg11[%c0_123, %c0_124] : memref<32x32xf32, #tpu.memory_space<vmem>>, vector<32x32xf32>
      tpu.vector_store %arg11[%c0_123, %c0_124], %287 {strides = array<i32>} : memref<32x32xf32, #tpu.memory_space<vmem>>, vector<32x32xf32>,
    } else {
    }
    %c0 = arith.constant 0 : index
    %c0_1 = arith.constant 0 : index
    %3 = vector.load %arg11[%c0, %c0_1] : memref<32x32xf32, #tpu.memory_space<vmem>>, vector<32x32xf32>
    %c0_2 = arith.constant 0 : index
    %c0_3 = arith.constant 0 : index
    %c0_4 = arith.constant 0 : index
    %4 = vector.load %arg4[%c0_2, %c0_3, %c0_4] : memref<1x9x512xf32, #tpu.memory_space<vmem>>, vector<1x1x32xf32>
    %5 = vector.shape_cast %4 : vector<1x1x32xf32> to vector<1x32xf32>
    %c0_5 = arith.constant 0 : index
    %c1 = arith.constant 1 : index
    %c0_6 = arith.constant 0 : index
    %6 = vector.load %arg4[%c0_5, %c1, %c0_6] : memref<1x9x512xf32, #tpu.memory_space<vmem>>, vector<1x1x512xf32>
    %7 = vector.shape_cast %6 : vector<1x1x512xf32> to vector<1x512xf32>
    %c0_7 = arith.constant 0 : index
    %c2 = arith.constant 2 : index
    %c0_8 = arith.constant 0 : index
    %8 = vector.load %arg4[%c0_7, %c2, %c0_8] : memref<1x9x512xf32, #tpu.memory_space<vmem>>, vector<1x1x256xf32>
    %9 = vector.shape_cast %8 : vector<1x1x256xf32> to vector<1x256xf32>
    %c0_9 = arith.constant 0 : index
    %c3 = arith.constant 3 : index
    %c0_10 = arith.constant 0 : index
    %10 = vector.load %arg4[%c0_9, %c3, %c0_10] : memref<1x9x512xf32, #tpu.memory_space<vmem>>, vector<1x1x256xf32>
    %11 = vector.shape_cast %10 : vector<1x1x256xf32> to vector<1x256xf32>
    %c0_11 = arith.constant 0 : index
    %c4 = arith.constant 4 : index
    %c0_12 = arith.constant 0 : index
    %12 = vector.load %arg4[%c0_11, %c4, %c0_12] : memref<1x9x512xf32, #tpu.memory_space<vmem>>, vector<1x1x32xf32>
    %13 = vector.shape_cast %12 : vector<1x1x32xf32> to vector<1x32xf32>
    %c0_13 = arith.constant 0 : index
    %c5 = arith.constant 5 : index
    %c0_14 = arith.constant 0 : index
    %14 = vector.load %arg4[%c0_13, %c5, %c0_14] : memref<1x9x512xf32, #tpu.memory_space<vmem>>, vector<1x1x32xf32>
    %15 = vector.shape_cast %14 : vector<1x1x32xf32> to vector<1x32xf32>
    %c0_15 = arith.constant 0 : index
    %c6 = arith.constant 6 : index
    %c0_16 = arith.constant 0 : index
    %16 = vector.load %arg4[%c0_15, %c6, %c0_16] : memref<1x9x512xf32, #tpu.memory_space<vmem>>, vector<1x1x32xf32>
    %17 = vector.shape_cast %16 : vector<1x1x32xf32> to vector<1x32xf32>
    %c0_17 = arith.constant 0 : index
    %c7 = arith.constant 7 : index
    %c0_18 = arith.constant 0 : index
    %18 = vector.load %arg4[%c0_17, %c7, %c0_18] : memref<1x9x512xf32, #tpu.memory_space<vmem>>, vector<1x1x64xf32>
    %19 = vector.shape_cast %18 : vector<1x1x64xf32> to vector<1x64xf32>
    %c0_19 = arith.constant 0 : index
    %c8 = arith.constant 8 : index
    %c0_20 = arith.constant 0 : index
    %20 = vector.load %arg4[%c0_19, %c8, %c0_20] : memref<1x9x512xf32, #tpu.memory_space<vmem>>, vector<1x1x32xf32>
    %21 = vector.shape_cast %20 : vector<1x1x32xf32> to vector<1x32xf32>
    %22 = arith.mulf %3, %3 : vector<32x32xf32>
    %cst = arith.constant dense<0.000000e+00> : vector<32xf32>
    %23 = vector.multi_reduction <add>, %22, %cst [1] : vector<32x32xf32> to vector<32xf32>
    %24 = vector.shape_cast %23 : vector<32xf32> to vector<32x1xf32>
    %cst_21 = arith.constant 3.200000e+01 : f32
    %25 = vector.broadcast %cst_21 : f32 to vector<32x1xf32>
    %26 = arith.divf %24, %25 : vector<32x1xf32>
    %cst_22 = arith.constant 9.99999997E-7 : f32
    %27 = vector.broadcast %cst_22 : f32 to vector<32x1xf32>
    %28 = arith.addf %26, %27 : vector<32x1xf32>
    %29 = math.rsqrt %28 : vector<32x1xf32>
    %30 = vector.broadcast %29 : vector<32x1xf32> to vector<32x32xf32>
    %31 = arith.mulf %3, %30 : vector<32x32xf32>
    %32 = vector.broadcast %5 : vector<1x32xf32> to vector<32x32xf32>
    %33 = arith.mulf %31, %32 : vector<32x32xf32>
    %34 = arith.truncf %33 : vector<32x32xf32> to vector<32x32xbf16>
    %c0_23 = arith.constant 0 : index
    %c0_24 = arith.constant 0 : index
    %c0_25 = arith.constant 0 : index
    %35 = vector.load %arg5[%c0_23, %c0_24, %c0_25] : memref<1x32x512xbf16, #tpu.memory_space<vmem>>, vector<1x32x512xbf16>
    %36 = vector.shape_cast %35 : vector<1x32x512xbf16> to vector<32x512xbf16>
    %cst_26 = arith.constant dense<0.000000e+00> : vector<32x512xf32>
    %37 = tpu.matmul %34, %36, %cst_26 {dimension_numbers = #tpu.dot_dimension_numbers<[1], [0], [0], [1], [0, 0, 1, 1], [], []>} : vector<32x32xbf16>, vector<32x512xbf16>, vector<32x512xf32> -> vector<32x512xf32>
    %38 = vector.broadcast %7 : vector<1x512xf32> to vector<32x512xf32>
    %39 = arith.addf %37, %38 : vector<32x512xf32>
    %c0_27 = arith.constant 0 : index
    %c0_28 = arith.constant 0 : index
    %c0_29 = arith.constant 0 : index
    %40 = vector.load %arg6[%c0_27, %c0_28, %c0_29] : memref<1x32x256xbf16, #tpu.memory_space<vmem>>, vector<1x32x256xbf16>
    %41 = vector.shape_cast %40 : vector<1x32x256xbf16> to vector<32x256xbf16>
    %cst_30 = arith.constant dense<0.000000e+00> : vector<32x256xf32>
    %42 = tpu.matmul %34, %41, %cst_30 {dimension_numbers = #tpu.dot_dimension_numbers<[1], [0], [0], [1], [0, 0, 1, 1], [], []>} : vector<32x32xbf16>, vector<32x256xbf16>, vector<32x256xf32> -> vector<32x256xf32>
    %43 = vector.broadcast %9 : vector<1x256xf32> to vector<32x256xf32>
    %44 = arith.addf %42, %43 : vector<32x256xf32>
    %c0_31 = arith.constant 0 : index
    %c0_32 = arith.constant 0 : index
    %c0_33 = arith.constant 0 : index
    %45 = vector.load %arg7[%c0_31, %c0_32, %c0_33] : memref<1x32x256xbf16, #tpu.memory_space<vmem>>, vector<1x32x256xbf16>
    %46 = vector.shape_cast %45 : vector<1x32x256xbf16> to vector<32x256xbf16>
    %cst_34 = arith.constant dense<0.000000e+00> : vector<32x256xf32>
    %47 = tpu.matmul %34, %46, %cst_34 {dimension_numbers = #tpu.dot_dimension_numbers<[1], [0], [0], [1], [0, 0, 1, 1], [], []>} : vector<32x32xbf16>, vector<32x256xbf16>, vector<32x256xf32> -> vector<32x256xf32>
    %48 = vector.broadcast %11 : vector<1x256xf32> to vector<32x256xf32>
    %49 = arith.addf %47, %48 : vector<32x256xf32>
    %50 = arith.truncf %39 : vector<32x512xf32> to vector<32x512xbf16>
    %51 = arith.truncf %44 : vector<32x256xf32> to vector<32x256xbf16>
    %52 = arith.truncf %49 : vector<32x256xf32> to vector<32x256xbf16>
    %53 = tpu.iota {dimensions = array<i32: 0>} : vector<16x16xi32>
    %54 = tpu.iota {dimensions = array<i32: 1>} : vector<16x16xi32>
    %55 = arith.cmpi slt, %53, %54 : vector<16x16xi32>
    %cst_35 = arith.constant -2.38197633E+38 : f32
    %cst_36 = arith.constant 0.000000e+00 : f32
    %56 = vector.broadcast %cst_35 : f32 to vector<16x16xf32>
    %57 = vector.broadcast %cst_36 : f32 to vector<16x16xf32>
    %58 = arith.select %55, %56, %57 : vector<16x16xi1>, vector<16x16xf32>
    %c0_37 = arith.constant 0 : index
    %c0_38 = arith.constant 0 : index
    %c0_39 = arith.constant 0 : index
    %59 = vector.load %arg2[%c0_37, %c0_38, %c0_39] : memref<2x1x16xf32, #tpu.memory_space<vmem>>, vector<1x1x16xf32>
    %60 = vector.shape_cast %59 : vector<1x1x16xf32> to vector<1x16xf32>
    %cst_40 = arith.constant -2.38197633E+38 : f32
    %61 = vector.broadcast %cst_40 : f32 to vector<1x16xf32>
    %62 = arith.mulf %60, %61 : vector<1x16xf32>
    %c0_41 = arith.constant 0 : index
    %c0_42 = arith.constant 0 : index
    %63 = vector.load %arg3[%c0_41, %c0_42] : memref<32x1xf32, #tpu.memory_space<vmem>>, vector<16x1xf32>
    %cst_43 = arith.constant 1.000000e+00 : f32
    %64 = vector.broadcast %cst_43 : f32 to vector<16x1xf32>
    %65 = arith.subf %64, %63 : vector<16x1xf32>
    %cst_44 = arith.constant -2.38197633E+38 : f32
    %66 = vector.broadcast %cst_44 : f32 to vector<16x1xf32>
    %67 = arith.mulf %65, %66 : vector<16x1xf32>
    %68 = vector.broadcast %67 : vector<16x1xf32> to vector<16x16xf32>
    %69 = vector.broadcast %62 : vector<1x16xf32> to vector<16x16xf32>
    %70 = arith.minimumf %68, %69 : vector<16x16xf32>
    %71 = arith.minimumf %70, %58 : vector<16x16xf32>
    %72 = vector.extract_strided_slice %50 {offsets = [0, 0], sizes = [16, 128], strides = [1, 1]} : vector<32x512xbf16> to vector<16x128xbf16>
    %73 = vector.extract_strided_slice %51 {offsets = [0, 0], sizes = [16, 128], strides = [1, 1]} : vector<32x256xbf16> to vector<16x128xbf16>
    %74 = vector.extract_strided_slice %52 {offsets = [0, 0], sizes = [16, 128], strides = [1, 1]} : vector<32x256xbf16> to vector<16x128xbf16>
    %cst_45 = arith.constant dense<0.000000e+00> : vector<16x16xf32>
    %75 = tpu.matmul %72, %73, %cst_45 {dimension_numbers = #tpu.dot_dimension_numbers<[1], [1], [0], [0], [0, 0, 1, 0], [], []>} : vector<16x128xbf16>, vector<16x128xbf16>, vector<16x16xf32> -> vector<16x16xf32>
    %76 = arith.addf %75, %71 : vector<16x16xf32>
    %cst_46 = arith.constant dense<0xFF800000> : vector<16xf32>
    %77 = vector.multi_reduction <maximumf>, %76, %cst_46 [1] : vector<16x16xf32> to vector<16xf32>
    %78 = vector.shape_cast %77 : vector<16xf32> to vector<16x1xf32>
    %79 = vector.broadcast %78 : vector<16x1xf32> to vector<16x16xf32>
    %80 = arith.subf %76, %79 : vector<16x16xf32>
    %81 = math.exp %80 : vector<16x16xf32>
    %cst_47 = arith.constant dense<0.000000e+00> : vector<16xf32>
    %82 = vector.multi_reduction <add>, %81, %cst_47 [1] : vector<16x16xf32> to vector<16xf32>
    %83 = vector.shape_cast %82 : vector<16xf32> to vector<16x1xf32>
    %84 = tpu.reciprocal %83 {approx = true} : vector<16x1xf32> -> vector<16x1xf32>
    %85 = vector.broadcast %84 : vector<16x1xf32> to vector<16x16xf32>
    %86 = arith.mulf %81, %85 : vector<16x16xf32>
    %87 = arith.truncf %86 : vector<16x16xf32> to vector<16x16xbf16>
    %cst_48 = arith.constant dense<0.000000e+00> : vector<16x128xf32>
    %88 = tpu.matmul %87, %74, %cst_48 {dimension_numbers = #tpu.dot_dimension_numbers<[1], [0], [0], [1], [0, 0, 1, 1], [], []>} : vector<16x16xbf16>, vector<16x128xbf16>, vector<16x128xf32> -> vector<16x128xf32>
    %89 = arith.truncf %88 : vector<16x128xf32> to vector<16x128xbf16>
    %c0_49 = arith.constant 0 : index
    %c0_50 = arith.constant 0 : index
    %90 = vector.load %arg12[%c0_49, %c0_50] : memref<32x512xbf16, #tpu.memory_space<vmem>>, vector<16x128xbf16>
    tpu.vector_store %arg12[%c0_49, %c0_50], %89 {strides = array<i32>} : memref<32x512xbf16, #tpu.memory_space<vmem>>, vector<16x128xbf16>,
    %91 = vector.extract_strided_slice %50 {offsets = [0, 128], sizes = [16, 128], strides = [1, 1]} : vector<32x512xbf16> to vector<16x128xbf16>
    %92 = vector.extract_strided_slice %51 {offsets = [0, 0], sizes = [16, 128], strides = [1, 1]} : vector<32x256xbf16> to vector<16x128xbf16>
    %93 = vector.extract_strided_slice %52 {offsets = [0, 0], sizes = [16, 128], strides = [1, 1]} : vector<32x256xbf16> to vector<16x128xbf16>
    %cst_51 = arith.constant dense<0.000000e+00> : vector<16x16xf32>
    %94 = tpu.matmul %91, %92, %cst_51 {dimension_numbers = #tpu.dot_dimension_numbers<[1], [1], [0], [0], [0, 0, 1, 0], [], []>} : vector<16x128xbf16>, vector<16x128xbf16>, vector<16x16xf32> -> vector<16x16xf32>
    %95 = arith.addf %94, %71 : vector<16x16xf32>
    %cst_52 = arith.constant dense<0xFF800000> : vector<16xf32>
    %96 = vector.multi_reduction <maximumf>, %95, %cst_52 [1] : vector<16x16xf32> to vector<16xf32>
    %97 = vector.shape_cast %96 : vector<16xf32> to vector<16x1xf32>
    %98 = vector.broadcast %97 : vector<16x1xf32> to vector<16x16xf32>
    %99 = arith.subf %95, %98 : vector<16x16xf32>
    %100 = math.exp %99 : vector<16x16xf32>
    %cst_53 = arith.constant dense<0.000000e+00> : vector<16xf32>
    %101 = vector.multi_reduction <add>, %100, %cst_53 [1] : vector<16x16xf32> to vector<16xf32>
    %102 = vector.shape_cast %101 : vector<16xf32> to vector<16x1xf32>
    %103 = tpu.reciprocal %102 {approx = true} : vector<16x1xf32> -> vector<16x1xf32>
    %104 = vector.broadcast %103 : vector<16x1xf32> to vector<16x16xf32>
    %105 = arith.mulf %100, %104 : vector<16x16xf32>
    %106 = arith.truncf %105 : vector<16x16xf32> to vector<16x16xbf16>
    %cst_54 = arith.constant dense<0.000000e+00> : vector<16x128xf32>
    %107 = tpu.matmul %106, %93, %cst_54 {dimension_numbers = #tpu.dot_dimension_numbers<[1], [0], [0], [1], [0, 0, 1, 1], [], []>} : vector<16x16xbf16>, vector<16x128xbf16>, vector<16x128xf32> -> vector<16x128xf32>
    %108 = arith.truncf %107 : vector<16x128xf32> to vector<16x128xbf16>
    %c0_55 = arith.constant 0 : index
    %c128 = arith.constant 128 : index
    %109 = vector.load %arg12[%c0_55, %c128] : memref<32x512xbf16, #tpu.memory_space<vmem>>, vector<16x128xbf16>
    tpu.vector_store %arg12[%c0_55, %c128], %108 {strides = array<i32>} : memref<32x512xbf16, #tpu.memory_space<vmem>>, vector<16x128xbf16>,
    %110 = vector.extract_strided_slice %50 {offsets = [0, 256], sizes = [16, 128], strides = [1, 1]} : vector<32x512xbf16> to vector<16x128xbf16>
    %111 = vector.extract_strided_slice %51 {offsets = [0, 128], sizes = [16, 128], strides = [1, 1]} : vector<32x256xbf16> to vector<16x128xbf16>
    %112 = vector.extract_strided_slice %52 {offsets = [0, 128], sizes = [16, 128], strides = [1, 1]} : vector<32x256xbf16> to vector<16x128xbf16>
    %cst_56 = arith.constant dense<0.000000e+00> : vector<16x16xf32>
    %113 = tpu.matmul %110, %111, %cst_56 {dimension_numbers = #tpu.dot_dimension_numbers<[1], [1], [0], [0], [0, 0, 1, 0], [], []>} : vector<16x128xbf16>, vector<16x128xbf16>, vector<16x16xf32> -> vector<16x16xf32>
    %114 = arith.addf %113, %71 : vector<16x16xf32>
    %cst_57 = arith.constant dense<0xFF800000> : vector<16xf32>
    %115 = vector.multi_reduction <maximumf>, %114, %cst_57 [1] : vector<16x16xf32> to vector<16xf32>
    %116 = vector.shape_cast %115 : vector<16xf32> to vector<16x1xf32>
    %117 = vector.broadcast %116 : vector<16x1xf32> to vector<16x16xf32>
    %118 = arith.subf %114, %117 : vector<16x16xf32>
    %119 = math.exp %118 : vector<16x16xf32>
    %cst_58 = arith.constant dense<0.000000e+00> : vector<16xf32>
    %120 = vector.multi_reduction <add>, %119, %cst_58 [1] : vector<16x16xf32> to vector<16xf32>
    %121 = vector.shape_cast %120 : vector<16xf32> to vector<16x1xf32>
    %122 = tpu.reciprocal %121 {approx = true} : vector<16x1xf32> -> vector<16x1xf32>
    %123 = vector.broadcast %122 : vector<16x1xf32> to vector<16x16xf32>
    %124 = arith.mulf %119, %123 : vector<16x16xf32>
    %125 = arith.truncf %124 : vector<16x16xf32> to vector<16x16xbf16>
    %cst_59 = arith.constant dense<0.000000e+00> : vector<16x128xf32>
    %126 = tpu.matmul %125, %112, %cst_59 {dimension_numbers = #tpu.dot_dimension_numbers<[1], [0], [0], [1], [0, 0, 1, 1], [], []>} : vector<16x16xbf16>, vector<16x128xbf16>, vector<16x128xf32> -> vector<16x128xf32>
    %127 = arith.truncf %126 : vector<16x128xf32> to vector<16x128xbf16>
    %c0_60 = arith.constant 0 : index
    %c256 = arith.constant 256 : index
    %128 = vector.load %arg12[%c0_60, %c256] : memref<32x512xbf16, #tpu.memory_space<vmem>>, vector<16x128xbf16>
    tpu.vector_store %arg12[%c0_60, %c256], %127 {strides = array<i32>} : memref<32x512xbf16, #tpu.memory_space<vmem>>, vector<16x128xbf16>,
    %129 = vector.extract_strided_slice %50 {offsets = [0, 384], sizes = [16, 128], strides = [1, 1]} : vector<32x512xbf16> to vector<16x128xbf16>
    %130 = vector.extract_strided_slice %51 {offsets = [0, 128], sizes = [16, 128], strides = [1, 1]} : vector<32x256xbf16> to vector<16x128xbf16>
    %131 = vector.extract_strided_slice %52 {offsets = [0, 128], sizes = [16, 128], strides = [1, 1]} : vector<32x256xbf16> to vector<16x128xbf16>
    %cst_61 = arith.constant dense<0.000000e+00> : vector<16x16xf32>
    %132 = tpu.matmul %129, %130, %cst_61 {dimension_numbers = #tpu.dot_dimension_numbers<[1], [1], [0], [0], [0, 0, 1, 0], [], []>} : vector<16x128xbf16>, vector<16x128xbf16>, vector<16x16xf32> -> vector<16x16xf32>
    %133 = arith.addf %132, %71 : vector<16x16xf32>
    %cst_62 = arith.constant dense<0xFF800000> : vector<16xf32>
    %134 = vector.multi_reduction <maximumf>, %133, %cst_62 [1] : vector<16x16xf32> to vector<16xf32>
    %135 = vector.shape_cast %134 : vector<16xf32> to vector<16x1xf32>
    %136 = vector.broadcast %135 : vector<16x1xf32> to vector<16x16xf32>
    %137 = arith.subf %133, %136 : vector<16x16xf32>
    %138 = math.exp %137 : vector<16x16xf32>
    %cst_63 = arith.constant dense<0.000000e+00> : vector<16xf32>
    %139 = vector.multi_reduction <add>, %138, %cst_63 [1] : vector<16x16xf32> to vector<16xf32>
    %140 = vector.shape_cast %139 : vector<16xf32> to vector<16x1xf32>
    %141 = tpu.reciprocal %140 {approx = true} : vector<16x1xf32> -> vector<16x1xf32>
    %142 = vector.broadcast %141 : vector<16x1xf32> to vector<16x16xf32>
    %143 = arith.mulf %138, %142 : vector<16x16xf32>
    %144 = arith.truncf %143 : vector<16x16xf32> to vector<16x16xbf16>
    %cst_64 = arith.constant dense<0.000000e+00> : vector<16x128xf32>
    %145 = tpu.matmul %144, %131, %cst_64 {dimension_numbers = #tpu.dot_dimension_numbers<[1], [0], [0], [1], [0, 0, 1, 1], [], []>} : vector<16x16xbf16>, vector<16x128xbf16>, vector<16x128xf32> -> vector<16x128xf32>
    %146 = arith.truncf %145 : vector<16x128xf32> to vector<16x128xbf16>
    %c0_65 = arith.constant 0 : index
    %c384 = arith.constant 384 : index
    %147 = vector.load %arg12[%c0_65, %c384] : memref<32x512xbf16, #tpu.memory_space<vmem>>, vector<16x128xbf16>
    tpu.vector_store %arg12[%c0_65, %c384], %146 {strides = array<i32>} : memref<32x512xbf16, #tpu.memory_space<vmem>>, vector<16x128xbf16>,
    %c1_66 = arith.constant 1 : index
    %c0_67 = arith.constant 0 : index
    %c0_68 = arith.constant 0 : index
    %148 = vector.load %arg2[%c1_66, %c0_67, %c0_68] : memref<2x1x16xf32, #tpu.memory_space<vmem>>, vector<1x1x16xf32>
    %149 = vector.shape_cast %148 : vector<1x1x16xf32> to vector<1x16xf32>
    %cst_69 = arith.constant -2.38197633E+38 : f32
    %150 = vector.broadcast %cst_69 : f32 to vector<1x16xf32>
    %151 = arith.mulf %149, %150 : vector<1x16xf32>
    %c16 = arith.constant 16 : index
    %c0_70 = arith.constant 0 : index
    %152 = vector.load %arg3[%c16, %c0_70] : memref<32x1xf32, #tpu.memory_space<vmem>>, vector<16x1xf32>
    %cst_71 = arith.constant 1.000000e+00 : f32
    %153 = vector.broadcast %cst_71 : f32 to vector<16x1xf32>
    %154 = arith.subf %153, %152 : vector<16x1xf32>
    %cst_72 = arith.constant -2.38197633E+38 : f32
    %155 = vector.broadcast %cst_72 : f32 to vector<16x1xf32>
    %156 = arith.mulf %154, %155 : vector<16x1xf32>
    %157 = vector.broadcast %156 : vector<16x1xf32> to vector<16x16xf32>
    %158 = vector.broadcast %151 : vector<1x16xf32> to vector<16x16xf32>
    %159 = arith.minimumf %157, %158 : vector<16x16xf32>
    %160 = arith.minimumf %159, %58 : vector<16x16xf32>
    %161 = vector.extract_strided_slice %50 {offsets = [16, 0], sizes = [16, 128], strides = [1, 1]} : vector<32x512xbf16> to vector<16x128xbf16>
    %162 = vector.extract_strided_slice %51 {offsets = [16, 0], sizes = [16, 128], strides = [1, 1]} : vector<32x256xbf16> to vector<16x128xbf16>
    %163 = vector.extract_strided_slice %52 {offsets = [16, 0], sizes = [16, 128], strides = [1, 1]} : vector<32x256xbf16> to vector<16x128xbf16>
    %cst_73 = arith.constant dense<0.000000e+00> : vector<16x16xf32>
    %164 = tpu.matmul %161, %162, %cst_73 {dimension_numbers = #tpu.dot_dimension_numbers<[1], [1], [0], [0], [0, 0, 1, 0], [], []>} : vector<16x128xbf16>, vector<16x128xbf16>, vector<16x16xf32> -> vector<16x16xf32>
    %165 = arith.addf %164, %160 : vector<16x16xf32>
    %cst_74 = arith.constant dense<0xFF800000> : vector<16xf32>
    %166 = vector.multi_reduction <maximumf>, %165, %cst_74 [1] : vector<16x16xf32> to vector<16xf32>
    %167 = vector.shape_cast %166 : vector<16xf32> to vector<16x1xf32>
    %168 = vector.broadcast %167 : vector<16x1xf32> to vector<16x16xf32>
    %169 = arith.subf %165, %168 : vector<16x16xf32>
    %170 = math.exp %169 : vector<16x16xf32>
    %cst_75 = arith.constant dense<0.000000e+00> : vector<16xf32>
    %171 = vector.multi_reduction <add>, %170, %cst_75 [1] : vector<16x16xf32> to vector<16xf32>
    %172 = vector.shape_cast %171 : vector<16xf32> to vector<16x1xf32>
    %173 = tpu.reciprocal %172 {approx = true} : vector<16x1xf32> -> vector<16x1xf32>
    %174 = vector.broadcast %173 : vector<16x1xf32> to vector<16x16xf32>
    %175 = arith.mulf %170, %174 : vector<16x16xf32>
    %176 = arith.truncf %175 : vector<16x16xf32> to vector<16x16xbf16>
    %cst_76 = arith.constant dense<0.000000e+00> : vector<16x128xf32>
    %177 = tpu.matmul %176, %163, %cst_76 {dimension_numbers = #tpu.dot_dimension_numbers<[1], [0], [0], [1], [0, 0, 1, 1], [], []>} : vector<16x16xbf16>, vector<16x128xbf16>, vector<16x128xf32> -> vector<16x128xf32>
    %178 = arith.truncf %177 : vector<16x128xf32> to vector<16x128xbf16>
    %c16_77 = arith.constant 16 : index
    %c0_78 = arith.constant 0 : index
    %179 = vector.load %arg12[%c16_77, %c0_78] : memref<32x512xbf16, #tpu.memory_space<vmem>>, vector<16x128xbf16>
    tpu.vector_store %arg12[%c16_77, %c0_78], %178 {strides = array<i32>} : memref<32x512xbf16, #tpu.memory_space<vmem>>, vector<16x128xbf16>,
    %180 = vector.extract_strided_slice %50 {offsets = [16, 128], sizes = [16, 128], strides = [1, 1]} : vector<32x512xbf16> to vector<16x128xbf16>
    %181 = vector.extract_strided_slice %51 {offsets = [16, 0], sizes = [16, 128], strides = [1, 1]} : vector<32x256xbf16> to vector<16x128xbf16>
    %182 = vector.extract_strided_slice %52 {offsets = [16, 0], sizes = [16, 128], strides = [1, 1]} : vector<32x256xbf16> to vector<16x128xbf16>
    %cst_79 = arith.constant dense<0.000000e+00> : vector<16x16xf32>
    %183 = tpu.matmul %180, %181, %cst_79 {dimension_numbers = #tpu.dot_dimension_numbers<[1], [1], [0], [0], [0, 0, 1, 0], [], []>} : vector<16x128xbf16>, vector<16x128xbf16>, vector<16x16xf32> -> vector<16x16xf32>
    %184 = arith.addf %183, %160 : vector<16x16xf32>
    %cst_80 = arith.constant dense<0xFF800000> : vector<16xf32>
    %185 = vector.multi_reduction <maximumf>, %184, %cst_80 [1] : vector<16x16xf32> to vector<16xf32>
    %186 = vector.shape_cast %185 : vector<16xf32> to vector<16x1xf32>
    %187 = vector.broadcast %186 : vector<16x1xf32> to vector<16x16xf32>
    %188 = arith.subf %184, %187 : vector<16x16xf32>
    %189 = math.exp %188 : vector<16x16xf32>
    %cst_81 = arith.constant dense<0.000000e+00> : vector<16xf32>
    %190 = vector.multi_reduction <add>, %189, %cst_81 [1] : vector<16x16xf32> to vector<16xf32>
    %191 = vector.shape_cast %190 : vector<16xf32> to vector<16x1xf32>
    %192 = tpu.reciprocal %191 {approx = true} : vector<16x1xf32> -> vector<16x1xf32>
    %193 = vector.broadcast %192 : vector<16x1xf32> to vector<16x16xf32>
    %194 = arith.mulf %189, %193 : vector<16x16xf32>
    %195 = arith.truncf %194 : vector<16x16xf32> to vector<16x16xbf16>
    %cst_82 = arith.constant dense<0.000000e+00> : vector<16x128xf32>
    %196 = tpu.matmul %195, %182, %cst_82 {dimension_numbers = #tpu.dot_dimension_numbers<[1], [0], [0], [1], [0, 0, 1, 1], [], []>} : vector<16x16xbf16>, vector<16x128xbf16>, vector<16x128xf32> -> vector<16x128xf32>
    %197 = arith.truncf %196 : vector<16x128xf32> to vector<16x128xbf16>
    %c16_83 = arith.constant 16 : index
    %c128_84 = arith.constant 128 : index
    %198 = vector.load %arg12[%c16_83, %c128_84] : memref<32x512xbf16, #tpu.memory_space<vmem>>, vector<16x128xbf16>
    tpu.vector_store %arg12[%c16_83, %c128_84], %197 {strides = array<i32>} : memref<32x512xbf16, #tpu.memory_space<vmem>>, vector<16x128xbf16>,
    %199 = vector.extract_strided_slice %50 {offsets = [16, 256], sizes = [16, 128], strides = [1, 1]} : vector<32x512xbf16> to vector<16x128xbf16>
    %200 = vector.extract_strided_slice %51 {offsets = [16, 128], sizes = [16, 128], strides = [1, 1]} : vector<32x256xbf16> to vector<16x128xbf16>
    %201 = vector.extract_strided_slice %52 {offsets = [16, 128], sizes = [16, 128], strides = [1, 1]} : vector<32x256xbf16> to vector<16x128xbf16>
    %cst_85 = arith.constant dense<0.000000e+00> : vector<16x16xf32>
    %202 = tpu.matmul %199, %200, %cst_85 {dimension_numbers = #tpu.dot_dimension_numbers<[1], [1], [0], [0], [0, 0, 1, 0], [], []>} : vector<16x128xbf16>, vector<16x128xbf16>, vector<16x16xf32> -> vector<16x16xf32>
    %203 = arith.addf %202, %160 : vector<16x16xf32>
    %cst_86 = arith.constant dense<0xFF800000> : vector<16xf32>
    %204 = vector.multi_reduction <maximumf>, %203, %cst_86 [1] : vector<16x16xf32> to vector<16xf32>
    %205 = vector.shape_cast %204 : vector<16xf32> to vector<16x1xf32>
    %206 = vector.broadcast %205 : vector<16x1xf32> to vector<16x16xf32>
    %207 = arith.subf %203, %206 : vector<16x16xf32>
    %208 = math.exp %207 : vector<16x16xf32>
    %cst_87 = arith.constant dense<0.000000e+00> : vector<16xf32>
    %209 = vector.multi_reduction <add>, %208, %cst_87 [1] : vector<16x16xf32> to vector<16xf32>
    %210 = vector.shape_cast %209 : vector<16xf32> to vector<16x1xf32>
    %211 = tpu.reciprocal %210 {approx = true} : vector<16x1xf32> -> vector<16x1xf32>
    %212 = vector.broadcast %211 : vector<16x1xf32> to vector<16x16xf32>
    %213 = arith.mulf %208, %212 : vector<16x16xf32>
    %214 = arith.truncf %213 : vector<16x16xf32> to vector<16x16xbf16>
    %cst_88 = arith.constant dense<0.000000e+00> : vector<16x128xf32>
    %215 = tpu.matmul %214, %201, %cst_88 {dimension_numbers = #tpu.dot_dimension_numbers<[1], [0], [0], [1], [0, 0, 1, 1], [], []>} : vector<16x16xbf16>, vector<16x128xbf16>, vector<16x128xf32> -> vector<16x128xf32>
    %216 = arith.truncf %215 : vector<16x128xf32> to vector<16x128xbf16>
    %c16_89 = arith.constant 16 : index
    %c256_90 = arith.constant 256 : index
    %217 = vector.load %arg12[%c16_89, %c256_90] : memref<32x512xbf16, #tpu.memory_space<vmem>>, vector<16x128xbf16>
    tpu.vector_store %arg12[%c16_89, %c256_90], %216 {strides = array<i32>} : memref<32x512xbf16, #tpu.memory_space<vmem>>, vector<16x128xbf16>,
    %218 = vector.extract_strided_slice %50 {offsets = [16, 384], sizes = [16, 128], strides = [1, 1]} : vector<32x512xbf16> to vector<16x128xbf16>
    %219 = vector.extract_strided_slice %51 {offsets = [16, 128], sizes = [16, 128], strides = [1, 1]} : vector<32x256xbf16> to vector<16x128xbf16>
    %220 = vector.extract_strided_slice %52 {offsets = [16, 128], sizes = [16, 128], strides = [1, 1]} : vector<32x256xbf16> to vector<16x128xbf16>
    %cst_91 = arith.constant dense<0.000000e+00> : vector<16x16xf32>
    %221 = tpu.matmul %218, %219, %cst_91 {dimension_numbers = #tpu.dot_dimension_numbers<[1], [1], [0], [0], [0, 0, 1, 0], [], []>} : vector<16x128xbf16>, vector<16x128xbf16>, vector<16x16xf32> -> vector<16x16xf32>
    %222 = arith.addf %221, %160 : vector<16x16xf32>
    %cst_92 = arith.constant dense<0xFF800000> : vector<16xf32>
    %223 = vector.multi_reduction <maximumf>, %222, %cst_92 [1] : vector<16x16xf32> to vector<16xf32>
    %224 = vector.shape_cast %223 : vector<16xf32> to vector<16x1xf32>
    %225 = vector.broadcast %224 : vector<16x1xf32> to vector<16x16xf32>
    %226 = arith.subf %222, %225 : vector<16x16xf32>
    %227 = math.exp %226 : vector<16x16xf32>
    %cst_93 = arith.constant dense<0.000000e+00> : vector<16xf32>
    %228 = vector.multi_reduction <add>, %227, %cst_93 [1] : vector<16x16xf32> to vector<16xf32>
    %229 = vector.shape_cast %228 : vector<16xf32> to vector<16x1xf32>
    %230 = tpu.reciprocal %229 {approx = true} : vector<16x1xf32> -> vector<16x1xf32>
    %231 = vector.broadcast %230 : vector<16x1xf32> to vector<16x16xf32>
    %232 = arith.mulf %227, %231 : vector<16x16xf32>
    %233 = arith.truncf %232 : vector<16x16xf32> to vector<16x16xbf16>
    %cst_94 = arith.constant dense<0.000000e+00> : vector<16x128xf32>
    %234 = tpu.matmul %233, %220, %cst_94 {dimension_numbers = #tpu.dot_dimension_numbers<[1], [0], [0], [1], [0, 0, 1, 1], [], []>} : vector<16x16xbf16>, vector<16x128xbf16>, vector<16x128xf32> -> vector<16x128xf32>
    %235 = arith.truncf %234 : vector<16x128xf32> to vector<16x128xbf16>
    %c16_95 = arith.constant 16 : index
    %c384_96 = arith.constant 384 : index
    %236 = vector.load %arg12[%c16_95, %c384_96] : memref<32x512xbf16, #tpu.memory_space<vmem>>, vector<16x128xbf16>
    tpu.vector_store %arg12[%c16_95, %c384_96], %235 {strides = array<i32>} : memref<32x512xbf16, #tpu.memory_space<vmem>>, vector<16x128xbf16>,
    %c0_97 = arith.constant 0 : index
    %c0_98 = arith.constant 0 : index
    %237 = vector.load %arg12[%c0_97, %c0_98] : memref<32x512xbf16, #tpu.memory_space<vmem>>, vector<32x512xbf16>
    %c0_99 = arith.constant 0 : index
    %c0_100 = arith.constant 0 : index
    %c0_101 = arith.constant 0 : index
    %238 = vector.load %arg8[%c0_99, %c0_100, %c0_101] : memref<1x512x32xbf16, #tpu.memory_space<vmem>>, vector<1x512x32xbf16>
    %239 = vector.shape_cast %238 : vector<1x512x32xbf16> to vector<512x32xbf16>
    %cst_102 = arith.constant dense<0.000000e+00> : vector<32x32xf32>
    %240 = tpu.matmul %237, %239, %cst_102 {dimension_numbers = #tpu.dot_dimension_numbers<[1], [0], [0], [1], [0, 0, 1, 1], [], []>} : vector<32x512xbf16>, vector<512x32xbf16>, vector<32x32xf32> -> vector<32x32xf32>
    %241 = vector.broadcast %13 : vector<1x32xf32> to vector<32x32xf32>
    %242 = arith.addf %240, %241 : vector<32x32xf32>
    %243 = arith.addf %242, %3 : vector<32x32xf32>
    %cst_103 = arith.constant dense<0.000000e+00> : vector<32xf32>
    %244 = vector.multi_reduction <add>, %243, %cst_103 [1] : vector<32x32xf32> to vector<32xf32>
    %245 = vector.shape_cast %244 : vector<32xf32> to vector<32x1xf32>
    %cst_104 = arith.constant 3.200000e+01 : f32
    %246 = vector.broadcast %cst_104 : f32 to vector<32x1xf32>
    %247 = arith.divf %245, %246 : vector<32x1xf32>
    %248 = vector.broadcast %247 : vector<32x1xf32> to vector<32x32xf32>
    %249 = arith.subf %243, %248 : vector<32x32xf32>
    %250 = vector.broadcast %247 : vector<32x1xf32> to vector<32x32xf32>
    %251 = arith.subf %243, %250 : vector<32x32xf32>
    %252 = arith.mulf %249, %251 : vector<32x32xf32>
    %cst_105 = arith.constant dense<0.000000e+00> : vector<32xf32>
    %253 = vector.multi_reduction <add>, %252, %cst_105 [1] : vector<32x32xf32> to vector<32xf32>
    %254 = vector.shape_cast %253 : vector<32xf32> to vector<32x1xf32>
    %cst_106 = arith.constant 3.200000e+01 : f32
    %255 = vector.broadcast %cst_106 : f32 to vector<32x1xf32>
    %256 = arith.divf %254, %255 : vector<32x1xf32>
    %257 = vector.broadcast %247 : vector<32x1xf32> to vector<32x32xf32>
    %258 = arith.subf %243, %257 : vector<32x32xf32>
    %cst_107 = arith.constant 9.99999997E-7 : f32
    %259 = vector.broadcast %cst_107 : f32 to vector<32x1xf32>
    %260 = arith.addf %256, %259 : vector<32x1xf32>
    %261 = math.rsqrt %260 : vector<32x1xf32>
    %262 = vector.broadcast %261 : vector<32x1xf32> to vector<32x32xf32>
    %263 = arith.mulf %258, %262 : vector<32x32xf32>
    %264 = vector.broadcast %15 : vector<1x32xf32> to vector<32x32xf32>
    %265 = arith.mulf %263, %264 : vector<32x32xf32>
    %266 = vector.broadcast %17 : vector<1x32xf32> to vector<32x32xf32>
    %267 = arith.addf %265, %266 : vector<32x32xf32>
    %268 = arith.truncf %267 : vector<32x32xf32> to vector<32x32xbf16>
    %c0_108 = arith.constant 0 : index
    %c0_109 = arith.constant 0 : index
    %c0_110 = arith.constant 0 : index
    %269 = vector.load %arg9[%c0_108, %c0_109, %c0_110] : memref<1x32x64xbf16, #tpu.memory_space<vmem>>, vector<1x32x64xbf16>
    %270 = vector.shape_cast %269 : vector<1x32x64xbf16> to vector<32x64xbf16>
    %cst_111 = arith.constant dense<0.000000e+00> : vector<32x64xf32>
    %271 = tpu.matmul %268, %270, %cst_111 {dimension_numbers = #tpu.dot_dimension_numbers<[1], [0], [0], [1], [0, 0, 1, 1], [], []>} : vector<32x32xbf16>, vector<32x64xbf16>, vector<32x64xf32> -> vector<32x64xf32>
    %272 = vector.broadcast %19 : vector<1x64xf32> to vector<32x64xf32>
    %273 = arith.addf %271, %272 : vector<32x64xf32>
    %cst_112 = arith.constant 0.000000e+00 : f32
    %274 = vector.broadcast %cst_112 : f32 to vector<32x64xf32>
    %275 = arith.maximumf %273, %274 : vector<32x64xf32>
    %276 = arith.truncf %275 : vector<32x64xf32> to vector<32x64xbf16>
    %c0_113 = arith.constant 0 : index
    %c0_114 = arith.constant 0 : index
    %c0_115 = arith.constant 0 : index
    %277 = vector.load %arg10[%c0_113, %c0_114, %c0_115] : memref<1x64x32xbf16, #tpu.memory_space<vmem>>, vector<1x64x32xbf16>
    %278 = vector.shape_cast %277 : vector<1x64x32xbf16> to vector<64x32xbf16>
    %cst_116 = arith.constant dense<0.000000e+00> : vector<32x32xf32>
    %279 = tpu.matmul %276, %278, %cst_116 {dimension_numbers = #tpu.dot_dimension_numbers<[1], [0], [0], [1], [0, 0, 1, 1], [], []>} : vector<32x64xbf16>, vector<64x32xbf16>, vector<32x32xf32> -> vector<32x32xf32>
    %280 = vector.broadcast %21 : vector<1x32xf32> to vector<32x32xf32>
    %281 = arith.addf %279, %280 : vector<32x32xf32>
    %c0_117 = arith.constant 0 : index
    %c0_118 = arith.constant 0 : index
    %282 = vector.load %arg3[%c0_117, %c0_118] : memref<32x1xf32, #tpu.memory_space<vmem>>, vector<32x1xf32>
    %283 = vector.broadcast %282 : vector<32x1xf32> to vector<32x32xf32>
    %284 = arith.mulf %281, %283 : vector<32x32xf32>
    %285 = arith.addf %284, %243 : vector<32x32xf32>
    %c0_119 = arith.constant 0 : index
    %c0_120 = arith.constant 0 : index
    %286 = vector.load %arg11[%c0_119, %c0_120] : memref<32x32xf32, #tpu.memory_space<vmem>>, vector<32x32xf32>
    tpu.vector_store %arg11[%c0_119, %c0_120], %285 {strides = array<i32>} : memref<32x32xf32, #tpu.memory_space<vmem>>, vector<32x32xf32>,
    return
  }
  func.func @transform_0(%arg0: i32) -> (i32, i32) {
    %c0_i32 = arith.constant 0 : i32
    %c0_i32_0 = arith.constant 0 : i32
    %c0_i32_1 = arith.constant 0 : i32
    return %c0_i32, %c0_i32_0 : i32, i32
  }
  func.func @transform_1(%arg0: i32) -> (i32, i32, i32) {
    %c0_i32 = arith.constant 0 : i32
    %c0_i32_0 = arith.constant 0 : i32
    %c0_i32_1 = arith.constant 0 : i32
    %c0_i32_2 = arith.constant 0 : i32
    return %c0_i32, %c0_i32_0, %c0_i32_1 : i32, i32, i32
  }
  func.func @transform_2(%arg0: i32) -> (i32, i32) {
    %c0_i32 = arith.constant 0 : i32
    %c0_i32_0 = arith.constant 0 : i32
    %c0_i32_1 = arith.constant 0 : i32
    return %c0_i32, %c0_i32_0 : i32, i32
  }
  func.func @transform_3(%arg0: i32) -> (i32, i32, i32) {
    %c0_i32 = arith.constant 0 : i32
    %c0_i32_0 = arith.constant 0 : i32
    %c0_i32_1 = arith.constant 0 : i32
    return %arg0, %c0_i32, %c0_i32_0 : i32, i32, i32
  }
  func.func @transform_4(%arg0: i32) -> (i32, i32, i32) {
    %c0_i32 = arith.constant 0 : i32
    %c0_i32_0 = arith.constant 0 : i32
    %c0_i32_1 = arith.constant 0 : i32
    return %arg0, %c0_i32, %c0_i32_0 : i32, i32, i32
  }
  func.func @transform_5(%arg0: i32) -> (i32, i32, i32) {
    %c0_i32 = arith.constant 0 : i32
    %c0_i32_0 = arith.constant 0 : i32
    %c0_i32_1 = arith.constant 0 : i32
    return %arg0, %c0_i32, %c0_i32_0 : i32, i32, i32
  }
  func.func @transform_6(%arg0: i32) -> (i32, i32, i32) {
    %c0_i32 = arith.constant 0 : i32
    %c0_i32_0 = arith.constant 0 : i32
    %c0_i32_1 = arith.constant 0 : i32
    return %arg0, %c0_i32, %c0_i32_0 : i32, i32, i32
  }
  func.func @transform_7(%arg0: i32) -> (i32, i32, i32) {
    %c0_i32 = arith.constant 0 : i32
    %c0_i32_0 = arith.constant 0 : i32
    %c0_i32_1 = arith.constant 0 : i32
    return %arg0, %c0_i32, %c0_i32_0 : i32, i32, i32
  }
  func.func @transform_8(%arg0: i32) -> (i32, i32, i32) {
    %c0_i32 = arith.constant 0 : i32
    %c0_i32_0 = arith.constant 0 : i32
    %c0_i32_1 = arith.constant 0 : i32
    return %arg0, %c0_i32, %c0_i32_0 : i32, i32, i32
  }
  func.func @transform_9(%arg0: i32) -> (i32, i32, i32) {
    %c0_i32 = arith.constant 0 : i32
    %c0_i32_0 = arith.constant 0 : i32
    %c0_i32_1 = arith.constant 0 : i32
    return %arg0, %c0_i32, %c0_i32_0 : i32, i32, i32
  }
  func.func @transform_10(%arg0: i32) -> (i32, i32) {
    %c0_i32 = arith.constant 0 : i32
    %c0_i32_0 = arith.constant 0 : i32
    %c0_i32_1 = arith.constant 0 : i32
    return %c0_i32, %c0_i32_0 : i32, i32
  }
}

</mosaic_0001>

<llo_original>
// kernel: tpu_custom_call.1
$region0: #{tpu_custom_call.1}
  #allocation0 [shape = 'u32[]', space=smem, size = 0x4, offset = 0x4, fixed_abs, tag = 'smem constant byte address 0x4 - core index']
  #allocation1 [shape = 'u32[144,128]{1,0:T(1,128)}', space=vmem, size = 0x12000, scoped, tag = 'internal scratch']
  #allocation2 [shape = 'bf16[32,512]{1,0:T(8,128)(2,1)}', space=vmem, size = 0x8000, scoped, tag = 'scratch operand']
  %s0 = inlined_call_operand.vmem [shape: f32[32,32], index: 0, kind: input, shape index: {}]
  %s1 = inlined_call_operand.vmem [shape: f32[2,1,16], index: 1, kind: input, shape index: {}]
  %s2 = inlined_call_operand.vmem [shape: f32[32,1], index: 2, kind: input, shape index: {}]
  %s3 = inlined_call_operand.vmem [shape: f32[2,9,512], index: 3, kind: input, shape index: {}]
  %s4 = inlined_call_operand.vmem [shape: bf16[2,32,512], index: 4, kind: input, shape index: {}]
  %s5 = inlined_call_operand.vmem [shape: bf16[2,32,256], index: 5, kind: input, shape index: {}]
  %s6 = inlined_call_operand.vmem [shape: bf16[2,32,256], index: 6, kind: input, shape index: {}]
  %s7 = inlined_call_operand.vmem [shape: bf16[2,512,32], index: 7, kind: input, shape index: {}]
  %s8 = inlined_call_operand.vmem [shape: bf16[2,32,64], index: 8, kind: input, shape index: {}]
  %s9 = inlined_call_operand.vmem [shape: bf16[2,64,32], index: 9, kind: input, shape index: {}]
  %s10 = inlined_call_operand.hbm [shape: f32[32,32], index: 10, kind: output, shape index: {}]
  %s11 = sld [smem:[#allocation0]]
  $region77: #{tpu_custom_call.1} parent=0
    _
  %s13 = ssub.s32 1, %s11
  %s14 = scalar_select 0, %s13, %s11
  $region1: #{tpu_custom_call.1} parent=0
    #allocation3 [shape = 'u8[16384]{0}', space=vmem, size = 0x4000, scoped, tag = 'output window, operand 0, single buffered']
    #allocation4 [shape = 's32[2]{0}', space=sflag, size = 0x8, scoped, tag = 'scoped memory for tpu_custom_call.1']
    %15 = vsyncpa [#allocation4], 0
    loop: start=0, step=1, limit=4
    $region2: #{tpu_custom_call.1} parent=1 // loop_pre_header
      _
    $region3: #{tpu_custom_call.1} parent=1 // loop_header
      %s17 = sphi 0, %s21
      %p18 = scmp.ge.s32.totalorder %s17, 4
      %s25 = sphi 0, %s25
      %s27 = sphi 0, %s25
      %s28 = sphi 0, %s27
      %s42 = sphi 0, %s28
      %s46 = sphi 0, %s46
      %s48 = sphi 0, %s46
      %s49 = sphi 0, %s48
      %s63 = sphi 0, %s49
      %s67 = sphi 0, %s67
      %s69 = sphi 0, %s67
      %s70 = sphi 0, %s69
      %s84 = sphi 0, %s70
      %s90 = sphi 0, %s92
      %s93 = sphi 0, %s90
      %s94 = sphi 0, %s93
      %s110 = sphi 0, %s94
      %s116 = sphi 0, %s118
      %s119 = sphi 0, %s116
      %s120 = sphi 0, %s119
      %s136 = sphi 0, %s120
      %s142 = sphi 0, %s144
      %s145 = sphi 0, %s142
      %s146 = sphi 0, %s145
      %s162 = sphi 0, %s146
      %s168 = sphi 0, %s170
      %s171 = sphi 0, %s168
      %s172 = sphi 0, %s171
      %s188 = sphi 0, %s172
      %s194 = sphi 0, %s196
      %s197 = sphi 0, %s194
      %s198 = sphi 0, %s197
      %s214 = sphi 0, %s198
      %s220 = sphi 0, %s222
      %s223 = sphi 0, %s220
      %s224 = sphi 0, %s223
      %s240 = sphi 0, %s224
      %s246 = sphi 0, %s248
      %s249 = sphi 0, %s246
      %s250 = sphi 0, %s249
      %s266 = sphi 0, %s250
      %s270 = sphi 0, %s270
      %s272 = sphi 0, %s270
      %s273 = sphi 0, %s272
      %s287 = sphi 0, %s273
    $region4: #{tpu_custom_call.1} parent=1 // loop_header_branch
      %20 = sbr.rel (%p18) target = $region8
    $region5: #{tpu_custom_call.1} parent=1 // loop_body
      %s22 = ssub.s32 %s17, 1
      %s23 = ssub.s32 %s17, 2
      %s24 = sadd.s32 %s17, 1
      %s26 = sadd.s32 %s25, 1
      %p29 = scmp.eq.s32.totalorder %s17, 1
      %p30 = scmp.ne.s32.totalorder %s25, %s27
      %p31 = scmp.eq.s32.totalorder %s17, 0
      %p32 = por %p30, %p31
      %p33 = scmp.ne.s32.totalorder %s25, %s27
      %p34 = scmp.eq.s32.totalorder %s22, 1
      %p35 = por %p33, %p34
      %p36 = scmp.ne.s32.totalorder %s27, %s28
      %p37 = scmp.eq.s32.totalorder %s22, 0
      %p38 = por %p36, %p37
      %p39 = scmp.ne.s32.totalorder %s27, %s28
      %p40 = scmp.eq.s32.totalorder %s23, 1
      %p41 = por %p39, %p40
      %p43 = scmp.ne.s32.totalorder %s28, %s42
      %p44 = scmp.eq.s32.totalorder %s23, 0
      %p45 = por %p43, %p44
      %s47 = sadd.s32 %s46, 1
      %p50 = scmp.eq.s32.totalorder %s17, 1
      %p51 = scmp.ne.s32.totalorder %s46, %s48
      %p52 = scmp.eq.s32.totalorder %s17, 0
      %p53 = por %p51, %p52
      %p54 = scmp.ne.s32.totalorder %s46, %s48
      %p55 = scmp.eq.s32.totalorder %s22, 1
      %p56 = por %p54, %p55
      %p57 = scmp.ne.s32.totalorder %s48, %s49
      %p58 = scmp.eq.s32.totalorder %s22, 0
      %p59 = por %p57, %p58
      %p60 = scmp.ne.s32.totalorder %s48, %s49
      %p61 = scmp.eq.s32.totalorder %s23, 1
      %p62 = por %p60, %p61
      %p64 = scmp.ne.s32.totalorder %s49, %s63
      %p65 = scmp.eq.s32.totalorder %s23, 0
      %p66 = por %p64, %p65
      %s68 = sadd.s32 %s67, 1
      %p71 = scmp.eq.s32.totalorder %s17, 1
      %p72 = scmp.ne.s32.totalorder %s67, %s69
      %p73 = scmp.eq.s32.totalorder %s17, 0
      %p74 = por %p72, %p73
      %p75 = scmp.ne.s32.totalorder %s67, %s69
      %p76 = scmp.eq.s32.totalorder %s22, 1
      %p77 = por %p75, %p76
      %p78 = scmp.ne.s32.totalorder %s69, %s70
      %p79 = scmp.eq.s32.totalorder %s22, 0
      %p80 = por %p78, %p79
      %p81 = scmp.ne.s32.totalorder %s69, %s70
      %p82 = scmp.eq.s32.totalorder %s23, 1
      %p83 = por %p81, %p82
      %p85 = scmp.ne.s32.totalorder %s70, %s84
      %p86 = scmp.eq.s32.totalorder %s23, 0
      %p87 = por %p85, %p86
      %s88 = ssub.s32 %s17, %s24
      %p89 = scmp.eq.s32.totalorder %s88, 0
      %s91 = sadd.s32 %s90, 1
      %s92 = scalar_select %p89, %s90, %s91
      %p95 = pneg %p89
      %p96 = scmp.eq.s32.totalorder %s17, 1
      %p97 = por %p95, %p96
      %p98 = scmp.ne.s32.totalorder %s90, %s93
      %p99 = scmp.eq.s32.totalorder %s17, 0
      %p100 = por %p98, %p99
      %p101 = scmp.ne.s32.totalorder %s90, %s93
      %p102 = scmp.eq.s32.totalorder %s22, 1
      %p103 = por %p101, %p102
      %p104 = scmp.ne.s32.totalorder %s93, %s94
      %p105 = scmp.eq.s32.totalorder %s22, 0
      %p106 = por %p104, %p105
      %p107 = scmp.ne.s32.totalorder %s93, %s94
      %p108 = scmp.eq.s32.totalorder %s23, 1
      %p109 = por %p107, %p108
      %p111 = scmp.ne.s32.totalorder %s94, %s110
      %p112 = scmp.eq.s32.totalorder %s23, 0
      %p113 = por %p111, %p112
      %s114 = ssub.s32 %s17, %s24
      %p115 = scmp.eq.s32.totalorder %s114, 0
      %s117 = sadd.s32 %s116, 1
      %s118 = scalar_select %p115, %s116, %s117
      %p121 = pneg %p115
      %p122 = scmp.eq.s32.totalorder %s17, 1
      %p123 = por %p121, %p122
      %p124 = scmp.ne.s32.totalorder %s116, %s119
      %p125 = scmp.eq.s32.totalorder %s17, 0
      %p126 = por %p124, %p125
      %p127 = scmp.ne.s32.totalorder %s116, %s119
      %p128 = scmp.eq.s32.totalorder %s22, 1
      %p129 = por %p127, %p128
      %p130 = scmp.ne.s32.totalorder %s119, %s120
      %p131 = scmp.eq.s32.totalorder %s22, 0
      %p132 = por %p130, %p131
      %p133 = scmp.ne.s32.totalorder %s119, %s120
      %p134 = scmp.eq.s32.totalorder %s23, 1
      %p135 = por %p133, %p134
      %p137 = scmp.ne.s32.totalorder %s120, %s136
      %p138 = scmp.eq.s32.totalorder %s23, 0
      %p139 = por %p137, %p138
      %s140 = ssub.s32 %s17, %s24
      %p141 = scmp.eq.s32.totalorder %s140, 0
      %s143 = sadd.s32 %s142, 1
      %s144 = scalar_select %p141, %s142, %s143
      %p147 = pneg %p141
      %p148 = scmp.eq.s32.totalorder %s17, 1
      %p149 = por %p147, %p148
      %p150 = scmp.ne.s32.totalorder %s142, %s145
      %p151 = scmp.eq.s32.totalorder %s17, 0
      %p152 = por %p150, %p151
      %p153 = scmp.ne.s32.totalorder %s142, %s145
      %p154 = scmp.eq.s32.totalorder %s22, 1
      %p155 = por %p153, %p154
      %p156 = scmp.ne.s32.totalorder %s145, %s146
      %p157 = scmp.eq.s32.totalorder %s22, 0
      %p158 = por %p156, %p157
      %p159 = scmp.ne.s32.totalorder %s145, %s146
      %p160 = scmp.eq.s32.totalorder %s23, 1
      %p161 = por %p159, %p160
      %p163 = scmp.ne.s32.totalorder %s146, %s162
      %p164 = scmp.eq.s32.totalorder %s23, 0
      %p165 = por %p163, %p164
      %s166 = ssub.s32 %s17, %s24
      %p167 = scmp.eq.s32.totalorder %s166, 0
      %s169 = sadd.s32 %s168, 1
      %s170 = scalar_select %p167, %s168, %s169
      %p173 = pneg %p167
      %p174 = scmp.eq.s32.totalorder %s17, 1
      %p175 = por %p173, %p174
      %p176 = scmp.ne.s32.totalorder %s168, %s171
      %p177 = scmp.eq.s32.totalorder %s17, 0
      %p178 = por %p176, %p177
      %p179 = scmp.ne.s32.totalorder %s168, %s171
      %p180 = scmp.eq.s32.totalorder %s22, 1
      %p181 = por %p179, %p180
      %p182 = scmp.ne.s32.totalorder %s171, %s172
      %p183 = scmp.eq.s32.totalorder %s22, 0
      %p184 = por %p182, %p183
      %p185 = scmp.ne.s32.totalorder %s171, %s172
      %p186 = scmp.eq.s32.totalorder %s23, 1
      %p187 = por %p185, %p186
      %p189 = scmp.ne.s32.totalorder %s172, %s188
      %p190 = scmp.eq.s32.totalorder %s23, 0
      %p191 = por %p189, %p190
      %s192 = ssub.s32 %s17, %s24
      %p193 = scmp.eq.s32.totalorder %s192, 0
      %s195 = sadd.s32 %s194, 1
      %s196 = scalar_select %p193, %s194, %s195
      %p199 = pneg %p193
      %p200 = scmp.eq.s32.totalorder %s17, 1
      %p201 = por %p199, %p200
      %p202 = scmp.ne.s32.totalorder %s194, %s197
      %p203 = scmp.eq.s32.totalorder %s17, 0
      %p204 = por %p202, %p203
      %p205 = scmp.ne.s32.totalorder %s194, %s197
      %p206 = scmp.eq.s32.totalorder %s22, 1
      %p207 = por %p205, %p206
      %p208 = scmp.ne.s32.totalorder %s197, %s198
      %p209 = scmp.eq.s32.totalorder %s22, 0
      %p210 = por %p208, %p209
      %p211 = scmp.ne.s32.totalorder %s197, %s198
      %p212 = scmp.eq.s32.totalorder %s23, 1
      %p213 = por %p211, %p212
      %p215 = scmp.ne.s32.totalorder %s198, %s214
      %p216 = scmp.eq.s32.totalorder %s23, 0
      %p217 = por %p215, %p216
      %s218 = ssub.s32 %s17, %s24
      %p219 = scmp.eq.s32.totalorder %s218, 0
      %s221 = sadd.s32 %s220, 1
      %s222 = scalar_select %p219, %s220, %s221
      %p225 = pneg %p219
      %p226 = scmp.eq.s32.totalorder %s17, 1
      %p227 = por %p225, %p226
      %p228 = scmp.ne.s32.totalorder %s220, %s223
      %p229 = scmp.eq.s32.totalorder %s17, 0
      %p230 = por %p228, %p229
      %p231 = scmp.ne.s32.totalorder %s220, %s223
      %p232 = scmp.eq.s32.totalorder %s22, 1
      %p233 = por %p231, %p232
      %p234 = scmp.ne.s32.totalorder %s223, %s224
      %p235 = scmp.eq.s32.totalorder %s22, 0
      %p236 = por %p234, %p235
      %p237 = scmp.ne.s32.totalorder %s223, %s224
      %p238 = scmp.eq.s32.totalorder %s23, 1
      %p239 = por %p237, %p238
      %p241 = scmp.ne.s32.totalorder %s224, %s240
      %p242 = scmp.eq.s32.totalorder %s23, 0
      %p243 = por %p241, %p242
      %s244 = ssub.s32 %s17, %s24
      %p245 = scmp.eq.s32.totalorder %s244, 0
      %s247 = sadd.s32 %s246, 1
      %s248 = scalar_select %p245, %s246, %s247
      %p251 = pneg %p245
      %p252 = scmp.eq.s32.totalorder %s17, 1
      %p253 = por %p251, %p252
      %p254 = scmp.ne.s32.totalorder %s246, %s249
      %p255 = scmp.eq.s32.totalorder %s17, 0
      %p256 = por %p254, %p255
      %p257 = scmp.ne.s32.totalorder %s246, %s249
      %p258 = scmp.eq.s32.totalorder %s22, 1
      %p259 = por %p257, %p258
      %p260 = scmp.ne.s32.totalorder %s249, %s250
      %p261 = scmp.eq.s32.totalorder %s22, 0
      %p262 = por %p260, %p261
      %p263 = scmp.ne.s32.totalorder %s249, %s250
      %p264 = scmp.eq.s32.totalorder %s23, 1
      %p265 = por %p263, %p264
      %p267 = scmp.ne.s32.totalorder %s250, %s266
      %p268 = scmp.eq.s32.totalorder %s23, 0
      %p269 = por %p267, %p268
      %s271 = sadd.s32 %s270, 1
      %p274 = scmp.eq.s32.totalorder %s17, 1
      %p275 = scmp.ne.s32.totalorder %s270, %s272
      %p276 = scmp.eq.s32.totalorder %s17, 0
      %p277 = por %p275, %p276
      %p278 = scmp.ne.s32.totalorder %s270, %s272
      %p279 = scmp.eq.s32.totalorder %s22, 1
      %p280 = por %p278, %p279
      %p281 = scmp.ne.s32.totalorder %s272, %s273
      %p282 = scmp.eq.s32.totalorder %s22, 0
      %p283 = por %p281, %p282
      %p284 = scmp.ne.s32.totalorder %s272, %s273
      %p285 = scmp.eq.s32.totalorder %s23, 1
      %p286 = por %p284, %p285
      %p288 = scmp.ne.s32.totalorder %s273, %s287
      %p289 = scmp.eq.s32.totalorder %s23, 0
      %p290 = por %p288, %p289
      %p291 = scmp.le.s32.totalorder 1, %s17
      %p292 = scmp.lt.s32.totalorder %s17, 3
      %p293 = pnand %p291, %p292
      %p294 = pneg %p293
      // Predicated region
      $region9: #{tpu_custom_call.1} parent=5 // pred_check
        _
      $region10: #{tpu_custom_call.1} parent=5 // pred_check_branch
        %296 = sbr.rel (%p293) target = $region12
      $region11: #{tpu_custom_call.1} parent=5 // pred_region
        %s297 = ssub.s32 %s17, 1
        // Predicated region
        $region13: #{tpu_custom_call.1} parent=11 // pred_check
          %p298 = pneg %p38
        $region14: #{tpu_custom_call.1} parent=11 // pred_check_branch
          %300 = sbr.rel (%p298) target = $region16
        $region15: #{tpu_custom_call.1} parent=11 // pred_region
          _
        $region16: #{tpu_custom_call.1} parent=11 // pred_fallthru
          _
        // Predicated region
        $region17: #{tpu_custom_call.1} parent=11 // pred_check
          %p301 = pneg %p59
        $region18: #{tpu_custom_call.1} parent=11 // pred_check_branch
          %303 = sbr.rel (%p301) target = $region20
        $region19: #{tpu_custom_call.1} parent=11 // pred_region
          _
        $region20: #{tpu_custom_call.1} parent=11 // pred_fallthru
          _
        // Predicated region
        $region21: #{tpu_custom_call.1} parent=11 // pred_check
          %p304 = pneg %p80
        $region22: #{tpu_custom_call.1} parent=11 // pred_check_branch
          %306 = sbr.rel (%p304) target = $region24
        $region23: #{tpu_custom_call.1} parent=11 // pred_region
          _
        $region24: #{tpu_custom_call.1} parent=11 // pred_fallthru
          _
      $region12: #{tpu_custom_call.1} parent=5 // pred_fallthru
        _
      %p307 = scmp.lt.s32.totalorder %s17, 2
      // Predicated region
      $region25: #{tpu_custom_call.1} parent=5 // pred_check
        %p308 = pneg %p307
      $region26: #{tpu_custom_call.1} parent=5 // pred_check_branch
        %310 = sbr.rel (%p308) target = $region28
      $region27: #{tpu_custom_call.1} parent=5 // pred_region
        // Predicated region
        $region29: #{tpu_custom_call.1} parent=27 // pred_check
          %p311 = pneg %p100
        $region30: #{tpu_custom_call.1} parent=27 // pred_check_branch
          %313 = sbr.rel (%p311) target = $region32
        $region31: #{tpu_custom_call.1} parent=27 // pred_region
          %p314 = scmp.lt.s32.totalorder %s17, 1
          %s315 = scalar_select %p314, %s17, 1
          %s316 = smul.addr %s315, 8
          %s317 = smul.addr %s316, 8
          %s318 = scalar_lea.vmem %s3, %s317
        $region32: #{tpu_custom_call.1} parent=27 // pred_fallthru
          _
        // Predicated region
        $region33: #{tpu_custom_call.1} parent=27 // pred_check
          %p319 = pneg %p126
        $region34: #{tpu_custom_call.1} parent=27 // pred_check_branch
          %321 = sbr.rel (%p319) target = $region36
        $region35: #{tpu_custom_call.1} parent=27 // pred_region
          %p322 = scmp.lt.s32.totalorder %s17, 1
          %s323 = scalar_select %p322, %s17, 1
          %s324 = smul.addr %s323, 16
          %s325 = smul.addr %s324, 4
          %s326 = scalar_lea.vmem %s4, %s325
        $region36: #{tpu_custom_call.1} parent=27 // pred_fallthru
          _
        // Predicated region
        $region37: #{tpu_custom_call.1} parent=27 // pred_check
          %p327 = pneg %p152
        $region38: #{tpu_custom_call.1} parent=27 // pred_check_branch
          %329 = sbr.rel (%p327) target = $region40
        $region39: #{tpu_custom_call.1} parent=27 // pred_region
          %p330 = scmp.lt.s32.totalorder %s17, 1
          %s331 = scalar_select %p330, %s17, 1
          %s332 = smul.addr %s331, 8
          %s333 = smul.addr %s332, 4
          %s334 = scalar_lea.vmem %s5, %s333
        $region40: #{tpu_custom_call.1} parent=27 // pred_fallthru
          _
        // Predicated region
        $region41: #{tpu_custom_call.1} parent=27 // pred_check
          %p335 = pneg %p178
        $region42: #{tpu_custom_call.1} parent=27 // pred_check_branch
          %337 = sbr.rel (%p335) target = $region44
        $region43: #{tpu_custom_call.1} parent=27 // pred_region
          %p338 = scmp.lt.s32.totalorder %s17, 1
          %s339 = scalar_select %p338, %s17, 1
          %s340 = smul.addr %s339, 8
          %s341 = smul.addr %s340, 4
          %s342 = scalar_lea.vmem %s6, %s341
        $region44: #{tpu_custom_call.1} parent=27 // pred_fallthru
          _
        // Predicated region
        $region45: #{tpu_custom_call.1} parent=27 // pred_check
          %p343 = pneg %p204
        $region46: #{tpu_custom_call.1} parent=27 // pred_check_branch
          %345 = sbr.rel (%p343) target = $region48
        $region47: #{tpu_custom_call.1} parent=27 // pred_region
          %p346 = scmp.lt.s32.totalorder %s17, 1
          %s347 = scalar_select %p346, %s17, 1
          %s348 = smul.addr %s347, 64
          %s349 = smul.addr %s348, 4
          %s350 = scalar_lea.vmem %s7, %s349
        $region48: #{tpu_custom_call.1} parent=27 // pred_fallthru
          _
        // Predicated region
        $region49: #{tpu_custom_call.1} parent=27 // pred_check
          %p351 = pneg %p230
        $region50: #{tpu_custom_call.1} parent=27 // pred_check_branch
          %353 = sbr.rel (%p351) target = $region52
        $region51: #{tpu_custom_call.1} parent=27 // pred_region
          %p354 = scmp.lt.s32.totalorder %s17, 1
          %s355 = scalar_select %p354, %s17, 1
          %s356 = smul.addr %s355, 4
          %s357 = smul.addr %s356, 4
          %s358 = scalar_lea.vmem %s8, %s357
        $region52: #{tpu_custom_call.1} parent=27 // pred_fallthru
          _
        // Predicated region
        $region53: #{tpu_custom_call.1} parent=27 // pred_check
          %p359 = pneg %p256
        $region54: #{tpu_custom_call.1} parent=27 // pred_check_branch
          %361 = sbr.rel (%p359) target = $region56
        $region55: #{tpu_custom_call.1} parent=27 // pred_region
          %p362 = scmp.lt.s32.totalorder %s17, 1
          %s363 = scalar_select %p362, %s17, 1
          %s364 = smul.addr %s363, 8
          %s365 = smul.addr %s364, 4
          %s366 = scalar_lea.vmem %s9, %s365
        $region56: #{tpu_custom_call.1} parent=27 // pred_fallthru
          _
      $region28: #{tpu_custom_call.1} parent=5 // pred_fallthru
        _
      %p367 = scmp.le.s32.totalorder 1, %s17
      %p368 = scmp.lt.s32.totalorder %s17, 3
      %p369 = pnand %p367, %p368
      %p370 = pneg %p369
      // Predicated region
      $region57: #{tpu_custom_call.1} parent=5 // pred_check
        _
      $region58: #{tpu_custom_call.1} parent=5 // pred_check_branch
        %372 = sbr.rel (%p369) target = $region60
      $region59: #{tpu_custom_call.1} parent=5 // pred_region
        %s373 = ssub.s32 %s17, 1
        %p374 = pneg %p38
        %p375 = pneg %p35
        %p376 = pneg %p59
        %p377 = pneg %p56
        %p378 = pneg %p80
        %p379 = pneg %p77
        %p380 = scmp.lt.s32.totalorder %s22, 1
        %s381 = scalar_select %p380, %s22, 1
        %s382 = smul.addr %s381, 8
        %s383 = smul.addr %s382, 8
        %s384 = scalar_lea.vmem %s3, %s383
        %p385 = pneg %p106
        %p386 = pneg %p103
        %p387 = scmp.lt.s32.totalorder %s22, 1
        %s388 = scalar_select %p387, %s22, 1
        %s389 = smul.addr %s388, 16
        %s390 = smul.addr %s389, 4
        %s391 = scalar_lea.vmem %s4, %s390
        %p392 = pneg %p132
        %p393 = pneg %p129
        %p394 = scmp.lt.s32.totalorder %s22, 1
        %s395 = scalar_select %p394, %s22, 1
        %s396 = smul.addr %s395, 8
        %s397 = smul.addr %s396, 4
        %s398 = scalar_lea.vmem %s5, %s397
        %p399 = pneg %p158
        %p400 = pneg %p155
        %p401 = scmp.lt.s32.totalorder %s22, 1
        %s402 = scalar_select %p401, %s22, 1
        %s403 = smul.addr %s402, 8
        %s404 = smul.addr %s403, 4
        %s405 = scalar_lea.vmem %s6, %s404
        %p406 = pneg %p184
        %p407 = pneg %p181
        %p408 = scmp.lt.s32.totalorder %s22, 1
        %s409 = scalar_select %p408, %s22, 1
        %s410 = smul.addr %s409, 64
        %s411 = smul.addr %s410, 4
        %s412 = scalar_lea.vmem %s7, %s411
        %p413 = pneg %p210
        %p414 = pneg %p207
        %p415 = scmp.lt.s32.totalorder %s22, 1
        %s416 = scalar_select %p415, %s22, 1
        %s417 = smul.addr %s416, 4
        %s418 = smul.addr %s417, 4
        %s419 = scalar_lea.vmem %s8, %s418
        %p420 = pneg %p236
        %p421 = pneg %p233
        %p422 = scmp.lt.s32.totalorder %s22, 1
        %s423 = scalar_select %p422, %s22, 1
        %s424 = smul.addr %s423, 8
        %s425 = smul.addr %s424, 4
        %s426 = scalar_lea.vmem %s9, %s425
        %p427 = pneg %p262
        %p428 = pneg %p259
        %p429 = pneg %p283
        %p430 = pneg %p280
        %p431 = scmp.lt.s32.totalorder %s22, 1
        %s432 = scalar_select %p431, %s22, 1
        %s433 = smul.addr %s432, 8
        %s434 = smul.addr %s433, 8
        %s435 = scalar_lea.vmem %s3, %s434
        %p436 = scmp.lt.s32.totalorder %s22, 1
        %s437 = scalar_select %p436, %s22, 1
        %s438 = smul.addr %s437, 16
        %s439 = smul.addr %s438, 4
        %s440 = scalar_lea.vmem %s4, %s439
        %p441 = scmp.lt.s32.totalorder %s22, 1
        %s442 = scalar_select %p441, %s22, 1
        %s443 = smul.addr %s442, 8
        %s444 = smul.addr %s443, 4
        %s445 = scalar_lea.vmem %s5, %s444
        %p446 = scmp.lt.s32.totalorder %s22, 1
        %s447 = scalar_select %p446, %s22, 1
        %s448 = smul.addr %s447, 8
        %s449 = smul.addr %s448, 4
        %s450 = scalar_lea.vmem %s6, %s449
        %p451 = scmp.lt.s32.totalorder %s22, 1
        %s452 = scalar_select %p451, %s22, 1
        %s453 = smul.addr %s452, 64
        %s454 = smul.addr %s453, 4
        %s455 = scalar_lea.vmem %s7, %s454
        %p456 = scmp.lt.s32.totalorder %s22, 1
        %s457 = scalar_select %p456, %s22, 1
        %s458 = smul.addr %s457, 4
        %s459 = smul.addr %s458, 4
        %s460 = scalar_lea.vmem %s8, %s459
        %p461 = scmp.lt.s32.totalorder %s22, 1
        %s462 = scalar_select %p461, %s22, 1
        %s463 = smul.addr %s462, 8
        %s464 = smul.addr %s463, 4
        %s465 = scalar_lea.vmem %s9, %s464
        %p467 = scmp.eq.s32.totalorder %s22, 0
        // Predicated region
        $region61: #{tpu_custom_call.1} parent=59 // pred_check
          %p468 = pneg %p467
        $region62: #{tpu_custom_call.1} parent=59 // pred_check_branch
          %470 = sbr.rel (%p468) target = $region64
        $region63: #{tpu_custom_call.1} parent=59 // pred_region
          %v471 = vld [vmem:[%s0] sm:$0xff]
          %v472 = vld [vmem:[%s0 + $0x8] sm:$0xff]
          %v473 = vld [vmem:[%s0 + $0x10] sm:$0xff]
          %v474 = vld [vmem:[%s0 + $0x18] sm:$0xff]
          %vm475 = vcmask 261120
          %476 = vst.msk [vmem:[#allocation3] sm:$0xff] %vm475, %v471
          %477 = vst.msk [vmem:[#allocation3 + $0x8] sm:$0xff] %vm475, %v472
          %478 = vst.msk [vmem:[#allocation3 + $0x10] sm:$0xff] %vm475, %v473
          %479 = vst.msk [vmem:[#allocation3 + $0x18] sm:$0xff] %vm475, %v474
        $region64: #{tpu_custom_call.1} parent=59 // pred_fallthru
          _
        %v480 = vld [vmem:[#allocation3] sm:$0xff]
        %v481 = vld [vmem:[#allocation3 + $0x8] sm:$0xff]
        %v482 = vld [vmem:[#allocation3 + $0x10] sm:$0xff]
        %v483 = vld [vmem:[#allocation3 + $0x18] sm:$0xff]
        %v484 = vld [vmem:[%s435] ss:$0 sm:$0xff]
        %s485 = scalar_lea.vmem %s435, 1
        %v486 = vld [vmem:[%s485] ss:$8 sm:$0xf]
        %s487 = scalar_lea.vmem %s435, 2
        %v488 = vld [vmem:[%s487] ss:$8 sm:$0x3]
        %s489 = scalar_lea.vmem %s435, 3
        %v490 = vld [vmem:[%s489] ss:$8 sm:$0x3]
        %v491 = vld [vmem:[%s435 + $0x4] ss:$0 sm:$0xff]
        %v492 = vld [vmem:[%s435 + $0x5] ss:$0 sm:$0xff]
        %v493 = vld [vmem:[%s435 + $0x6] ss:$0 sm:$0xff]
        %v494 = vld [vmem:[%s435 + $0x7] ss:$0 sm:$0xff]
        %v495 = vld [vmem:[%s435 + $0x20] ss:$0 sm:$0xff]
        %v496 = vmul.f32 %v480, %v480
        %v497 = vmul.f32 %v481, %v481
        %v498 = vmul.f32 %v482, %v482
        %v499 = vmul.f32 %v483, %v483
        %vm500 = vcmask 261120
        %v501 = vsel %vm500, %v496, 0.0
        %502 = vadd.xlane.f32.xlu0 %v501
        %v503 = vpop.xlane.xlu0 %502
        %v504 = vsel %vm500, %v497, 0.0
        %505 = vadd.xlane.f32.xlu0 %v504
        %v506 = vpop.xlane.xlu0 %505
        %v507 = vsel %vm500, %v498, 0.0
        %508 = vadd.xlane.f32.xlu0 %v507
        %v509 = vpop.xlane.xlu0 %508
        %v510 = vsel %vm500, %v499, 0.0
        %511 = vadd.xlane.f32.xlu0 %v510
        %v512 = vpop.xlane.xlu0 %511
        %v513 = vrcp.pop 32.0
        %v514 = vmul.f32 %v503, %v513
        %v515 = vmul.f32 %v506, %v513
        %v516 = vmul.f32 %v509, %v513
        %v517 = vmul.f32 %v512, %v513
        %v518 = vadd.f32 %v514, 1e-06
        %v519 = vadd.f32 %v515, 1e-06
        %v520 = vadd.f32 %v516, 1e-06
        %v521 = vadd.f32 %v517, 1e-06
        %v522 = vrsqrt.pop %v518
        %v523 = vrsqrt.pop %v519
        %v524 = vrsqrt.pop %v520
        %v525 = vrsqrt.pop %v521
        %v526 = vmul.f32 %v480, %v522
        %v527 = vmul.f32 %v481, %v523
        %v528 = vmul.f32 %v482, %v524
        %v529 = vmul.f32 %v483, %v525
        %v530 = vmul.f32 %v526, %v484
        %v531 = vmul.f32 %v527, %v484
        %v532 = vmul.f32 %v528, %v484
        %v533 = vmul.f32 %v529, %v484
        %v534 = vpack.c.bf16 %v531, %v530
        %v535 = vpack.c.bf16 %v533, %v532
        %v536 = vld [vmem:[%s440] sm:$0xff]
        %v537 = vld [vmem:[%s440 + $0x8] sm:$0xff]
        %v538 = vld [vmem:[%s440 + $0x10] sm:$0xff]
        %v539 = vld [vmem:[%s440 + $0x18] sm:$0xff]
        %v540 = vld [vmem:[%s440 + $0x20] sm:$0xff]
        %v541 = vld [vmem:[%s440 + $0x28] sm:$0xff]
        %v542 = vld [vmem:[%s440 + $0x30] sm:$0xff]
        %v543 = vld [vmem:[%s440 + $0x38] sm:$0xff]
        %v545 = vlaneseq
        %v546 = vshrl.u32 %v545, 7
        %v547 = vsub.s32 0, %v546
        %v548 = vrot.slane %v486, %v547
        %v549 = vlaneseq
        %v550 = vshrl.u32 %v549, 7
        %v551 = vsub.s32 1, %v550
        %v552 = vrot.slane %v486, %v551
        %v553 = vlaneseq
        %v554 = vshrl.u32 %v553, 7
        %v555 = vsub.s32 2, %v554
        %v556 = vrot.slane %v486, %v555
        %v557 = vlaneseq
        %v558 = vshrl.u32 %v557, 7
        %v559 = vsub.s32 3, %v558
        %v560 = vrot.slane %v486, %v559
        %v573 = vunpack.c.l.b16 %v536
        %v574 = vunpack.c.h.b16 %v536
        %v575 = vunpack.c.l.b16 %v537
        %v576 = vunpack.c.h.b16 %v537
        %v577 = vunpack.c.l.b16 %v538
        %v578 = vunpack.c.h.b16 %v538
        %v579 = vunpack.c.l.b16 %v539
        %v580 = vunpack.c.h.b16 %v539
        %v581 = vunpack.c.l.b16 %v540
        %v582 = vunpack.c.h.b16 %v540
        %v583 = vunpack.c.l.b16 %v541
        %v584 = vunpack.c.h.b16 %v541
        %v585 = vunpack.c.l.b16 %v542
        %v586 = vunpack.c.h.b16 %v542
        %v587 = vunpack.c.l.b16 %v543
        %v588 = vunpack.c.h.b16 %v543
        %v589 = vpack.c.b16 %v577, %v573
        %v590 = vpack.c.b16 %v578, %v574
        %v591 = vpack.c.b16 %v579, %v575
        %v592 = vpack.c.b16 %v580, %v576
        %v593 = vpack.c.b16 %v585, %v581
        %v594 = vpack.c.b16 %v586, %v582
        %v595 = vpack.c.b16 %v587, %v583
        %v596 = vpack.c.b16 %v588, %v584
        %v606 = vsel %vm500, %v534, 0
        %v609 = vsel %vm500, %v535, 0
        %611 = vmatprep.subr.bf16.mxu0 0
        %612 = vmatpush1.bf16.msra.mxu0 0
        %613 = vmatprep.subr.bf16.mxu0 0
        %614 = vmatpush1.bf16.msra.mxu0 0
        %615 = vmatprep.subr.bf16.mxu0 0
        %616 = vmatpush1.bf16.msra.mxu0 0
        %617 = vmatprep.subr.bf16.mxu0 0
        %618 = vmatpush1.bf16.msra.mxu0 0
        %619 = vmatprep.subr.bf16.mxu0 0
        %620 = vmatpush1.bf16.msra.mxu0 0
        %621 = vmatprep.subr.bf16.mxu0 0
        %622 = vmatpush1.bf16.msra.mxu0 0
        %623 = vmatprep.subr.bf16.mxu0 %v594
        %624 = vmatpush1.bf16.msra.mxu0 %v593
        %625 = vmatprep.subr.bf16.mxu0 %v590
        %626 = vmatpush1.bf16.msra.mxu0 %v589
        %627 = vmatprep.subr.bf16.mxu0 0
        %628 = vmatpush2.bf16.msra.mxu0 0
        %629 = vmatprep.subr.bf16.mxu0 0
        %630 = vmatpush2.bf16.msra.mxu0 0
        %631 = vmatprep.subr.bf16.mxu0 0
        %632 = vmatpush2.bf16.msra.mxu0 0
        %633 = vmatprep.subr.bf16.mxu0 0
        %634 = vmatpush2.bf16.msra.mxu0 0
        %635 = vmatprep.subr.bf16.mxu0 0
        %636 = vmatpush2.bf16.msra.mxu0 0
        %637 = vmatprep.subr.bf16.mxu0 0
        %638 = vmatpush2.bf16.msra.mxu0 0
        %639 = vmatprep.subr.bf16.mxu0 0
        %640 = vmatpush2.bf16.msra.mxu0 0
        %641 = vmatprep.subr.bf16.mxu0 0
        %642 = vmatpush2.bf16.msra.mxu0 0
        %643 = vmatprep.mubr.bf16.mxu0 0
        %644 = vmatmul.mubr.bf16.gmra.mxu0 %v606
        %v645 = vpop.f32.mrf.mxu0
        %v646 = vadd.f32 %v548, %v645
        %v647 = vpop.f32.mrf.mxu0
        %v648 = vadd.f32 %v552, %v647
        %v649 = vpop.f32.mrf.mxu0
        %v650 = vadd.f32 %v548, %v649
        %v651 = vpop.f32.mrf.mxu0
        %v652 = vadd.f32 %v552, %v651
        %653 = vmatprep.mubr.bf16.mxu0 0
        %654 = vmatmul.mubr.bf16.gmra.mxu0 %v609
        %v655 = vpop.f32.mrf.mxu0
        %v656 = vadd.f32 %v548, %v655
        %v657 = vpop.f32.mrf.mxu0
        %v658 = vadd.f32 %v552, %v657
        %v659 = vpop.f32.mrf.mxu0
        %v660 = vadd.f32 %v548, %v659
        %v661 = vpop.f32.mrf.mxu0
        %v662 = vadd.f32 %v552, %v661
        %663 = vdwg.mxu0
        %664 = vmatprep.subr.bf16.mxu0 0
        %665 = vmatpush1.bf16.msra.mxu0 0
        %666 = vmatprep.subr.bf16.mxu0 0
        %667 = vmatpush1.bf16.msra.mxu0 0
        %668 = vmatprep.subr.bf16.mxu0 0
        %669 = vmatpush1.bf16.msra.mxu0 0
        %670 = vmatprep.subr.bf16.mxu0 0
        %671 = vmatpush1.bf16.msra.mxu0 0
        %672 = vmatprep.subr.bf16.mxu0 0
        %673 = vmatpush1.bf16.msra.mxu0 0
        %674 = vmatprep.subr.bf16.mxu0 0
        %675 = vmatpush1.bf16.msra.mxu0 0
        %676 = vmatprep.subr.bf16.mxu0 %v596
        %677 = vmatpush1.bf16.msra.mxu0 %v595
        %678 = vmatprep.subr.bf16.mxu0 %v592
        %679 = vmatpush1.bf16.msra.mxu0 %v591
        %680 = vmatprep.subr.bf16.mxu0 0
        %681 = vmatpush2.bf16.msra.mxu0 0
        %682 = vmatprep.subr.bf16.mxu0 0
        %683 = vmatpush2.bf16.msra.mxu0 0
        %684 = vmatprep.subr.bf16.mxu0 0
        %685 = vmatpush2.bf16.msra.mxu0 0
        %686 = vmatprep.subr.bf16.mxu0 0
        %687 = vmatpush2.bf16.msra.mxu0 0
        %688 = vmatprep.subr.bf16.mxu0 0
        %689 = vmatpush2.bf16.msra.mxu0 0
        %690 = vmatprep.subr.bf16.mxu0 0
        %691 = vmatpush2.bf16.msra.mxu0 0
        %692 = vmatprep.subr.bf16.mxu0 0
        %693 = vmatpush2.bf16.msra.mxu0 0
        %694 = vmatprep.subr.bf16.mxu0 0
        %695 = vmatpush2.bf16.msra.mxu0 0
        %696 = vmatprep.mubr.bf16.mxu0 0
        %697 = vmatmul.mubr.bf16.gmra.mxu0 %v606
        %v698 = vpop.f32.mrf.mxu0
        %v699 = vadd.f32 %v556, %v698
        %v700 = vpop.f32.mrf.mxu0
        %v701 = vadd.f32 %v560, %v700
        %v702 = vpop.f32.mrf.mxu0
        %v703 = vadd.f32 %v556, %v702
        %v704 = vpop.f32.mrf.mxu0
        %v705 = vadd.f32 %v560, %v704
        %706 = vmatprep.mubr.bf16.mxu0 0
        %707 = vmatmul.mubr.bf16.gmra.mxu0 %v609
        %v708 = vpop.f32.mrf.mxu0
        %v709 = vadd.f32 %v556, %v708
        %v710 = vpop.f32.mrf.mxu0
        %v711 = vadd.f32 %v560, %v710
        %v712 = vpop.f32.mrf.mxu0
        %v713 = vadd.f32 %v556, %v712
        %v714 = vpop.f32.mrf.mxu0
        %v715 = vadd.f32 %v560, %v714
        %716 = vdwg.mxu0
        %v717 = vld [vmem:[%s445] sm:$0xff]
        %v718 = vld [vmem:[%s445 + $0x8] sm:$0xff]
        %v719 = vld [vmem:[%s445 + $0x10] sm:$0xff]
        %v720 = vld [vmem:[%s445 + $0x18] sm:$0xff]
        %v722 = vlaneseq
        %v723 = vshrl.u32 %v722, 7
        %v724 = vsub.s32 0, %v723
        %v725 = vrot.slane %v488, %v724
        %v726 = vlaneseq
        %v727 = vshrl.u32 %v726, 7
        %v728 = vsub.s32 1, %v727
        %v729 = vrot.slane %v488, %v728
        %v736 = vunpack.c.l.b16 %v717
        %v737 = vunpack.c.h.b16 %v717
        %v738 = vunpack.c.l.b16 %v718
        %v739 = vunpack.c.h.b16 %v718
        %v740 = vunpack.c.l.b16 %v719
        %v741 = vunpack.c.h.b16 %v719
        %v742 = vunpack.c.l.b16 %v720
        %v743 = vunpack.c.h.b16 %v720
        %v744 = vpack.c.b16 %v738, %v736
        %v745 = vpack.c.b16 %v739, %v737
        %v746 = vpack.c.b16 %v742, %v740
        %v747 = vpack.c.b16 %v743, %v741
        %752 = vmatprep.subr.bf16.mxu0 0
        %753 = vmatpush1.bf16.msra.mxu0 0
        %754 = vmatprep.subr.bf16.mxu0 0
        %755 = vmatpush1.bf16.msra.mxu0 0
        %756 = vmatprep.subr.bf16.mxu0 0
        %757 = vmatpush1.bf16.msra.mxu0 0
        %758 = vmatprep.subr.bf16.mxu0 0
        %759 = vmatpush1.bf16.msra.mxu0 0
        %760 = vmatprep.subr.bf16.mxu0 0
        %761 = vmatpush1.bf16.msra.mxu0 0
        %762 = vmatprep.subr.bf16.mxu0 0
        %763 = vmatpush1.bf16.msra.mxu0 0
        %764 = vmatprep.subr.bf16.mxu0 %v747
        %765 = vmatpush1.bf16.msra.mxu0 %v746
        %766 = vmatprep.subr.bf16.mxu0 %v745
        %767 = vmatpush1.bf16.msra.mxu0 %v744
        %768 = vmatprep.subr.bf16.mxu0 0
        %769 = vmatpush2.bf16.msra.mxu0 0
        %770 = vmatprep.subr.bf16.mxu0 0
        %771 = vmatpush2.bf16.msra.mxu0 0
        %772 = vmatprep.subr.bf16.mxu0 0
        %773 = vmatpush2.bf16.msra.mxu0 0
        %774 = vmatprep.subr.bf16.mxu0 0
        %775 = vmatpush2.bf16.msra.mxu0 0
        %776 = vmatprep.subr.bf16.mxu0 0
        %777 = vmatpush2.bf16.msra.mxu0 0
        %778 = vmatprep.subr.bf16.mxu0 0
        %779 = vmatpush2.bf16.msra.mxu0 0
        %780 = vmatprep.subr.bf16.mxu0 0
        %781 = vmatpush2.bf16.msra.mxu0 0
        %782 = vmatprep.subr.bf16.mxu0 0
        %783 = vmatpush2.bf16.msra.mxu0 0
        %784 = vmatprep.mubr.bf16.mxu0 0
        %785 = vmatmul.mubr.bf16.gmra.mxu0 %v606
        %v786 = vpop.f32.mrf.mxu0
        %v787 = vadd.f32 %v725, %v786
        %v788 = vpop.f32.mrf.mxu0
        %v789 = vadd.f32 %v729, %v788
        %v790 = vpop.f32.mrf.mxu0
        %v791 = vadd.f32 %v725, %v790
        %v792 = vpop.f32.mrf.mxu0
        %v793 = vadd.f32 %v729, %v792
        %794 = vmatprep.mubr.bf16.mxu0 0
        %795 = vmatmul.mubr.bf16.gmra.mxu0 %v609
        %v796 = vpop.f32.mrf.mxu0
        %v797 = vadd.f32 %v725, %v796
        %v798 = vpop.f32.mrf.mxu0
        %v799 = vadd.f32 %v729, %v798
        %v800 = vpop.f32.mrf.mxu0
        %v801 = vadd.f32 %v725, %v800
        %v802 = vpop.f32.mrf.mxu0
        %v803 = vadd.f32 %v729, %v802
        %804 = vdwg.mxu0
        %v805 = vld [vmem:[%s450] sm:$0xff]
        %v806 = vld [vmem:[%s450 + $0x8] sm:$0xff]
        %v807 = vld [vmem:[%s450 + $0x10] sm:$0xff]
        %v808 = vld [vmem:[%s450 + $0x18] sm:$0xff]
        %v810 = vlaneseq
        %v811 = vshrl.u32 %v810, 7
        %v812 = vsub.s32 0, %v811
        %v813 = vrot.slane %v490, %v812
        %v814 = vlaneseq
        %v815 = vshrl.u32 %v814, 7
        %v816 = vsub.s32 1, %v815
        %v817 = vrot.slane %v490, %v816
        %v824 = vunpack.c.l.b16 %v805
        %v825 = vunpack.c.h.b16 %v805
        %v826 = vunpack.c.l.b16 %v806
        %v827 = vunpack.c.h.b16 %v806
        %v828 = vunpack.c.l.b16 %v807
        %v829 = vunpack.c.h.b16 %v807
        %v830 = vunpack.c.l.b16 %v808
        %v831 = vunpack.c.h.b16 %v808
        %v832 = vpack.c.b16 %v826, %v824
        %v833 = vpack.c.b16 %v827, %v825
        %v834 = vpack.c.b16 %v830, %v828
        %v835 = vpack.c.b16 %v831, %v829
        %840 = vmatprep.subr.bf16.mxu0 0
        %841 = vmatpush1.bf16.msra.mxu0 0
        %842 = vmatprep.subr.bf16.mxu0 0
        %843 = vmatpush1.bf16.msra.mxu0 0
        %844 = vmatprep.subr.bf16.mxu0 0
        %845 = vmatpush1.bf16.msra.mxu0 0
        %846 = vmatprep.subr.bf16.mxu0 0
        %847 = vmatpush1.bf16.msra.mxu0 0
        %848 = vmatprep.subr.bf16.mxu0 0
        %849 = vmatpush1.bf16.msra.mxu0 0
        %850 = vmatprep.subr.bf16.mxu0 0
        %851 = vmatpush1.bf16.msra.mxu0 0
        %852 = vmatprep.subr.bf16.mxu0 %v835
        %853 = vmatpush1.bf16.msra.mxu0 %v834
        %854 = vmatprep.subr.bf16.mxu0 %v833
        %855 = vmatpush1.bf16.msra.mxu0 %v832
        %856 = vmatprep.subr.bf16.mxu0 0
        %857 = vmatpush2.bf16.msra.mxu0 0
        %858 = vmatprep.subr.bf16.mxu0 0
        %859 = vmatpush2.bf16.msra.mxu0 0
        %860 = vmatprep.subr.bf16.mxu0 0
        %861 = vmatpush2.bf16.msra.mxu0 0
        %862 = vmatprep.subr.bf16.mxu0 0
        %863 = vmatpush2.bf16.msra.mxu0 0
        %864 = vmatprep.subr.bf16.mxu0 0
        %865 = vmatpush2.bf16.msra.mxu0 0
        %866 = vmatprep.subr.bf16.mxu0 0
        %867 = vmatpush2.bf16.msra.mxu0 0
        %868 = vmatprep.subr.bf16.mxu0 0
        %869 = vmatpush2.bf16.msra.mxu0 0
        %870 = vmatprep.subr.bf16.mxu0 0
        %871 = vmatpush2.bf16.msra.mxu0 0
        %872 = vmatprep.mubr.bf16.mxu0 0
        %873 = vmatmul.mubr.bf16.gmra.mxu0 %v606
        %v874 = vpop.f32.mrf.mxu0
        %v875 = vadd.f32 %v813, %v874
        %v876 = vpop.f32.mrf.mxu0
        %v877 = vadd.f32 %v817, %v876
        %v878 = vpop.f32.mrf.mxu0
        %v879 = vadd.f32 %v813, %v878
        %v880 = vpop.f32.mrf.mxu0
        %v881 = vadd.f32 %v817, %v880
        %882 = vmatprep.mubr.bf16.mxu0 0
        %883 = vmatmul.mubr.bf16.gmra.mxu0 %v609
        %v884 = vpop.f32.mrf.mxu0
        %v885 = vadd.f32 %v813, %v884
        %v886 = vpop.f32.mrf.mxu0
        %v887 = vadd.f32 %v817, %v886
        %v888 = vpop.f32.mrf.mxu0
        %v889 = vadd.f32 %v813, %v888
        %v890 = vpop.f32.mrf.mxu0
        %v891 = vadd.f32 %v817, %v890
        %892 = vdwg.mxu0
        %v893 = vpack.c.bf16 %v650, %v646
        %v894 = vpack.c.bf16 %v652, %v648
        %v895 = vpack.c.bf16 %v703, %v699
        %v896 = vpack.c.bf16 %v705, %v701
        %v897 = vpack.c.bf16 %v660, %v656
        %v898 = vpack.c.bf16 %v662, %v658
        %v899 = vpack.c.bf16 %v713, %v709
        %v900 = vpack.c.bf16 %v715, %v711
        %v901 = vpack.c.bf16 %v791, %v787
        %v902 = vpack.c.bf16 %v793, %v789
        %v903 = vpack.c.bf16 %v801, %v797
        %v904 = vpack.c.bf16 %v803, %v799
        %v905 = vpack.c.bf16 %v879, %v875
        %v906 = vpack.c.bf16 %v881, %v877
        %v907 = vpack.c.bf16 %v889, %v885
        %v908 = vpack.c.bf16 %v891, %v887
        %v909 = vlaneseq
        %v910 = vshrl.u32 %v909, 7
        %v911 = vadd.s32 %v910, 8
        %v912 = vlaneseq
        %v913 = vand.u32 %v912, 127
        %vm914 = vcmp.lt.s32.totalorder %v910, %v913
        %vm915 = vcmp.lt.s32.totalorder %v911, %v913
        %v916 = vsel %vm914, -2.3819763e+38, 0.0
        %v917 = vsel %vm915, -2.3819763e+38, 0.0
        %v918 = vld [vmem:[%s1] sm:$0x1]
        %v919 = vmul.f32 %v918, -2.3819763e+38
        %v920 = vld [vmem:[%s2] sm:$0xff]
        %v921 = vld [vmem:[%s2 + $0x8] sm:$0xff]
        %v922 = vsub.f32 1.0, %v920
        %v923 = vsub.f32 1.0, %v921
        %v924 = vmul.f32 %v922, -2.3819763e+38
        %v925 = vmul.f32 %v923, -2.3819763e+38
        %927 = vset.pattern.permute.xlu0 0
        %928 = vperm.xlu0 %927, %v924
        %v929 = vpop.permute.xlu0 %928
        %932 = vset.pattern.permute.xlu0 0
        %933 = vperm.xlu0 %932, %v925
        %v934 = vpop.permute.xlu0 %933
        %v937 = vlaneseq
        %v938 = vshrl.u32 %v937, 7
        %v939 = vsub.s32 0, %v938
        %v940 = vrot.slane %v919, %v939
        %v942 = vmin.f32 %v929, %v940
        %v943 = vmin.f32 %v934, %v940
        %v944 = vmin.f32 %v942, %v916
        %v945 = vmin.f32 %v943, %v917
        %946 = vmatprep.subr.bf16.mxu0 0
        %947 = vmatpush1.bf16.xpose.msra.mxu0 0
        %948 = vmatprep.subr.bf16.mxu0 0
        %949 = vmatpush1.bf16.xpose.msra.mxu0 0
        %950 = vmatprep.subr.bf16.mxu0 0
        %951 = vmatpush1.bf16.xpose.msra.mxu0 0
        %952 = vmatprep.subr.bf16.mxu0 0
        %953 = vmatpush1.bf16.xpose.msra.mxu0 0
        %954 = vmatprep.subr.bf16.mxu0 0
        %955 = vmatpush1.bf16.xpose.msra.mxu0 0
        %956 = vmatprep.subr.bf16.mxu0 0
        %957 = vmatpush1.bf16.xpose.msra.mxu0 0
        %958 = vmatprep.subr.bf16.mxu0 0
        %959 = vmatpush1.bf16.xpose.msra.mxu0 0
        %960 = vmatprep.subr.bf16.mxu0 0
        %961 = vmatpush1.bf16.xpose.msra.mxu0 %v901
        %962 = vmatprep.subr.bf16.mxu0 0
        %963 = vmatpush2.bf16.xpose.msra.mxu0 0
        %964 = vmatprep.subr.bf16.mxu0 0
        %965 = vmatpush2.bf16.xpose.msra.mxu0 0
        %966 = vmatprep.subr.bf16.mxu0 0
        %967 = vmatpush2.bf16.xpose.msra.mxu0 0
        %968 = vmatprep.subr.bf16.mxu0 0
        %969 = vmatpush2.bf16.xpose.msra.mxu0 0
        %970 = vmatprep.subr.bf16.mxu0 0
        %971 = vmatpush2.bf16.xpose.msra.mxu0 0
        %972 = vmatprep.subr.bf16.mxu0 0
        %973 = vmatpush2.bf16.xpose.msra.mxu0 0
        %974 = vmatprep.subr.bf16.mxu0 0
        %975 = vmatpush2.bf16.xpose.msra.mxu0 0
        %976 = vmatprep.subr.bf16.mxu0 0
        %977 = vmatpush2.bf16.xpose.msra.mxu0 0
        %978 = vmatprep.mubr.bf16.mxu0 0
        %979 = vmatmul.mubr.bf16.gmra.mxu0 %v893
        %v980 = vpop.f32.mrf.mxu0
        %v981 = vadd.f32 %v944, %v980
        %v982 = vpop.f32.mrf.mxu0
        %v983 = vpop.f32.mrf.mxu0
        %v984 = vadd.f32 %v945, %v983
        %v985 = vpop.f32.mrf.mxu0
        %986 = vdwg.mxu0
        %vm987 = vcmask 130048
        %v988 = vsel %vm987, %v981, -inf
        %989 = vmax.xlane.f32.xlu0 %v988
        %v990 = vpop.xlane.xlu0 %989
        %v991 = vsel %vm987, %v984, -inf
        %992 = vmax.xlane.f32.xlu0 %v991
        %v993 = vpop.xlane.xlu0 %992
        %v994 = vsub.f32 %v981, %v990
        %v995 = vsub.f32 %v984, %v993
        %v996 = vmul.f32 %v994, 1.442695
        %v997 = vpow.pop %v996
        %v998 = vmul.f32 %v995, 1.442695
        %v999 = vpow.pop %v998
        %v1000 = vsel %vm987, %v997, 0.0
        %1001 = vadd.xlane.f32.xlu0 %v1000
        %v1002 = vpop.xlane.xlu0 %1001
        %v1003 = vsel %vm987, %v999, 0.0
        %1004 = vadd.xlane.f32.xlu0 %v1003
        %v1005 = vpop.xlane.xlu0 %1004
        %v1006 = vrcp.pop %v1002
        %v1007 = vrcp.pop %v1005
        %v1008 = vmul.f32 %v997, %v1006
        %v1009 = vmul.f32 %v999, %v1007
        %v1010 = vpack.c.bf16 %v1009, %v1008
        %v1012 = vsel %vm987, %v1010, 0
        %1014 = vmatprep.subr.bf16.mxu0 0
        %1015 = vmatpush1.bf16.msra.mxu0 0
        %1016 = vmatprep.subr.bf16.mxu0 0
        %1017 = vmatpush1.bf16.msra.mxu0 0
        %1018 = vmatprep.subr.bf16.mxu0 0
        %1019 = vmatpush1.bf16.msra.mxu0 0
        %1020 = vmatprep.subr.bf16.mxu0 0
        %1021 = vmatpush1.bf16.msra.mxu0 0
        %1022 = vmatprep.subr.bf16.mxu0 0
        %1023 = vmatpush1.bf16.msra.mxu0 0
        %1024 = vmatprep.subr.bf16.mxu0 0
        %1025 = vmatpush1.bf16.msra.mxu0 0
        %1026 = vmatprep.subr.bf16.mxu0 0
        %1027 = vmatpush1.bf16.msra.mxu0 0
        %1028 = vmatprep.subr.bf16.mxu0 0
        %1029 = vmatpush1.bf16.msra.mxu0 %v905
        %1030 = vmatprep.subr.bf16.mxu0 0
        %1031 = vmatpush2.bf16.msra.mxu0 0
        %1032 = vmatprep.subr.bf16.mxu0 0
        %1033 = vmatpush2.bf16.msra.mxu0 0
        %1034 = vmatprep.subr.bf16.mxu0 0
        %1035 = vmatpush2.bf16.msra.mxu0 0
        %1036 = vmatprep.subr.bf16.mxu0 0
        %1037 = vmatpush2.bf16.msra.mxu0 0
        %1038 = vmatprep.subr.bf16.mxu0 0
        %1039 = vmatpush2.bf16.msra.mxu0 0
        %1040 = vmatprep.subr.bf16.mxu0 0
        %1041 = vmatpush2.bf16.msra.mxu0 0
        %1042 = vmatprep.subr.bf16.mxu0 0
        %1043 = vmatpush2.bf16.msra.mxu0 0
        %1044 = vmatprep.subr.bf16.mxu0 0
        %1045 = vmatpush2.bf16.msra.mxu0 0
        %1046 = vmatprep.mubr.bf16.mxu0 0
        %1047 = vmatmul.mubr.bf16.gmra.mxu0 %v1012
        %v1048 = vpop.f32.mrf.mxu0
        %v1049 = vadd.f32 0.0, %v1048
        %v1050 = vpop.f32.mrf.mxu0
        %v1051 = vpop.f32.mrf.mxu0
        %v1052 = vadd.f32 0.0, %v1051
        %v1053 = vpop.f32.mrf.mxu0
        %1054 = vdwg.mxu0
        %v1055 = vpack.c.bf16 %v1052, %v1049
        %v1057 = vunpack.c.l.b16 %v1055
        %v1058 = vunpack.c.h.b16 %v1055
        %v1059 = vpack.c.b16 %v1057, %v1057
        %v1060 = vpack.c.b16 %v1058, %v1058
        %1063 = vst [vmem:[#allocation2] sm:$0xf] %v1059
        %1064 = vst [vmem:[#allocation2 + $0x10] sm:$0xf] %v1060
        %1065 = vmatprep.subr.bf16.mxu0 0
        %1066 = vmatpush1.bf16.xpose.msra.mxu0 0
        %1067 = vmatprep.subr.bf16.mxu0 0
        %1068 = vmatpush1.bf16.xpose.msra.mxu0 0
        %1069 = vmatprep.subr.bf16.mxu0 0
        %1070 = vmatpush1.bf16.xpose.msra.mxu0 0
        %1071 = vmatprep.subr.bf16.mxu0 0
        %1072 = vmatpush1.bf16.xpose.msra.mxu0 0
        %1073 = vmatprep.subr.bf16.mxu0 0
        %1074 = vmatpush1.bf16.xpose.msra.mxu0 0
        %1075 = vmatprep.subr.bf16.mxu0 0
        %1076 = vmatpush1.bf16.xpose.msra.mxu0 0
        %1077 = vmatprep.subr.bf16.mxu0 0
        %1078 = vmatpush1.bf16.xpose.msra.mxu0 0
        %1079 = vmatprep.subr.bf16.mxu0 0
        %1080 = vmatpush1.bf16.xpose.msra.mxu0 %v901
        %1081 = vmatprep.subr.bf16.mxu0 0
        %1082 = vmatpush2.bf16.xpose.msra.mxu0 0
        %1083 = vmatprep.subr.bf16.mxu0 0
        %1084 = vmatpush2.bf16.xpose.msra.mxu0 0
        %1085 = vmatprep.subr.bf16.mxu0 0
        %1086 = vmatpush2.bf16.xpose.msra.mxu0 0
        %1087 = vmatprep.subr.bf16.mxu0 0
        %1088 = vmatpush2.bf16.xpose.msra.mxu0 0
        %1089 = vmatprep.subr.bf16.mxu0 0
        %1090 = vmatpush2.bf16.xpose.msra.mxu0 0
        %1091 = vmatprep.subr.bf16.mxu0 0
        %1092 = vmatpush2.bf16.xpose.msra.mxu0 0
        %1093 = vmatprep.subr.bf16.mxu0 0
        %1094 = vmatpush2.bf16.xpose.msra.mxu0 0
        %1095 = vmatprep.subr.bf16.mxu0 0
        %1096 = vmatpush2.bf16.xpose.msra.mxu0 0
        %1097 = vmatprep.mubr.bf16.mxu0 0
        %1098 = vmatmul.mubr.bf16.gmra.mxu0 %v894
        %v1099 = vpop.f32.mrf.mxu0
        %v1100 = vadd.f32 %v944, %v1099
        %v1101 = vpop.f32.mrf.mxu0
        %v1102 = vpop.f32.mrf.mxu0
        %v1103 = vadd.f32 %v945, %v1102
        %v1104 = vpop.f32.mrf.mxu0
        %1105 = vdwg.mxu0
        %v1106 = vsel %vm987, %v1100, -inf
        %1107 = vmax.xlane.f32.xlu0 %v1106
        %v1108 = vpop.xlane.xlu0 %1107
        %v1109 = vsel %vm987, %v1103, -inf
        %1110 = vmax.xlane.f32.xlu0 %v1109
        %v1111 = vpop.xlane.xlu0 %1110
        %v1112 = vsub.f32 %v1100, %v1108
        %v1113 = vsub.f32 %v1103, %v1111
        %v1114 = vmul.f32 %v1112, 1.442695
        %v1115 = vpow.pop %v1114
        %v1116 = vmul.f32 %v1113, 1.442695
        %v1117 = vpow.pop %v1116
        %v1118 = vsel %vm987, %v1115, 0.0
        %1119 = vadd.xlane.f32.xlu0 %v1118
        %v1120 = vpop.xlane.xlu0 %1119
        %v1121 = vsel %vm987, %v1117, 0.0
        %1122 = vadd.xlane.f32.xlu0 %v1121
        %v1123 = vpop.xlane.xlu0 %1122
        %v1124 = vrcp.pop %v1120
        %v1125 = vrcp.pop %v1123
        %v1126 = vmul.f32 %v1115, %v1124
        %v1127 = vmul.f32 %v1117, %v1125
        %v1128 = vpack.c.bf16 %v1127, %v1126
        %v1130 = vsel %vm987, %v1128, 0
        %1132 = vmatprep.subr.bf16.mxu0 0
        %1133 = vmatpush1.bf16.msra.mxu0 0
        %1134 = vmatprep.subr.bf16.mxu0 0
        %1135 = vmatpush1.bf16.msra.mxu0 0
        %1136 = vmatprep.subr.bf16.mxu0 0
        %1137 = vmatpush1.bf16.msra.mxu0 0
        %1138 = vmatprep.subr.bf16.mxu0 0
        %1139 = vmatpush1.bf16.msra.mxu0 0
        %1140 = vmatprep.subr.bf16.mxu0 0
        %1141 = vmatpush1.bf16.msra.mxu0 0
        %1142 = vmatprep.subr.bf16.mxu0 0
        %1143 = vmatpush1.bf16.msra.mxu0 0
        %1144 = vmatprep.subr.bf16.mxu0 0
        %1145 = vmatpush1.bf16.msra.mxu0 0
        %1146 = vmatprep.subr.bf16.mxu0 0
        %1147 = vmatpush1.bf16.msra.mxu0 %v905
        %1148 = vmatprep.subr.bf16.mxu0 0
        %1149 = vmatpush2.bf16.msra.mxu0 0
        %1150 = vmatprep.subr.bf16.mxu0 0
        %1151 = vmatpush2.bf16.msra.mxu0 0
        %1152 = vmatprep.subr.bf16.mxu0 0
        %1153 = vmatpush2.bf16.msra.mxu0 0
        %1154 = vmatprep.subr.bf16.mxu0 0
        %1155 = vmatpush2.bf16.msra.mxu0 0
        %1156 = vmatprep.subr.bf16.mxu0 0
        %1157 = vmatpush2.bf16.msra.mxu0 0
        %1158 = vmatprep.subr.bf16.mxu0 0
        %1159 = vmatpush2.bf16.msra.mxu0 0
        %1160 = vmatprep.subr.bf16.mxu0 0
        %1161 = vmatpush2.bf16.msra.mxu0 0
        %1162 = vmatprep.subr.bf16.mxu0 0
        %1163 = vmatpush2.bf16.msra.mxu0 0
        %1164 = vmatprep.mubr.bf16.mxu0 0
        %1165 = vmatmul.mubr.bf16.gmra.mxu0 %v1130
        %v1166 = vpop.f32.mrf.mxu0
        %v1167 = vadd.f32 0.0, %v1166
        %v1168 = vpop.f32.mrf.mxu0
        %v1169 = vpop.f32.mrf.mxu0
        %v1170 = vadd.f32 0.0, %v1169
        %v1171 = vpop.f32.mrf.mxu0
        %1172 = vdwg.mxu0
        %v1173 = vpack.c.bf16 %v1170, %v1167
        %v1175 = vunpack.c.l.b16 %v1173
        %v1176 = vunpack.c.h.b16 %v1173
        %v1177 = vpack.c.b16 %v1175, %v1175
        %v1178 = vpack.c.b16 %v1176, %v1176
        %1181 = vst [vmem:[#allocation2 + $0x4] sm:$0xf] %v1177
        %1182 = vst [vmem:[#allocation2 + $0x14] sm:$0xf] %v1178
        %1183 = vmatprep.subr.bf16.mxu0 0
        %1184 = vmatpush1.bf16.xpose.msra.mxu0 0
        %1185 = vmatprep.subr.bf16.mxu0 0
        %1186 = vmatpush1.bf16.xpose.msra.mxu0 0
        %1187 = vmatprep.subr.bf16.mxu0 0
        %1188 = vmatpush1.bf16.xpose.msra.mxu0 0
        %1189 = vmatprep.subr.bf16.mxu0 0
        %1190 = vmatpush1.bf16.xpose.msra.mxu0 0
        %1191 = vmatprep.subr.bf16.mxu0 0
        %1192 = vmatpush1.bf16.xpose.msra.mxu0 0
        %1193 = vmatprep.subr.bf16.mxu0 0
        %1194 = vmatpush1.bf16.xpose.msra.mxu0 0
        %1195 = vmatprep.subr.bf16.mxu0 0
        %1196 = vmatpush1.bf16.xpose.msra.mxu0 0
        %1197 = vmatprep.subr.bf16.mxu0 0
        %1198 = vmatpush1.bf16.xpose.msra.mxu0 %v902
        %1199 = vmatprep.subr.bf16.mxu0 0
        %1200 = vmatpush2.bf16.xpose.msra.mxu0 0
        %1201 = vmatprep.subr.bf16.mxu0 0
        %1202 = vmatpush2.bf16.xpose.msra.mxu0 0
        %1203 = vmatprep.subr.bf16.mxu0 0
        %1204 = vmatpush2.bf16.xpose.msra.mxu0 0
        %1205 = vmatprep.subr.bf16.mxu0 0
        %1206 = vmatpush2.bf16.xpose.msra.mxu0 0
        %1207 = vmatprep.subr.bf16.mxu0 0
        %1208 = vmatpush2.bf16.xpose.msra.mxu0 0
        %1209 = vmatprep.subr.bf16.mxu0 0
        %1210 = vmatpush2.bf16.xpose.msra.mxu0 0
        %1211 = vmatprep.subr.bf16.mxu0 0
        %1212 = vmatpush2.bf16.xpose.msra.mxu0 0
        %1213 = vmatprep.subr.bf16.mxu0 0
        %1214 = vmatpush2.bf16.xpose.msra.mxu0 0
        %1215 = vmatprep.mubr.bf16.mxu0 0
        %1216 = vmatmul.mubr.bf16.gmra.mxu0 %v895
        %v1217 = vpop.f32.mrf.mxu0
        %v1218 = vadd.f32 %v944, %v1217
        %v1219 = vpop.f32.mrf.mxu0
        %v1220 = vpop.f32.mrf.mxu0
        %v1221 = vadd.f32 %v945, %v1220
        %v1222 = vpop.f32.mrf.mxu0
        %1223 = vdwg.mxu0
        %v1224 = vsel %vm987, %v1218, -inf
        %1225 = vmax.xlane.f32.xlu0 %v1224
        %v1226 = vpop.xlane.xlu0 %1225
        %v1227 = vsel %vm987, %v1221, -inf
        %1228 = vmax.xlane.f32.xlu0 %v1227
        %v1229 = vpop.xlane.xlu0 %1228
        %v1230 = vsub.f32 %v1218, %v1226
        %v1231 = vsub.f32 %v1221, %v1229
        %v1232 = vmul.f32 %v1230, 1.442695
        %v1233 = vpow.pop %v1232
        %v1234 = vmul.f32 %v1231, 1.442695
        %v1235 = vpow.pop %v1234
        %v1236 = vsel %vm987, %v1233, 0.0
        %1237 = vadd.xlane.f32.xlu0 %v1236
        %v1238 = vpop.xlane.xlu0 %1237
        %v1239 = vsel %vm987, %v1235, 0.0
        %1240 = vadd.xlane.f32.xlu0 %v1239
        %v1241 = vpop.xlane.xlu0 %1240
        %v1242 = vrcp.pop %v1238
        %v1243 = vrcp.pop %v1241
        %v1244 = vmul.f32 %v1233, %v1242
        %v1245 = vmul.f32 %v1235, %v1243
        %v1246 = vpack.c.bf16 %v1245, %v1244
        %v1248 = vsel %vm987, %v1246, 0
        %1250 = vmatprep.subr.bf16.mxu0 0
        %1251 = vmatpush1.bf16.msra.mxu0 0
        %1252 = vmatprep.subr.bf16.mxu0 0
        %1253 = vmatpush1.bf16.msra.mxu0 0
        %1254 = vmatprep.subr.bf16.mxu0 0
        %1255 = vmatpush1.bf16.msra.mxu0 0
        %1256 = vmatprep.subr.bf16.mxu0 0
        %1257 = vmatpush1.bf16.msra.mxu0 0
        %1258 = vmatprep.subr.bf16.mxu0 0
        %1259 = vmatpush1.bf16.msra.mxu0 0
        %1260 = vmatprep.subr.bf16.mxu0 0
        %1261 = vmatpush1.bf16.msra.mxu0 0
        %1262 = vmatprep.subr.bf16.mxu0 0
        %1263 = vmatpush1.bf16.msra.mxu0 0
        %1264 = vmatprep.subr.bf16.mxu0 0
        %1265 = vmatpush1.bf16.msra.mxu0 %v906
        %1266 = vmatprep.subr.bf16.mxu0 0
        %1267 = vmatpush2.bf16.msra.mxu0 0
        %1268 = vmatprep.subr.bf16.mxu0 0
        %1269 = vmatpush2.bf16.msra.mxu0 0
        %1270 = vmatprep.subr.bf16.mxu0 0
        %1271 = vmatpush2.bf16.msra.mxu0 0
        %1272 = vmatprep.subr.bf16.mxu0 0
        %1273 = vmatpush2.bf16.msra.mxu0 0
        %1274 = vmatprep.subr.bf16.mxu0 0
        %1275 = vmatpush2.bf16.msra.mxu0 0
        %1276 = vmatprep.subr.bf16.mxu0 0
        %1277 = vmatpush2.bf16.msra.mxu0 0
        %1278 = vmatprep.subr.bf16.mxu0 0
        %1279 = vmatpush2.bf16.msra.mxu0 0
        %1280 = vmatprep.subr.bf16.mxu0 0
        %1281 = vmatpush2.bf16.msra.mxu0 0
        %1282 = vmatprep.mubr.bf16.mxu0 0
        %1283 = vmatmul.mubr.bf16.gmra.mxu0 %v1248
        %v1284 = vpop.f32.mrf.mxu0
        %v1285 = vadd.f32 0.0, %v1284
        %v1286 = vpop.f32.mrf.mxu0
        %v1287 = vpop.f32.mrf.mxu0
        %v1288 = vadd.f32 0.0, %v1287
        %v1289 = vpop.f32.mrf.mxu0
        %1290 = vdwg.mxu0
        %v1291 = vpack.c.bf16 %v1288, %v1285
        %v1293 = vunpack.c.l.b16 %v1291
        %v1294 = vunpack.c.h.b16 %v1291
        %v1295 = vpack.c.b16 %v1293, %v1293
        %v1296 = vpack.c.b16 %v1294, %v1294
        %1299 = vst [vmem:[#allocation2 + $0x8] sm:$0xf] %v1295
        %1300 = vst [vmem:[#allocation2 + $0x18] sm:$0xf] %v1296
        %1301 = vmatprep.subr.bf16.mxu0 0
        %1302 = vmatpush1.bf16.xpose.msra.mxu0 0
        %1303 = vmatprep.subr.bf16.mxu0 0
        %1304 = vmatpush1.bf16.xpose.msra.mxu0 0
        %1305 = vmatprep.subr.bf16.mxu0 0
        %1306 = vmatpush1.bf16.xpose.msra.mxu0 0
        %1307 = vmatprep.subr.bf16.mxu0 0
        %1308 = vmatpush1.bf16.xpose.msra.mxu0 0
        %1309 = vmatprep.subr.bf16.mxu0 0
        %1310 = vmatpush1.bf16.xpose.msra.mxu0 0
        %1311 = vmatprep.subr.bf16.mxu0 0
        %1312 = vmatpush1.bf16.xpose.msra.mxu0 0
        %1313 = vmatprep.subr.bf16.mxu0 0
        %1314 = vmatpush1.bf16.xpose.msra.mxu0 0
        %1315 = vmatprep.subr.bf16.mxu0 0
        %1316 = vmatpush1.bf16.xpose.msra.mxu0 %v902
        %1317 = vmatprep.subr.bf16.mxu0 0
        %1318 = vmatpush2.bf16.xpose.msra.mxu0 0
        %1319 = vmatprep.subr.bf16.mxu0 0
        %1320 = vmatpush2.bf16.xpose.msra.mxu0 0
        %1321 = vmatprep.subr.bf16.mxu0 0
        %1322 = vmatpush2.bf16.xpose.msra.mxu0 0
        %1323 = vmatprep.subr.bf16.mxu0 0
        %1324 = vmatpush2.bf16.xpose.msra.mxu0 0
        %1325 = vmatprep.subr.bf16.mxu0 0
        %1326 = vmatpush2.bf16.xpose.msra.mxu0 0
        %1327 = vmatprep.subr.bf16.mxu0 0
        %1328 = vmatpush2.bf16.xpose.msra.mxu0 0
        %1329 = vmatprep.subr.bf16.mxu0 0
        %1330 = vmatpush2.bf16.xpose.msra.mxu0 0
        %1331 = vmatprep.subr.bf16.mxu0 0
        %1332 = vmatpush2.bf16.xpose.msra.mxu0 0
        %1333 = vmatprep.mubr.bf16.mxu0 0
        %1334 = vmatmul.mubr.bf16.gmra.mxu0 %v896
        %v1335 = vpop.f32.mrf.mxu0
        %v1336 = vadd.f32 %v944, %v1335
        %v1337 = vpop.f32.mrf.mxu0
        %v1338 = vpop.f32.mrf.mxu0
        %v1339 = vadd.f32 %v945, %v1338
        %v1340 = vpop.f32.mrf.mxu0
        %1341 = vdwg.mxu0
        %v1342 = vsel %vm987, %v1336, -inf
        %1343 = vmax.xlane.f32.xlu0 %v1342
        %v1344 = vpop.xlane.xlu0 %1343
        %v1345 = vsel %vm987, %v1339, -inf
        %1346 = vmax.xlane.f32.xlu0 %v1345
        %v1347 = vpop.xlane.xlu0 %1346
        %v1348 = vsub.f32 %v1336, %v1344
        %v1349 = vsub.f32 %v1339, %v1347
        %v1350 = vmul.f32 %v1348, 1.442695
        %v1351 = vpow.pop %v1350
        %v1352 = vmul.f32 %v1349, 1.442695
        %v1353 = vpow.pop %v1352
        %v1354 = vsel %vm987, %v1351, 0.0
        %1355 = vadd.xlane.f32.xlu0 %v1354
        %v1356 = vpop.xlane.xlu0 %1355
        %v1357 = vsel %vm987, %v1353, 0.0
        %1358 = vadd.xlane.f32.xlu0 %v1357
        %v1359 = vpop.xlane.xlu0 %1358
        %v1360 = vrcp.pop %v1356
        %v1361 = vrcp.pop %v1359
        %v1362 = vmul.f32 %v1351, %v1360
        %v1363 = vmul.f32 %v1353, %v1361
        %v1364 = vpack.c.bf16 %v1363, %v1362
        %v1366 = vsel %vm987, %v1364, 0
        %1368 = vmatprep.subr.bf16.mxu0 0
        %1369 = vmatpush1.bf16.msra.mxu0 0
        %1370 = vmatprep.subr.bf16.mxu0 0
        %1371 = vmatpush1.bf16.msra.mxu0 0
        %1372 = vmatprep.subr.bf16.mxu0 0
        %1373 = vmatpush1.bf16.msra.mxu0 0
        %1374 = vmatprep.subr.bf16.mxu0 0
        %1375 = vmatpush1.bf16.msra.mxu0 0
        %1376 = vmatprep.subr.bf16.mxu0 0
        %1377 = vmatpush1.bf16.msra.mxu0 0
        %1378 = vmatprep.subr.bf16.mxu0 0
        %1379 = vmatpush1.bf16.msra.mxu0 0
        %1380 = vmatprep.subr.bf16.mxu0 0
        %1381 = vmatpush1.bf16.msra.mxu0 0
        %1382 = vmatprep.subr.bf16.mxu0 0
        %1383 = vmatpush1.bf16.msra.mxu0 %v906
        %1384 = vmatprep.subr.bf16.mxu0 0
        %1385 = vmatpush2.bf16.msra.mxu0 0
        %1386 = vmatprep.subr.bf16.mxu0 0
        %1387 = vmatpush2.bf16.msra.mxu0 0
        %1388 = vmatprep.subr.bf16.mxu0 0
        %1389 = vmatpush2.bf16.msra.mxu0 0
        %1390 = vmatprep.subr.bf16.mxu0 0
        %1391 = vmatpush2.bf16.msra.mxu0 0
        %1392 = vmatprep.subr.bf16.mxu0 0
        %1393 = vmatpush2.bf16.msra.mxu0 0
        %1394 = vmatprep.subr.bf16.mxu0 0
        %1395 = vmatpush2.bf16.msra.mxu0 0
        %1396 = vmatprep.subr.bf16.mxu0 0
        %1397 = vmatpush2.bf16.msra.mxu0 0
        %1398 = vmatprep.subr.bf16.mxu0 0
        %1399 = vmatpush2.bf16.msra.mxu0 0
        %1400 = vmatprep.mubr.bf16.mxu0 0
        %1401 = vmatmul.mubr.bf16.gmra.mxu0 %v1366
        %v1402 = vpop.f32.mrf.mxu0
        %v1403 = vadd.f32 0.0, %v1402
        %v1404 = vpop.f32.mrf.mxu0
        %v1405 = vpop.f32.mrf.mxu0
        %v1406 = vadd.f32 0.0, %v1405
        %v1407 = vpop.f32.mrf.mxu0
        %1408 = vdwg.mxu0
        %v1409 = vpack.c.bf16 %v1406, %v1403
        %v1411 = vunpack.c.l.b16 %v1409
        %v1412 = vunpack.c.h.b16 %v1409
        %v1413 = vpack.c.b16 %v1411, %v1411
        %v1414 = vpack.c.b16 %v1412, %v1412
        %1417 = vst [vmem:[#allocation2 + $0xc] sm:$0xf] %v1413
        %1418 = vst [vmem:[#allocation2 + $0x1c] sm:$0xf] %v1414
        %s1419 = scalar_lea.vmem %s1, 1
        %v1420 = vld [vmem:[%s1419] sm:$0x1]
        %v1421 = vmul.f32 %v1420, -2.3819763e+38
        %v1422 = vld [vmem:[%s2 + $0x10] sm:$0xff]
        %v1423 = vld [vmem:[%s2 + $0x18] sm:$0xff]
        %v1424 = vsub.f32 1.0, %v1422
        %v1425 = vsub.f32 1.0, %v1423
        %v1426 = vmul.f32 %v1424, -2.3819763e+38
        %v1427 = vmul.f32 %v1425, -2.3819763e+38
        %1429 = vset.pattern.permute.xlu0 0
        %1430 = vperm.xlu0 %1429, %v1426
        %v1431 = vpop.permute.xlu0 %1430
        %1434 = vset.pattern.permute.xlu0 0
        %1435 = vperm.xlu0 %1434, %v1427
        %v1436 = vpop.permute.xlu0 %1435
        %v1439 = vlaneseq
        %v1440 = vshrl.u32 %v1439, 7
        %v1441 = vsub.s32 0, %v1440
        %v1442 = vrot.slane %v1421, %v1441
        %v1444 = vmin.f32 %v1431, %v1442
        %v1445 = vmin.f32 %v1436, %v1442
        %v1446 = vmin.f32 %v1444, %v916
        %v1447 = vmin.f32 %v1445, %v917
        %1448 = vmatprep.subr.bf16.mxu0 0
        %1449 = vmatpush1.bf16.xpose.msra.mxu0 0
        %1450 = vmatprep.subr.bf16.mxu0 0
        %1451 = vmatpush1.bf16.xpose.msra.mxu0 0
        %1452 = vmatprep.subr.bf16.mxu0 0
        %1453 = vmatpush1.bf16.xpose.msra.mxu0 0
        %1454 = vmatprep.subr.bf16.mxu0 0
        %1455 = vmatpush1.bf16.xpose.msra.mxu0 0
        %1456 = vmatprep.subr.bf16.mxu0 0
        %1457 = vmatpush1.bf16.xpose.msra.mxu0 0
        %1458 = vmatprep.subr.bf16.mxu0 0
        %1459 = vmatpush1.bf16.xpose.msra.mxu0 0
        %1460 = vmatprep.subr.bf16.mxu0 0
        %1461 = vmatpush1.bf16.xpose.msra.mxu0 0
        %1462 = vmatprep.subr.bf16.mxu0 0
        %1463 = vmatpush1.bf16.xpose.msra.mxu0 %v903
        %1464 = vmatprep.subr.bf16.mxu0 0
        %1465 = vmatpush2.bf16.xpose.msra.mxu0 0
        %1466 = vmatprep.subr.bf16.mxu0 0
        %1467 = vmatpush2.bf16.xpose.msra.mxu0 0
        %1468 = vmatprep.subr.bf16.mxu0 0
        %1469 = vmatpush2.bf16.xpose.msra.mxu0 0
        %1470 = vmatprep.subr.bf16.mxu0 0
        %1471 = vmatpush2.bf16.xpose.msra.mxu0 0
        %1472 = vmatprep.subr.bf16.mxu0 0
        %1473 = vmatpush2.bf16.xpose.msra.mxu0 0
        %1474 = vmatprep.subr.bf16.mxu0 0
        %1475 = vmatpush2.bf16.xpose.msra.mxu0 0
        %1476 = vmatprep.subr.bf16.mxu0 0
        %1477 = vmatpush2.bf16.xpose.msra.mxu0 0
        %1478 = vmatprep.subr.bf16.mxu0 0
        %1479 = vmatpush2.bf16.xpose.msra.mxu0 0
        %1480 = vmatprep.mubr.bf16.mxu0 0
        %1481 = vmatmul.mubr.bf16.gmra.mxu0 %v897
        %v1482 = vpop.f32.mrf.mxu0
        %v1483 = vadd.f32 %v1446, %v1482
        %v1484 = vpop.f32.mrf.mxu0
        %v1485 = vpop.f32.mrf.mxu0
        %v1486 = vadd.f32 %v1447, %v1485
        %v1487 = vpop.f32.mrf.mxu0
        %1488 = vdwg.mxu0
        %v1489 = vsel %vm987, %v1483, -inf
        %1490 = vmax.xlane.f32.xlu0 %v1489
        %v1491 = vpop.xlane.xlu0 %1490
        %v1492 = vsel %vm987, %v1486, -inf
        %1493 = vmax.xlane.f32.xlu0 %v1492
        %v1494 = vpop.xlane.xlu0 %1493
        %v1495 = vsub.f32 %v1483, %v1491
        %v1496 = vsub.f32 %v1486, %v1494
        %v1497 = vmul.f32 %v1495, 1.442695
        %v1498 = vpow.pop %v1497
        %v1499 = vmul.f32 %v1496, 1.442695
        %v1500 = vpow.pop %v1499
        %v1501 = vsel %vm987, %v1498, 0.0
        %1502 = vadd.xlane.f32.xlu0 %v1501
        %v1503 = vpop.xlane.xlu0 %1502
        %v1504 = vsel %vm987, %v1500, 0.0
        %1505 = vadd.xlane.f32.xlu0 %v1504
        %v1506 = vpop.xlane.xlu0 %1505
        %v1507 = vrcp.pop %v1503
        %v1508 = vrcp.pop %v1506
        %v1509 = vmul.f32 %v1498, %v1507
        %v1510 = vmul.f32 %v1500, %v1508
        %v1511 = vpack.c.bf16 %v1510, %v1509
        %v1513 = vsel %vm987, %v1511, 0
        %1515 = vmatprep.subr.bf16.mxu0 0
        %1516 = vmatpush1.bf16.msra.mxu0 0
        %1517 = vmatprep.subr.bf16.mxu0 0
        %1518 = vmatpush1.bf16.msra.mxu0 0
        %1519 = vmatprep.subr.bf16.mxu0 0
        %1520 = vmatpush1.bf16.msra.mxu0 0
        %1521 = vmatprep.subr.bf16.mxu0 0
        %1522 = vmatpush1.bf16.msra.mxu0 0
        %1523 = vmatprep.subr.bf16.mxu0 0
        %1524 = vmatpush1.bf16.msra.mxu0 0
        %1525 = vmatprep.subr.bf16.mxu0 0
        %1526 = vmatpush1.bf16.msra.mxu0 0
        %1527 = vmatprep.subr.bf16.mxu0 0
        %1528 = vmatpush1.bf16.msra.mxu0 0
        %1529 = vmatprep.subr.bf16.mxu0 0
        %1530 = vmatpush1.bf16.msra.mxu0 %v907
        %1531 = vmatprep.subr.bf16.mxu0 0
        %1532 = vmatpush2.bf16.msra.mxu0 0
        %1533 = vmatprep.subr.bf16.mxu0 0
        %1534 = vmatpush2.bf16.msra.mxu0 0
        %1535 = vmatprep.subr.bf16.mxu0 0
        %1536 = vmatpush2.bf16.msra.mxu0 0
        %1537 = vmatprep.subr.bf16.mxu0 0
        %1538 = vmatpush2.bf16.msra.mxu0 0
        %1539 = vmatprep.subr.bf16.mxu0 0
        %1540 = vmatpush2.bf16.msra.mxu0 0
        %1541 = vmatprep.subr.bf16.mxu0 0
        %1542 = vmatpush2.bf16.msra.mxu0 0
        %1543 = vmatprep.subr.bf16.mxu0 0
        %1544 = vmatpush2.bf16.msra.mxu0 0
        %1545 = vmatprep.subr.bf16.mxu0 0
        %1546 = vmatpush2.bf16.msra.mxu0 0
        %1547 = vmatprep.mubr.bf16.mxu0 0
        %1548 = vmatmul.mubr.bf16.gmra.mxu0 %v1513
        %v1549 = vpop.f32.mrf.mxu0
        %v1550 = vadd.f32 0.0, %v1549
        %v1551 = vpop.f32.mrf.mxu0
        %v1552 = vpop.f32.mrf.mxu0
        %v1553 = vadd.f32 0.0, %v1552
        %v1554 = vpop.f32.mrf.mxu0
        %1555 = vdwg.mxu0
        %v1556 = vpack.c.bf16 %v1553, %v1550
        %v1558 = vunpack.c.l.b16 %v1556
        %v1559 = vunpack.c.h.b16 %v1556
        %v1560 = vpack.c.b16 %v1558, %v1558
        %v1561 = vpack.c.b16 %v1559, %v1559
        %1564 = vst [vmem:[#allocation2 + $0x20] sm:$0xf] %v1560
        %1565 = vst [vmem:[#allocation2 + $0x30] sm:$0xf] %v1561
        %1566 = vmatprep.subr.bf16.mxu0 0
        %1567 = vmatpush1.bf16.xpose.msra.mxu0 0
        %1568 = vmatprep.subr.bf16.mxu0 0
        %1569 = vmatpush1.bf16.xpose.msra.mxu0 0
        %1570 = vmatprep.subr.bf16.mxu0 0
        %1571 = vmatpush1.bf16.xpose.msra.mxu0 0
        %1572 = vmatprep.subr.bf16.mxu0 0
        %1573 = vmatpush1.bf16.xpose.msra.mxu0 0
        %1574 = vmatprep.subr.bf16.mxu0 0
        %1575 = vmatpush1.bf16.xpose.msra.mxu0 0
        %1576 = vmatprep.subr.bf16.mxu0 0
        %1577 = vmatpush1.bf16.xpose.msra.mxu0 0
        %1578 = vmatprep.subr.bf16.mxu0 0
        %1579 = vmatpush1.bf16.xpose.msra.mxu0 0
        %1580 = vmatprep.subr.bf16.mxu0 0
        %1581 = vmatpush1.bf16.xpose.msra.mxu0 %v903
        %1582 = vmatprep.subr.bf16.mxu0 0
        %1583 = vmatpush2.bf16.xpose.msra.mxu0 0
        %1584 = vmatprep.subr.bf16.mxu0 0
        %1585 = vmatpush2.bf16.xpose.msra.mxu0 0
        %1586 = vmatprep.subr.bf16.mxu0 0
        %1587 = vmatpush2.bf16.xpose.msra.mxu0 0
        %1588 = vmatprep.subr.bf16.mxu0 0
        %1589 = vmatpush2.bf16.xpose.msra.mxu0 0
        %1590 = vmatprep.subr.bf16.mxu0 0
        %1591 = vmatpush2.bf16.xpose.msra.mxu0 0
        %1592 = vmatprep.subr.bf16.mxu0 0
        %1593 = vmatpush2.bf16.xpose.msra.mxu0 0
        %1594 = vmatprep.subr.bf16.mxu0 0
        %1595 = vmatpush2.bf16.xpose.msra.mxu0 0
        %1596 = vmatprep.subr.bf16.mxu0 0
        %1597 = vmatpush2.bf16.xpose.msra.mxu0 0
        %1598 = vmatprep.mubr.bf16.mxu0 0
        %1599 = vmatmul.mubr.bf16.gmra.mxu0 %v898
        %v1600 = vpop.f32.mrf.mxu0
        %v1601 = vadd.f32 %v1446, %v1600
        %v1602 = vpop.f32.mrf.mxu0
        %v1603 = vpop.f32.mrf.mxu0
        %v1604 = vadd.f32 %v1447, %v1603
        %v1605 = vpop.f32.mrf.mxu0
        %1606 = vdwg.mxu0
        %v1607 = vsel %vm987, %v1601, -inf
        %1608 = vmax.xlane.f32.xlu0 %v1607
        %v1609 = vpop.xlane.xlu0 %1608
        %v1610 = vsel %vm987, %v1604, -inf
        %1611 = vmax.xlane.f32.xlu0 %v1610
        %v1612 = vpop.xlane.xlu0 %1611
        %v1613 = vsub.f32 %v1601, %v1609
        %v1614 = vsub.f32 %v1604, %v1612
        %v1615 = vmul.f32 %v1613, 1.442695
        %v1616 = vpow.pop %v1615
        %v1617 = vmul.f32 %v1614, 1.442695
        %v1618 = vpow.pop %v1617
        %v1619 = vsel %vm987, %v1616, 0.0
        %1620 = vadd.xlane.f32.xlu0 %v1619
        %v1621 = vpop.xlane.xlu0 %1620
        %v1622 = vsel %vm987, %v1618, 0.0
        %1623 = vadd.xlane.f32.xlu0 %v1622
        %v1624 = vpop.xlane.xlu0 %1623
        %v1625 = vrcp.pop %v1621
        %v1626 = vrcp.pop %v1624
        %v1627 = vmul.f32 %v1616, %v1625
        %v1628 = vmul.f32 %v1618, %v1626
        %v1629 = vpack.c.bf16 %v1628, %v1627
        %v1631 = vsel %vm987, %v1629, 0
        %1633 = vmatprep.subr.bf16.mxu0 0
        %1634 = vmatpush1.bf16.msra.mxu0 0
        %1635 = vmatprep.subr.bf16.mxu0 0
        %1636 = vmatpush1.bf16.msra.mxu0 0
        %1637 = vmatprep.subr.bf16.mxu0 0
        %1638 = vmatpush1.bf16.msra.mxu0 0
        %1639 = vmatprep.subr.bf16.mxu0 0
        %1640 = vmatpush1.bf16.msra.mxu0 0
        %1641 = vmatprep.subr.bf16.mxu0 0
        %1642 = vmatpush1.bf16.msra.mxu0 0
        %1643 = vmatprep.subr.bf16.mxu0 0
        %1644 = vmatpush1.bf16.msra.mxu0 0
        %1645 = vmatprep.subr.bf16.mxu0 0
        %1646 = vmatpush1.bf16.msra.mxu0 0
        %1647 = vmatprep.subr.bf16.mxu0 0
        %1648 = vmatpush1.bf16.msra.mxu0 %v907
        %1649 = vmatprep.subr.bf16.mxu0 0
        %1650 = vmatpush2.bf16.msra.mxu0 0
        %1651 = vmatprep.subr.bf16.mxu0 0
        %1652 = vmatpush2.bf16.msra.mxu0 0
        %1653 = vmatprep.subr.bf16.mxu0 0
        %1654 = vmatpush2.bf16.msra.mxu0 0
        %1655 = vmatprep.subr.bf16.mxu0 0
        %1656 = vmatpush2.bf16.msra.mxu0 0
        %1657 = vmatprep.subr.bf16.mxu0 0
        %1658 = vmatpush2.bf16.msra.mxu0 0
        %1659 = vmatprep.subr.bf16.mxu0 0
        %1660 = vmatpush2.bf16.msra.mxu0 0
        %1661 = vmatprep.subr.bf16.mxu0 0
        %1662 = vmatpush2.bf16.msra.mxu0 0
        %1663 = vmatprep.subr.bf16.mxu0 0
        %1664 = vmatpush2.bf16.msra.mxu0 0
        %1665 = vmatprep.mubr.bf16.mxu0 0
        %1666 = vmatmul.mubr.bf16.gmra.mxu0 %v1631
        %v1667 = vpop.f32.mrf.mxu0
        %v1668 = vadd.f32 0.0, %v1667
        %v1669 = vpop.f32.mrf.mxu0
        %v1670 = vpop.f32.mrf.mxu0
        %v1671 = vadd.f32 0.0, %v1670
        %v1672 = vpop.f32.mrf.mxu0
        %1673 = vdwg.mxu0
        %v1674 = vpack.c.bf16 %v1671, %v1668
        %v1676 = vunpack.c.l.b16 %v1674
        %v1677 = vunpack.c.h.b16 %v1674
        %v1678 = vpack.c.b16 %v1676, %v1676
        %v1679 = vpack.c.b16 %v1677, %v1677
        %1682 = vst [vmem:[#allocation2 + $0x24] sm:$0xf] %v1678
        %1683 = vst [vmem:[#allocation2 + $0x34] sm:$0xf] %v1679
        %1684 = vmatprep.subr.bf16.mxu0 0
        %1685 = vmatpush1.bf16.xpose.msra.mxu0 0
        %1686 = vmatprep.subr.bf16.mxu0 0
        %1687 = vmatpush1.bf16.xpose.msra.mxu0 0
        %1688 = vmatprep.subr.bf16.mxu0 0
        %1689 = vmatpush1.bf16.xpose.msra.mxu0 0
        %1690 = vmatprep.subr.bf16.mxu0 0
        %1691 = vmatpush1.bf16.xpose.msra.mxu0 0
        %1692 = vmatprep.subr.bf16.mxu0 0
        %1693 = vmatpush1.bf16.xpose.msra.mxu0 0
        %1694 = vmatprep.subr.bf16.mxu0 0
        %1695 = vmatpush1.bf16.xpose.msra.mxu0 0
        %1696 = vmatprep.subr.bf16.mxu0 0
        %1697 = vmatpush1.bf16.xpose.msra.mxu0 0
        %1698 = vmatprep.subr.bf16.mxu0 0
        %1699 = vmatpush1.bf16.xpose.msra.mxu0 %v904
        %1700 = vmatprep.subr.bf16.mxu0 0
        %1701 = vmatpush2.bf16.xpose.msra.mxu0 0
        %1702 = vmatprep.subr.bf16.mxu0 0
        %1703 = vmatpush2.bf16.xpose.msra.mxu0 0
        %1704 = vmatprep.subr.bf16.mxu0 0
        %1705 = vmatpush2.bf16.xpose.msra.mxu0 0
        %1706 = vmatprep.subr.bf16.mxu0 0
        %1707 = vmatpush2.bf16.xpose.msra.mxu0 0
        %1708 = vmatprep.subr.bf16.mxu0 0
        %1709 = vmatpush2.bf16.xpose.msra.mxu0 0
        %1710 = vmatprep.subr.bf16.mxu0 0
        %1711 = vmatpush2.bf16.xpose.msra.mxu0 0
        %1712 = vmatprep.subr.bf16.mxu0 0
        %1713 = vmatpush2.bf16.xpose.msra.mxu0 0
        %1714 = vmatprep.subr.bf16.mxu0 0
        %1715 = vmatpush2.bf16.xpose.msra.mxu0 0
        %1716 = vmatprep.mubr.bf16.mxu0 0
        %1717 = vmatmul.mubr.bf16.gmra.mxu0 %v899
        %v1718 = vpop.f32.mrf.mxu0
        %v1719 = vadd.f32 %v1446, %v1718
        %v1720 = vpop.f32.mrf.mxu0
        %v1721 = vpop.f32.mrf.mxu0
        %v1722 = vadd.f32 %v1447, %v1721
        %v1723 = vpop.f32.mrf.mxu0
        %1724 = vdwg.mxu0
        %v1725 = vsel %vm987, %v1719, -inf
        %1726 = vmax.xlane.f32.xlu0 %v1725
        %v1727 = vpop.xlane.xlu0 %1726
        %v1728 = vsel %vm987, %v1722, -inf
        %1729 = vmax.xlane.f32.xlu0 %v1728
        %v1730 = vpop.xlane.xlu0 %1729
        %v1731 = vsub.f32 %v1719, %v1727
        %v1732 = vsub.f32 %v1722, %v1730
        %v1733 = vmul.f32 %v1731, 1.442695
        %v1734 = vpow.pop %v1733
        %v1735 = vmul.f32 %v1732, 1.442695
        %v1736 = vpow.pop %v1735
        %v1737 = vsel %vm987, %v1734, 0.0
        %1738 = vadd.xlane.f32.xlu0 %v1737
        %v1739 = vpop.xlane.xlu0 %1738
        %v1740 = vsel %vm987, %v1736, 0.0
        %1741 = vadd.xlane.f32.xlu0 %v1740
        %v1742 = vpop.xlane.xlu0 %1741
        %v1743 = vrcp.pop %v1739
        %v1744 = vrcp.pop %v1742
        %v1745 = vmul.f32 %v1734, %v1743
        %v1746 = vmul.f32 %v1736, %v1744
        %v1747 = vpack.c.bf16 %v1746, %v1745
        %v1749 = vsel %vm987, %v1747, 0
        %1751 = vmatprep.subr.bf16.mxu0 0
        %1752 = vmatpush1.bf16.msra.mxu0 0
        %1753 = vmatprep.subr.bf16.mxu0 0
        %1754 = vmatpush1.bf16.msra.mxu0 0
        %1755 = vmatprep.subr.bf16.mxu0 0
        %1756 = vmatpush1.bf16.msra.mxu0 0
        %1757 = vmatprep.subr.bf16.mxu0 0
        %1758 = vmatpush1.bf16.msra.mxu0 0
        %1759 = vmatprep.subr.bf16.mxu0 0
        %1760 = vmatpush1.bf16.msra.mxu0 0
        %1761 = vmatprep.subr.bf16.mxu0 0
        %1762 = vmatpush1.bf16.msra.mxu0 0
        %1763 = vmatprep.subr.bf16.mxu0 0
        %1764 = vmatpush1.bf16.msra.mxu0 0
        %1765 = vmatprep.subr.bf16.mxu0 0
        %1766 = vmatpush1.bf16.msra.mxu0 %v908
        %1767 = vmatprep.subr.bf16.mxu0 0
        %1768 = vmatpush2.bf16.msra.mxu0 0
        %1769 = vmatprep.subr.bf16.mxu0 0
        %1770 = vmatpush2.bf16.msra.mxu0 0
        %1771 = vmatprep.subr.bf16.mxu0 0
        %1772 = vmatpush2.bf16.msra.mxu0 0
        %1773 = vmatprep.subr.bf16.mxu0 0
        %1774 = vmatpush2.bf16.msra.mxu0 0
        %1775 = vmatprep.subr.bf16.mxu0 0
        %1776 = vmatpush2.bf16.msra.mxu0 0
        %1777 = vmatprep.subr.bf16.mxu0 0
        %1778 = vmatpush2.bf16.msra.mxu0 0
        %1779 = vmatprep.subr.bf16.mxu0 0
        %1780 = vmatpush2.bf16.msra.mxu0 0
        %1781 = vmatprep.subr.bf16.mxu0 0
        %1782 = vmatpush2.bf16.msra.mxu0 0
        %1783 = vmatprep.mubr.bf16.mxu0 0
        %1784 = vmatmul.mubr.bf16.gmra.mxu0 %v1749
        %v1785 = vpop.f32.mrf.mxu0
        %v1786 = vadd.f32 0.0, %v1785
        %v1787 = vpop.f32.mrf.mxu0
        %v1788 = vpop.f32.mrf.mxu0
        %v1789 = vadd.f32 0.0, %v1788
        %v1790 = vpop.f32.mrf.mxu0
        %1791 = vdwg.mxu0
        %v1792 = vpack.c.bf16 %v1789, %v1786
        %v1794 = vunpack.c.l.b16 %v1792
        %v1795 = vunpack.c.h.b16 %v1792
        %v1796 = vpack.c.b16 %v1794, %v1794
        %v1797 = vpack.c.b16 %v1795, %v1795
        %1800 = vst [vmem:[#allocation2 + $0x28] sm:$0xf] %v1796
        %1801 = vst [vmem:[#allocation2 + $0x38] sm:$0xf] %v1797
        %1802 = vmatprep.subr.bf16.mxu0 0
        %1803 = vmatpush1.bf16.xpose.msra.mxu0 0
        %1804 = vmatprep.subr.bf16.mxu0 0
        %1805 = vmatpush1.bf16.xpose.msra.mxu0 0
        %1806 = vmatprep.subr.bf16.mxu0 0
        %1807 = vmatpush1.bf16.xpose.msra.mxu0 0
        %1808 = vmatprep.subr.bf16.mxu0 0
        %1809 = vmatpush1.bf16.xpose.msra.mxu0 0
        %1810 = vmatprep.subr.bf16.mxu0 0
        %1811 = vmatpush1.bf16.xpose.msra.mxu0 0
        %1812 = vmatprep.subr.bf16.mxu0 0
        %1813 = vmatpush1.bf16.xpose.msra.mxu0 0
        %1814 = vmatprep.subr.bf16.mxu0 0
        %1815 = vmatpush1.bf16.xpose.msra.mxu0 0
        %1816 = vmatprep.subr.bf16.mxu0 0
        %1817 = vmatpush1.bf16.xpose.msra.mxu0 %v904
        %1818 = vmatprep.subr.bf16.mxu0 0
        %1819 = vmatpush2.bf16.xpose.msra.mxu0 0
        %1820 = vmatprep.subr.bf16.mxu0 0
        %1821 = vmatpush2.bf16.xpose.msra.mxu0 0
        %1822 = vmatprep.subr.bf16.mxu0 0
        %1823 = vmatpush2.bf16.xpose.msra.mxu0 0
        %1824 = vmatprep.subr.bf16.mxu0 0
        %1825 = vmatpush2.bf16.xpose.msra.mxu0 0
        %1826 = vmatprep.subr.bf16.mxu0 0
        %1827 = vmatpush2.bf16.xpose.msra.mxu0 0
        %1828 = vmatprep.subr.bf16.mxu0 0
        %1829 = vmatpush2.bf16.xpose.msra.mxu0 0
        %1830 = vmatprep.subr.bf16.mxu0 0
        %1831 = vmatpush2.bf16.xpose.msra.mxu0 0
        %1832 = vmatprep.subr.bf16.mxu0 0
        %1833 = vmatpush2.bf16.xpose.msra.mxu0 0
        %1834 = vmatprep.mubr.bf16.mxu0 0
        %1835 = vmatmul.mubr.bf16.gmra.mxu0 %v900
        %v1836 = vpop.f32.mrf.mxu0
        %v1837 = vadd.f32 %v1446, %v1836
        %v1838 = vpop.f32.mrf.mxu0
        %v1839 = vpop.f32.mrf.mxu0
        %v1840 = vadd.f32 %v1447, %v1839
        %v1841 = vpop.f32.mrf.mxu0
        %1842 = vdwg.mxu0
        %v1843 = vsel %vm987, %v1837, -inf
        %1844 = vmax.xlane.f32.xlu0 %v1843
        %v1845 = vpop.xlane.xlu0 %1844
        %v1846 = vsel %vm987, %v1840, -inf
        %1847 = vmax.xlane.f32.xlu0 %v1846
        %v1848 = vpop.xlane.xlu0 %1847
        %v1849 = vsub.f32 %v1837, %v1845
        %v1850 = vsub.f32 %v1840, %v1848
        %v1851 = vmul.f32 %v1849, 1.442695
        %v1852 = vpow.pop %v1851
        %v1853 = vmul.f32 %v1850, 1.442695
        %v1854 = vpow.pop %v1853
        %v1855 = vsel %vm987, %v1852, 0.0
        %1856 = vadd.xlane.f32.xlu0 %v1855
        %v1857 = vpop.xlane.xlu0 %1856
        %v1858 = vsel %vm987, %v1854, 0.0
        %1859 = vadd.xlane.f32.xlu0 %v1858
        %v1860 = vpop.xlane.xlu0 %1859
        %v1861 = vrcp.pop %v1857
        %v1862 = vrcp.pop %v1860
        %v1863 = vmul.f32 %v1852, %v1861
        %v1864 = vmul.f32 %v1854, %v1862
        %v1865 = vpack.c.bf16 %v1864, %v1863
        %v1867 = vsel %vm987, %v1865, 0
        %1869 = vmatprep.subr.bf16.mxu0 0
        %1870 = vmatpush1.bf16.msra.mxu0 0
        %1871 = vmatprep.subr.bf16.mxu0 0
        %1872 = vmatpush1.bf16.msra.mxu0 0
        %1873 = vmatprep.subr.bf16.mxu0 0
        %1874 = vmatpush1.bf16.msra.mxu0 0
        %1875 = vmatprep.subr.bf16.mxu0 0
        %1876 = vmatpush1.bf16.msra.mxu0 0
        %1877 = vmatprep.subr.bf16.mxu0 0
        %1878 = vmatpush1.bf16.msra.mxu0 0
        %1879 = vmatprep.subr.bf16.mxu0 0
        %1880 = vmatpush1.bf16.msra.mxu0 0
        %1881 = vmatprep.subr.bf16.mxu0 0
        %1882 = vmatpush1.bf16.msra.mxu0 0
        %1883 = vmatprep.subr.bf16.mxu0 0
        %1884 = vmatpush1.bf16.msra.mxu0 %v908
        %1885 = vmatprep.subr.bf16.mxu0 0
        %1886 = vmatpush2.bf16.msra.mxu0 0
        %1887 = vmatprep.subr.bf16.mxu0 0
        %1888 = vmatpush2.bf16.msra.mxu0 0
        %1889 = vmatprep.subr.bf16.mxu0 0
        %1890 = vmatpush2.bf16.msra.mxu0 0
        %1891 = vmatprep.subr.bf16.mxu0 0
        %1892 = vmatpush2.bf16.msra.mxu0 0
        %1893 = vmatprep.subr.bf16.mxu0 0
        %1894 = vmatpush2.bf16.msra.mxu0 0
        %1895 = vmatprep.subr.bf16.mxu0 0
        %1896 = vmatpush2.bf16.msra.mxu0 0
        %1897 = vmatprep.subr.bf16.mxu0 0
        %1898 = vmatpush2.bf16.msra.mxu0 0
        %1899 = vmatprep.subr.bf16.mxu0 0
        %1900 = vmatpush2.bf16.msra.mxu0 0
        %1901 = vmatprep.mubr.bf16.mxu0 0
        %1902 = vmatmul.mubr.bf16.gmra.mxu0 %v1867
        %v1903 = vpop.f32.mrf.mxu0
        %v1904 = vadd.f32 0.0, %v1903
        %v1905 = vpop.f32.mrf.mxu0
        %v1906 = vpop.f32.mrf.mxu0
        %v1907 = vadd.f32 0.0, %v1906
        %v1908 = vpop.f32.mrf.mxu0
        %1909 = vdwg.mxu0
        %v1910 = vpack.c.bf16 %v1907, %v1904
        %v1912 = vunpack.c.l.b16 %v1910
        %v1913 = vunpack.c.h.b16 %v1910
        %v1914 = vpack.c.b16 %v1912, %v1912
        %v1915 = vpack.c.b16 %v1913, %v1913
        %1918 = vst [vmem:[#allocation2 + $0x2c] sm:$0xf] %v1914
        %1919 = vst [vmem:[#allocation2 + $0x3c] sm:$0xf] %v1915
        %v1920 = vld [vmem:[#allocation2] sm:$0xff]
        %v1921 = vld [vmem:[#allocation2 + $0x8] sm:$0xff]
        %v1922 = vld [vmem:[#allocation2 + $0x10] sm:$0xff]
        %v1923 = vld [vmem:[#allocation2 + $0x18] sm:$0xff]
        %v1924 = vld [vmem:[#allocation2 + $0x20] sm:$0xff]
        %v1925 = vld [vmem:[#allocation2 + $0x28] sm:$0xff]
        %v1926 = vld [vmem:[#allocation2 + $0x30] sm:$0xff]
        %v1927 = vld [vmem:[#allocation2 + $0x38] sm:$0xff]
        %v1928 = vld [vmem:[%s455] sm:$0xf]
        %v1929 = vld [vmem:[%s455 + $0x4] sm:$0xf]
        %v1930 = vld [vmem:[%s455 + $0x8] sm:$0xf]
        %v1931 = vld [vmem:[%s455 + $0xc] sm:$0xf]
        %v1932 = vld [vmem:[%s455 + $0x10] sm:$0xf]
        %v1933 = vld [vmem:[%s455 + $0x14] sm:$0xf]
        %v1934 = vld [vmem:[%s455 + $0x18] sm:$0xf]
        %v1935 = vld [vmem:[%s455 + $0x1c] sm:$0xf]
        %v1936 = vld [vmem:[%s455 + $0x20] sm:$0xf]
        %v1937 = vld [vmem:[%s455 + $0x24] sm:$0xf]
        %v1938 = vld [vmem:[%s455 + $0x28] sm:$0xf]
        %v1939 = vld [vmem:[%s455 + $0x2c] sm:$0xf]
        %v1940 = vld [vmem:[%s455 + $0x30] sm:$0xf]
        %v1941 = vld [vmem:[%s455 + $0x34] sm:$0xf]
        %v1942 = vld [vmem:[%s455 + $0x38] sm:$0xf]
        %v1943 = vld [vmem:[%s455 + $0x3c] sm:$0xf]
        %v1944 = vld [vmem:[%s455 + $0x40] sm:$0xf]
        %v1945 = vld [vmem:[%s455 + $0x44] sm:$0xf]
        %v1946 = vld [vmem:[%s455 + $0x48] sm:$0xf]
        %v1947 = vld [vmem:[%s455 + $0x4c] sm:$0xf]
        %v1948 = vld [vmem:[%s455 + $0x50] sm:$0xf]
        %v1949 = vld [vmem:[%s455 + $0x54] sm:$0xf]
        %v1950 = vld [vmem:[%s455 + $0x58] sm:$0xf]
        %v1951 = vld [vmem:[%s455 + $0x5c] sm:$0xf]
        %v1952 = vld [vmem:[%s455 + $0x60] sm:$0xf]
        %v1953 = vld [vmem:[%s455 + $0x64] sm:$0xf]
        %v1954 = vld [vmem:[%s455 + $0x68] sm:$0xf]
        %v1955 = vld [vmem:[%s455 + $0x6c] sm:$0xf]
        %v1956 = vld [vmem:[%s455 + $0x70] sm:$0xf]
        %v1957 = vld [vmem:[%s455 + $0x74] sm:$0xf]
        %v1958 = vld [vmem:[%s455 + $0x78] sm:$0xf]
        %v1959 = vld [vmem:[%s455 + $0x7c] sm:$0xf]
        %v1960 = vld [vmem:[%s455 + $0x80] sm:$0xf]
        %v1961 = vld [vmem:[%s455 + $0x84] sm:$0xf]
        %v1962 = vld [vmem:[%s455 + $0x88] sm:$0xf]
        %v1963 = vld [vmem:[%s455 + $0x8c] sm:$0xf]
        %v1964 = vld [vmem:[%s455 + $0x90] sm:$0xf]
        %v1965 = vld [vmem:[%s455 + $0x94] sm:$0xf]
        %v1966 = vld [vmem:[%s455 + $0x98] sm:$0xf]
        %v1967 = vld [vmem:[%s455 + $0x9c] sm:$0xf]
        %v1968 = vld [vmem:[%s455 + $0xa0] sm:$0xf]
        %v1969 = vld [vmem:[%s455 + $0xa4] sm:$0xf]
        %v1970 = vld [vmem:[%s455 + $0xa8] sm:$0xf]
        %v1971 = vld [vmem:[%s455 + $0xac] sm:$0xf]
        %v1972 = vld [vmem:[%s455 + $0xb0] sm:$0xf]
        %v1973 = vld [vmem:[%s455 + $0xb4] sm:$0xf]
        %v1974 = vld [vmem:[%s455 + $0xb8] sm:$0xf]
        %v1975 = vld [vmem:[%s455 + $0xbc] sm:$0xf]
        %v1976 = vld [vmem:[%s455 + $0xc0] sm:$0xf]
        %v1977 = vld [vmem:[%s455 + $0xc4] sm:$0xf]
        %v1978 = vld [vmem:[%s455 + $0xc8] sm:$0xf]
        %v1979 = vld [vmem:[%s455 + $0xcc] sm:$0xf]
        %v1980 = vld [vmem:[%s455 + $0xd0] sm:$0xf]
        %v1981 = vld [vmem:[%s455 + $0xd4] sm:$0xf]
        %v1982 = vld [vmem:[%s455 + $0xd8] sm:$0xf]
        %v1983 = vld [vmem:[%s455 + $0xdc] sm:$0xf]
        %v1984 = vld [vmem:[%s455 + $0xe0] sm:$0xf]
        %v1985 = vld [vmem:[%s455 + $0xe4] sm:$0xf]
        %v1986 = vld [vmem:[%s455 + $0xe8] sm:$0xf]
        %v1987 = vld [vmem:[%s455 + $0xec] sm:$0xf]
        %v1988 = vld [vmem:[%s455 + $0xf0] sm:$0xf]
        %v1989 = vld [vmem:[%s455 + $0xf4] sm:$0xf]
        %v1990 = vld [vmem:[%s455 + $0xf8] sm:$0xf]
        %v1991 = vld [vmem:[%s455 + $0xfc] sm:$0xf]
        %v2000 = vunpack.c.l.b16 %v1920
        %v2001 = vunpack.c.h.b16 %v1920
        %v2002 = vunpack.c.l.b16 %v1921
        %v2003 = vunpack.c.h.b16 %v1921
        %v2004 = vunpack.c.l.b16 %v1922
        %v2005 = vunpack.c.h.b16 %v1922
        %v2006 = vunpack.c.l.b16 %v1923
        %v2007 = vunpack.c.h.b16 %v1923
        %v2008 = vunpack.c.l.b16 %v1924
        %v2009 = vunpack.c.h.b16 %v1924
        %v2010 = vunpack.c.l.b16 %v1925
        %v2011 = vunpack.c.h.b16 %v1925
        %v2012 = vunpack.c.l.b16 %v1926
        %v2013 = vunpack.c.h.b16 %v1926
        %v2014 = vunpack.c.l.b16 %v1927
        %v2015 = vunpack.c.h.b16 %v1927
        %v2016 = vpack.c.b16 %v2004, %v2000
        %v2017 = vpack.c.b16 %v2005, %v2001
        %v2018 = vpack.c.b16 %v2006, %v2002
        %v2019 = vpack.c.b16 %v2007, %v2003
        %v2020 = vpack.c.b16 %v2012, %v2008
        %v2021 = vpack.c.b16 %v2013, %v2009
        %v2022 = vpack.c.b16 %v2014, %v2010
        %v2023 = vpack.c.b16 %v2015, %v2011
        %v2096 = vunpack.c.l.b16 %v1928
        %v2097 = vunpack.c.l.b16 %v1929
        %v2098 = vunpack.c.l.b16 %v1930
        %v2099 = vunpack.c.l.b16 %v1931
        %v2100 = vunpack.c.l.b16 %v1932
        %v2101 = vunpack.c.l.b16 %v1933
        %v2102 = vunpack.c.l.b16 %v1934
        %v2103 = vunpack.c.l.b16 %v1935
        %v2104 = vunpack.c.l.b16 %v1936
        %v2105 = vunpack.c.l.b16 %v1937
        %v2106 = vunpack.c.l.b16 %v1938
        %v2107 = vunpack.c.l.b16 %v1939
        %v2108 = vunpack.c.l.b16 %v1940
        %v2109 = vunpack.c.l.b16 %v1941
        %v2110 = vunpack.c.l.b16 %v1942
        %v2111 = vunpack.c.l.b16 %v1943
        %v2112 = vunpack.c.l.b16 %v1944
        %v2113 = vunpack.c.l.b16 %v1945
        %v2114 = vunpack.c.l.b16 %v1946
        %v2115 = vunpack.c.l.b16 %v1947
        %v2116 = vunpack.c.l.b16 %v1948
        %v2117 = vunpack.c.l.b16 %v1949
        %v2118 = vunpack.c.l.b16 %v1950
        %v2119 = vunpack.c.l.b16 %v1951
        %v2120 = vunpack.c.l.b16 %v1952
        %v2121 = vunpack.c.l.b16 %v1953
        %v2122 = vunpack.c.l.b16 %v1954
        %v2123 = vunpack.c.l.b16 %v1955
        %v2124 = vunpack.c.l.b16 %v1956
        %v2125 = vunpack.c.l.b16 %v1957
        %v2126 = vunpack.c.l.b16 %v1958
        %v2127 = vunpack.c.l.b16 %v1959
        %v2128 = vunpack.c.l.b16 %v1960
        %v2129 = vunpack.c.l.b16 %v1961
        %v2130 = vunpack.c.l.b16 %v1962
        %v2131 = vunpack.c.l.b16 %v1963
        %v2132 = vunpack.c.l.b16 %v1964
        %v2133 = vunpack.c.l.b16 %v1965
        %v2134 = vunpack.c.l.b16 %v1966
        %v2135 = vunpack.c.l.b16 %v1967
        %v2136 = vunpack.c.l.b16 %v1968
        %v2137 = vunpack.c.l.b16 %v1969
        %v2138 = vunpack.c.l.b16 %v1970
        %v2139 = vunpack.c.l.b16 %v1971
        %v2140 = vunpack.c.l.b16 %v1972
        %v2141 = vunpack.c.l.b16 %v1973
        %v2142 = vunpack.c.l.b16 %v1974
        %v2143 = vunpack.c.l.b16 %v1975
        %v2144 = vunpack.c.l.b16 %v1976
        %v2145 = vunpack.c.l.b16 %v1977
        %v2146 = vunpack.c.l.b16 %v1978
        %v2147 = vunpack.c.l.b16 %v1979
        %v2148 = vunpack.c.l.b16 %v1980
        %v2149 = vunpack.c.l.b16 %v1981
        %v2150 = vunpack.c.l.b16 %v1982
        %v2151 = vunpack.c.l.b16 %v1983
        %v2152 = vunpack.c.l.b16 %v1984
        %v2153 = vunpack.c.l.b16 %v1985
        %v2154 = vunpack.c.l.b16 %v1986
        %v2155 = vunpack.c.l.b16 %v1987
        %v2156 = vunpack.c.l.b16 %v1988
        %v2157 = vunpack.c.l.b16 %v1989
        %v2158 = vunpack.c.l.b16 %v1990
        %v2159 = vunpack.c.l.b16 %v1991
        %v2160 = vpack.c.b16 %v2097, %v2096
        %v2161 = vpack.c.b16 %v2099, %v2098
        %v2162 = vpack.c.b16 %v2101, %v2100
        %v2163 = vpack.c.b16 %v2103, %v2102
        %v2164 = vpack.c.b16 %v2105, %v2104
        %v2165 = vpack.c.b16 %v2107, %v2106
        %v2166 = vpack.c.b16 %v2109, %v2108
        %v2167 = vpack.c.b16 %v2111, %v2110
        %v2168 = vpack.c.b16 %v2113, %v2112
        %v2169 = vpack.c.b16 %v2115, %v2114
        %v2170 = vpack.c.b16 %v2117, %v2116
        %v2171 = vpack.c.b16 %v2119, %v2118
        %v2172 = vpack.c.b16 %v2121, %v2120
        %v2173 = vpack.c.b16 %v2123, %v2122
        %v2174 = vpack.c.b16 %v2125, %v2124
        %v2175 = vpack.c.b16 %v2127, %v2126
        %v2176 = vpack.c.b16 %v2129, %v2128
        %v2177 = vpack.c.b16 %v2131, %v2130
        %v2178 = vpack.c.b16 %v2133, %v2132
        %v2179 = vpack.c.b16 %v2135, %v2134
        %v2180 = vpack.c.b16 %v2137, %v2136
        %v2181 = vpack.c.b16 %v2139, %v2138
        %v2182 = vpack.c.b16 %v2141, %v2140
        %v2183 = vpack.c.b16 %v2143, %v2142
        %v2184 = vpack.c.b16 %v2145, %v2144
        %v2185 = vpack.c.b16 %v2147, %v2146
        %v2186 = vpack.c.b16 %v2149, %v2148
        %v2187 = vpack.c.b16 %v2151, %v2150
        %v2188 = vpack.c.b16 %v2153, %v2152
        %v2189 = vpack.c.b16 %v2155, %v2154
        %v2190 = vpack.c.b16 %v2157, %v2156
        %v2191 = vpack.c.b16 %v2159, %v2158
        %2224 = vmatprep.subr.bf16.mxu0 0
        %2225 = vmatpush1.bf16.msra.mxu0 %v2167
        %2226 = vmatprep.subr.bf16.mxu0 0
        %2227 = vmatpush1.bf16.msra.mxu0 %v2166
        %2228 = vmatprep.subr.bf16.mxu0 0
        %2229 = vmatpush1.bf16.msra.mxu0 %v2165
        %2230 = vmatprep.subr.bf16.mxu0 0
        %2231 = vmatpush1.bf16.msra.mxu0 %v2164
        %2232 = vmatprep.subr.bf16.mxu0 0
        %2233 = vmatpush1.bf16.msra.mxu0 %v2163
        %2234 = vmatprep.subr.bf16.mxu0 0
        %2235 = vmatpush1.bf16.msra.mxu0 %v2162
        %2236 = vmatprep.subr.bf16.mxu0 0
        %2237 = vmatpush1.bf16.msra.mxu0 %v2161
        %2238 = vmatprep.subr.bf16.mxu0 0
        %2239 = vmatpush1.bf16.msra.mxu0 %v2160
        %2240 = vmatprep.subr.bf16.mxu0 0
        %2241 = vmatpush2.bf16.msra.mxu0 %v2175
        %2242 = vmatprep.subr.bf16.mxu0 0
        %2243 = vmatpush2.bf16.msra.mxu0 %v2174
        %2244 = vmatprep.subr.bf16.mxu0 0
        %2245 = vmatpush2.bf16.msra.mxu0 %v2173
        %2246 = vmatprep.subr.bf16.mxu0 0
        %2247 = vmatpush2.bf16.msra.mxu0 %v2172
        %2248 = vmatprep.subr.bf16.mxu0 0
        %2249 = vmatpush2.bf16.msra.mxu0 %v2171
        %2250 = vmatprep.subr.bf16.mxu0 0
        %2251 = vmatpush2.bf16.msra.mxu0 %v2170
        %2252 = vmatprep.subr.bf16.mxu0 0
        %2253 = vmatpush2.bf16.msra.mxu0 %v2169
        %2254 = vmatprep.subr.bf16.mxu0 0
        %2255 = vmatpush2.bf16.msra.mxu0 %v2168
        %2256 = vmatprep.mubr.bf16.mxu0 %v2017
        %2257 = vmatmul.mubr.bf16.gmra.mxu0 %v2016
        %v2258 = vpop.f32.mrf.mxu0
        %v2259 = vadd.f32 %v491, %v2258
        %v2260 = vpop.f32.mrf.mxu0
        %v2261 = vpop.f32.mrf.mxu0
        %v2262 = vadd.f32 %v491, %v2261
        %v2263 = vpop.f32.mrf.mxu0
        %2264 = vmatprep.mubr.bf16.mxu0 %v2021
        %2265 = vmatmul.mubr.bf16.gmra.mxu0 %v2020
        %v2266 = vpop.f32.mrf.mxu0
        %v2267 = vadd.f32 %v491, %v2266
        %v2268 = vpop.f32.mrf.mxu0
        %v2269 = vpop.f32.mrf.mxu0
        %v2270 = vadd.f32 %v491, %v2269
        %v2271 = vpop.f32.mrf.mxu0
        %2272 = vdwg.mxu0
        %2273 = vmatprep.subr.bf16.mxu0 0
        %2274 = vmatpush1.bf16.msra.mxu0 %v2183
        %2275 = vmatprep.subr.bf16.mxu0 0
        %2276 = vmatpush1.bf16.msra.mxu0 %v2182
        %2277 = vmatprep.subr.bf16.mxu0 0
        %2278 = vmatpush1.bf16.msra.mxu0 %v2181
        %2279 = vmatprep.subr.bf16.mxu0 0
        %2280 = vmatpush1.bf16.msra.mxu0 %v2180
        %2281 = vmatprep.subr.bf16.mxu0 0
        %2282 = vmatpush1.bf16.msra.mxu0 %v2179
        %2283 = vmatprep.subr.bf16.mxu0 0
        %2284 = vmatpush1.bf16.msra.mxu0 %v2178
        %2285 = vmatprep.subr.bf16.mxu0 0
        %2286 = vmatpush1.bf16.msra.mxu0 %v2177
        %2287 = vmatprep.subr.bf16.mxu0 0
        %2288 = vmatpush1.bf16.msra.mxu0 %v2176
        %2289 = vmatprep.subr.bf16.mxu0 0
        %2290 = vmatpush2.bf16.msra.mxu0 %v2191
        %2291 = vmatprep.subr.bf16.mxu0 0
        %2292 = vmatpush2.bf16.msra.mxu0 %v2190
        %2293 = vmatprep.subr.bf16.mxu0 0
        %2294 = vmatpush2.bf16.msra.mxu0 %v2189
        %2295 = vmatprep.subr.bf16.mxu0 0
        %2296 = vmatpush2.bf16.msra.mxu0 %v2188
        %2297 = vmatprep.subr.bf16.mxu0 0
        %2298 = vmatpush2.bf16.msra.mxu0 %v2187
        %2299 = vmatprep.subr.bf16.mxu0 0
        %2300 = vmatpush2.bf16.msra.mxu0 %v2186
        %2301 = vmatprep.subr.bf16.mxu0 0
        %2302 = vmatpush2.bf16.msra.mxu0 %v2185
        %2303 = vmatprep.subr.bf16.mxu0 0
        %2304 = vmatpush2.bf16.msra.mxu0 %v2184
        %2305 = vmatprep.mubr.bf16.mxu0 %v2019
        %2306 = vmatmul.mubr.bf16.gmra.mxu0 %v2018
        %v2307 = vpop.f32.mrf.mxu0
        %v2308 = vadd.f32 %v2259, %v2307
        %v2309 = vpop.f32.mrf.mxu0
        %v2310 = vpop.f32.mrf.mxu0
        %v2311 = vadd.f32 %v2262, %v2310
        %v2312 = vpop.f32.mrf.mxu0
        %2313 = vmatprep.mubr.bf16.mxu0 %v2023
        %2314 = vmatmul.mubr.bf16.gmra.mxu0 %v2022
        %v2315 = vpop.f32.mrf.mxu0
        %v2316 = vadd.f32 %v2267, %v2315
        %v2317 = vpop.f32.mrf.mxu0
        %v2318 = vpop.f32.mrf.mxu0
        %v2319 = vadd.f32 %v2270, %v2318
        %v2320 = vpop.f32.mrf.mxu0
        %2321 = vdwg.mxu0
        %v2322 = vadd.f32 %v2308, %v480
        %v2323 = vadd.f32 %v2311, %v481
        %v2324 = vadd.f32 %v2316, %v482
        %v2325 = vadd.f32 %v2319, %v483
        %v2326 = vsel %vm500, %v2322, 0.0
        %2327 = vadd.xlane.f32.xlu0 %v2326
        %v2328 = vpop.xlane.xlu0 %2327
        %v2329 = vsel %vm500, %v2323, 0.0
        %2330 = vadd.xlane.f32.xlu0 %v2329
        %v2331 = vpop.xlane.xlu0 %2330
        %v2332 = vsel %vm500, %v2324, 0.0
        %2333 = vadd.xlane.f32.xlu0 %v2332
        %v2334 = vpop.xlane.xlu0 %2333
        %v2335 = vsel %vm500, %v2325, 0.0
        %2336 = vadd.xlane.f32.xlu0 %v2335
        %v2337 = vpop.xlane.xlu0 %2336
        %v2338 = vmul.f32 %v2328, %v513
        %v2339 = vmul.f32 %v2331, %v513
        %v2340 = vmul.f32 %v2334, %v513
        %v2341 = vmul.f32 %v2337, %v513
        %v2342 = vsub.f32 %v2322, %v2338
        %v2343 = vsub.f32 %v2323, %v2339
        %v2344 = vsub.f32 %v2324, %v2340
        %v2345 = vsub.f32 %v2325, %v2341
        %v2346 = vmul.f32 %v2342, %v2342
        %v2347 = vmul.f32 %v2343, %v2343
        %v2348 = vmul.f32 %v2344, %v2344
        %v2349 = vmul.f32 %v2345, %v2345
        %v2350 = vsel %vm500, %v2346, 0.0
        %2351 = vadd.xlane.f32.xlu0 %v2350
        %v2352 = vpop.xlane.xlu0 %2351
        %v2353 = vsel %vm500, %v2347, 0.0
        %2354 = vadd.xlane.f32.xlu0 %v2353
        %v2355 = vpop.xlane.xlu0 %2354
        %v2356 = vsel %vm500, %v2348, 0.0
        %2357 = vadd.xlane.f32.xlu0 %v2356
        %v2358 = vpop.xlane.xlu0 %2357
        %v2359 = vsel %vm500, %v2349, 0.0
        %2360 = vadd.xlane.f32.xlu0 %v2359
        %v2361 = vpop.xlane.xlu0 %2360
        %v2362 = vmul.f32 %v2352, %v513
        %v2363 = vmul.f32 %v2355, %v513
        %v2364 = vmul.f32 %v2358, %v513
        %v2365 = vmul.f32 %v2361, %v513
        %v2366 = vadd.f32 %v2362, 1e-06
        %v2367 = vadd.f32 %v2363, 1e-06
        %v2368 = vadd.f32 %v2364, 1e-06
        %v2369 = vadd.f32 %v2365, 1e-06
        %v2370 = vrsqrt.pop %v2366
        %v2371 = vrsqrt.pop %v2367
        %v2372 = vrsqrt.pop %v2368
        %v2373 = vrsqrt.pop %v2369
        %v2374 = vmul.f32 %v2342, %v2370
        %v2375 = vmul.f32 %v2343, %v2371
        %v2376 = vmul.f32 %v2344, %v2372
        %v2377 = vmul.f32 %v2345, %v2373
        %v2378 = vmul.f32 %v2374, %v492
        %v2379 = vmul.f32 %v2375, %v492
        %v2380 = vmul.f32 %v2376, %v492
        %v2381 = vmul.f32 %v2377, %v492
        %v2382 = vadd.f32 %v2378, %v493
        %v2383 = vadd.f32 %v2379, %v493
        %v2384 = vadd.f32 %v2380, %v493
        %v2385 = vadd.f32 %v2381, %v493
        %v2386 = vpack.c.bf16 %v2383, %v2382
        %v2387 = vpack.c.bf16 %v2385, %v2384
        %v2388 = vld [vmem:[%s460] sm:$0xf]
        %v2389 = vld [vmem:[%s460 + $0x4] sm:$0xf]
        %v2390 = vld [vmem:[%s460 + $0x8] sm:$0xf]
        %v2391 = vld [vmem:[%s460 + $0xc] sm:$0xf]
        %v2396 = vunpack.c.l.b16 %v2388
        %v2397 = vunpack.c.l.b16 %v2389
        %v2398 = vunpack.c.l.b16 %v2390
        %v2399 = vunpack.c.l.b16 %v2391
        %v2400 = vpack.c.b16 %v2397, %v2396
        %v2401 = vpack.c.b16 %v2399, %v2398
        %v2405 = vsel %vm500, %v2386, 0
        %v2408 = vsel %vm500, %v2387, 0
        %2410 = vmatprep.subr.bf16.mxu0 0
        %2411 = vmatpush1.bf16.msra.mxu0 0
        %2412 = vmatprep.subr.bf16.mxu0 0
        %2413 = vmatpush1.bf16.msra.mxu0 0
        %2414 = vmatprep.subr.bf16.mxu0 0
        %2415 = vmatpush1.bf16.msra.mxu0 0
        %2416 = vmatprep.subr.bf16.mxu0 0
        %2417 = vmatpush1.bf16.msra.mxu0 0
        %2418 = vmatprep.subr.bf16.mxu0 0
        %2419 = vmatpush1.bf16.msra.mxu0 0
        %2420 = vmatprep.subr.bf16.mxu0 0
        %2421 = vmatpush1.bf16.msra.mxu0 0
        %2422 = vmatprep.subr.bf16.mxu0 0
        %2423 = vmatpush1.bf16.msra.mxu0 %v2401
        %2424 = vmatprep.subr.bf16.mxu0 0
        %2425 = vmatpush1.bf16.msra.mxu0 %v2400
        %2426 = vmatprep.subr.bf16.mxu0 0
        %2427 = vmatpush2.bf16.msra.mxu0 0
        %2428 = vmatprep.subr.bf16.mxu0 0
        %2429 = vmatpush2.bf16.msra.mxu0 0
        %2430 = vmatprep.subr.bf16.mxu0 0
        %2431 = vmatpush2.bf16.msra.mxu0 0
        %2432 = vmatprep.subr.bf16.mxu0 0
        %2433 = vmatpush2.bf16.msra.mxu0 0
        %2434 = vmatprep.subr.bf16.mxu0 0
        %2435 = vmatpush2.bf16.msra.mxu0 0
        %2436 = vmatprep.subr.bf16.mxu0 0
        %2437 = vmatpush2.bf16.msra.mxu0 0
        %2438 = vmatprep.subr.bf16.mxu0 0
        %2439 = vmatpush2.bf16.msra.mxu0 0
        %2440 = vmatprep.subr.bf16.mxu0 0
        %2441 = vmatpush2.bf16.msra.mxu0 0
        %2442 = vmatprep.mubr.bf16.mxu0 0
        %2443 = vmatmul.mubr.bf16.gmra.mxu0 %v2405
        %v2444 = vpop.f32.mrf.mxu0
        %v2445 = vadd.f32 %v494, %v2444
        %v2446 = vpop.f32.mrf.mxu0
        %v2447 = vpop.f32.mrf.mxu0
        %v2448 = vadd.f32 %v494, %v2447
        %v2449 = vpop.f32.mrf.mxu0
        %2450 = vmatprep.mubr.bf16.mxu0 0
        %2451 = vmatmul.mubr.bf16.gmra.mxu0 %v2408
        %v2452 = vpop.f32.mrf.mxu0
        %v2453 = vadd.f32 %v494, %v2452
        %v2454 = vpop.f32.mrf.mxu0
        %v2455 = vpop.f32.mrf.mxu0
        %v2456 = vadd.f32 %v494, %v2455
        %v2457 = vpop.f32.mrf.mxu0
        %2458 = vdwg.mxu0
        %v2459 = vmax.f32 %v2445, 0.0
        %v2460 = vmax.f32 %v2448, 0.0
        %v2461 = vmax.f32 %v2453, 0.0
        %v2462 = vmax.f32 %v2456, 0.0
        %v2463 = vpack.c.bf16 %v2460, %v2459
        %v2464 = vpack.c.bf16 %v2462, %v2461
        %v2465 = vld [vmem:[%s465] sm:$0xf]
        %v2466 = vld [vmem:[%s465 + $0x4] sm:$0xf]
        %v2467 = vld [vmem:[%s465 + $0x8] sm:$0xf]
        %v2468 = vld [vmem:[%s465 + $0xc] sm:$0xf]
        %v2469 = vld [vmem:[%s465 + $0x10] sm:$0xf]
        %v2470 = vld [vmem:[%s465 + $0x14] sm:$0xf]
        %v2471 = vld [vmem:[%s465 + $0x18] sm:$0xf]
        %v2472 = vld [vmem:[%s465 + $0x1c] sm:$0xf]
        %v2481 = vunpack.c.l.b16 %v2465
        %v2482 = vunpack.c.l.b16 %v2466
        %v2483 = vunpack.c.l.b16 %v2467
        %v2484 = vunpack.c.l.b16 %v2468
        %v2485 = vunpack.c.l.b16 %v2469
        %v2486 = vunpack.c.l.b16 %v2470
        %v2487 = vunpack.c.l.b16 %v2471
        %v2488 = vunpack.c.l.b16 %v2472
        %v2489 = vpack.c.b16 %v2482, %v2481
        %v2490 = vpack.c.b16 %v2484, %v2483
        %v2491 = vpack.c.b16 %v2486, %v2485
        %v2492 = vpack.c.b16 %v2488, %v2487
        %vm2497 = vcmask 523264
        %v2499 = vsel %vm2497, %v2463, 0
        %v2502 = vsel %vm2497, %v2464, 0
        %2504 = vmatprep.subr.bf16.mxu0 0
        %2505 = vmatpush1.bf16.msra.mxu0 0
        %2506 = vmatprep.subr.bf16.mxu0 0
        %2507 = vmatpush1.bf16.msra.mxu0 0
        %2508 = vmatprep.subr.bf16.mxu0 0
        %2509 = vmatpush1.bf16.msra.mxu0 0
        %2510 = vmatprep.subr.bf16.mxu0 0
        %2511 = vmatpush1.bf16.msra.mxu0 0
        %2512 = vmatprep.subr.bf16.mxu0 0
        %2513 = vmatpush1.bf16.msra.mxu0 %v2492
        %2514 = vmatprep.subr.bf16.mxu0 0
        %2515 = vmatpush1.bf16.msra.mxu0 %v2491
        %2516 = vmatprep.subr.bf16.mxu0 0
        %2517 = vmatpush1.bf16.msra.mxu0 %v2490
        %2518 = vmatprep.subr.bf16.mxu0 0
        %2519 = vmatpush1.bf16.msra.mxu0 %v2489
        %2520 = vmatprep.subr.bf16.mxu0 0
        %2521 = vmatpush2.bf16.msra.mxu0 0
        %2522 = vmatprep.subr.bf16.mxu0 0
        %2523 = vmatpush2.bf16.msra.mxu0 0
        %2524 = vmatprep.subr.bf16.mxu0 0
        %2525 = vmatpush2.bf16.msra.mxu0 0
        %2526 = vmatprep.subr.bf16.mxu0 0
        %2527 = vmatpush2.bf16.msra.mxu0 0
        %2528 = vmatprep.subr.bf16.mxu0 0
        %2529 = vmatpush2.bf16.msra.mxu0 0
        %2530 = vmatprep.subr.bf16.mxu0 0
        %2531 = vmatpush2.bf16.msra.mxu0 0
        %2532 = vmatprep.subr.bf16.mxu0 0
        %2533 = vmatpush2.bf16.msra.mxu0 0
        %2534 = vmatprep.subr.bf16.mxu0 0
        %2535 = vmatpush2.bf16.msra.mxu0 0
        %2536 = vmatprep.mubr.bf16.mxu0 0
        %2537 = vmatmul.mubr.bf16.gmra.mxu0 %v2499
        %v2538 = vpop.f32.mrf.mxu0
        %v2539 = vadd.f32 %v495, %v2538
        %v2540 = vpop.f32.mrf.mxu0
        %v2541 = vpop.f32.mrf.mxu0
        %v2542 = vadd.f32 %v495, %v2541
        %v2543 = vpop.f32.mrf.mxu0
        %2544 = vmatprep.mubr.bf16.mxu0 0
        %2545 = vmatmul.mubr.bf16.gmra.mxu0 %v2502
        %v2546 = vpop.f32.mrf.mxu0
        %v2547 = vadd.f32 %v495, %v2546
        %v2548 = vpop.f32.mrf.mxu0
        %v2549 = vpop.f32.mrf.mxu0
        %v2550 = vadd.f32 %v495, %v2549
        %v2551 = vpop.f32.mrf.mxu0
        %2552 = vdwg.mxu0
        %v2553 = vld [vmem:[%s2] sm:$0xff]
        %v2554 = vld [vmem:[%s2 + $0x8] sm:$0xff]
        %v2555 = vld [vmem:[%s2 + $0x10] sm:$0xff]
        %v2556 = vld [vmem:[%s2 + $0x18] sm:$0xff]
        %2558 = vset.pattern.permute.xlu0 0
        %2559 = vperm.xlu0 %2558, %v2553
        %v2560 = vpop.permute.xlu0 %2559
        %2563 = vset.pattern.permute.xlu0 0
        %2564 = vperm.xlu0 %2563, %v2554
        %v2565 = vpop.permute.xlu0 %2564
        %2568 = vset.pattern.permute.xlu0 0
        %2569 = vperm.xlu0 %2568, %v2555
        %v2570 = vpop.permute.xlu0 %2569
        %2573 = vset.pattern.permute.xlu0 0
        %2574 = vperm.xlu0 %2573, %v2556
        %v2575 = vpop.permute.xlu0 %2574
        %v2577 = vmul.f32 %v2539, %v2560
        %v2578 = vmul.f32 %v2542, %v2565
        %v2579 = vmul.f32 %v2547, %v2570
        %v2580 = vmul.f32 %v2550, %v2575
        %v2581 = vadd.f32 %v2577, %v2322
        %v2582 = vadd.f32 %v2578, %v2323
        %v2583 = vadd.f32 %v2579, %v2324
        %v2584 = vadd.f32 %v2580, %v2325
        %2585 = vst.msk [vmem:[#allocation3] sm:$0xff] %vm500, %v2581
        %2586 = vst.msk [vmem:[#allocation3 + $0x8] sm:$0xff] %vm500, %v2582
        %2587 = vst.msk [vmem:[#allocation3 + $0x10] sm:$0xff] %vm500, %v2583
        %2588 = vst.msk [vmem:[#allocation3 + $0x18] sm:$0xff] %vm500, %v2584
        // Predicated region
        $region65: #{tpu_custom_call.1} parent=59 // pred_check
          %p2589 = pneg %p280
        $region66: #{tpu_custom_call.1} parent=59 // pred_check_branch
          %2591 = sbr.rel (%p2589) target = $region68
        $region67: #{tpu_custom_call.1} parent=59 // pred_region
          %s2593 = ssub.s32 512, 512
          %2594 = vsyncadd [#allocation4], %s2593
          %s2595 = sshll.u32 [#allocation3], 4
          %s2596 = int_to_ptr.vmem [resolvable:$true] %s2595
          %2601 = dma.vmem_to_hbm [thread:$0]  %s2596, 512, %s10, [#allocation4], 128, 128, 8
        $region68: #{tpu_custom_call.1} parent=59 // pred_fallthru
          _
        // Predicated region
        $region69: #{tpu_custom_call.1} parent=59 // pred_check
          %p2602 = pneg %p280
        $region70: #{tpu_custom_call.1} parent=59 // pred_check_branch
          %2604 = sbr.rel (%p2602) target = $region72
        $region71: #{tpu_custom_call.1} parent=59 // pred_region
          %2605 = dma.done [#allocation4], 512
        $region72: #{tpu_custom_call.1} parent=59 // pred_fallthru
          _
      $region60: #{tpu_custom_call.1} parent=5 // pred_fallthru
        _
      %p2606 = scmp.le.s32.totalorder 2, %s17
      // Predicated region
      $region73: #{tpu_custom_call.1} parent=5 // pred_check
        %p2607 = pneg %p2606
      $region74: #{tpu_custom_call.1} parent=5 // pred_check_branch
        %2609 = sbr.rel (%p2607) target = $region76
      $region75: #{tpu_custom_call.1} parent=5 // pred_region
        %s2610 = ssub.s32 %s17, 2
      $region76: #{tpu_custom_call.1} parent=5 // pred_fallthru
        _
    $region6: #{tpu_custom_call.1} parent=1 // loop_footer
      %s21 = sadd.s32 1, %s17
    $region7: #{tpu_custom_call.1} parent=1 // loop_footer_branch
      %16 = sbr.rel target = $region3
    $region8: #{tpu_custom_call.1} parent=1 // loop_exit
      _
    %2611 = vsyncpa [#allocation4], 1
    %s2612 = scalar_lea.sflag [#allocation4], 1
    %2613 = vsyncpa %s2612, 1

</llo_original>
